<compile_context>
chip_gen: v7x
topology: tpu7x:2x2x1
jax: 0.10.0
libtpu: 0.0.40
codegen_flags: <defaults>
</compile_context>

<pallas_src>
import functools

import jax
import jax.numpy as jnp
from jax.experimental import pallas as pl
from jax.experimental.pallas import tpu as pltpu

BN_EPS = 1e-5


# ---------------------------------------------------------------------------
# Pallas kernels
# ---------------------------------------------------------------------------
def _conv1_bn_pool_relu_kernel(p_ref, w_ref, s_ref, t_ref, o_ref, *, rows):
    """conv1 (im2col GEMM) + folded BN + 2x2 maxpool + ReLU.

    p_ref : (4*rows, 75) bf16   im2col patches; 4 row-groups = pool sub-positions
    w_ref : (75, 64)     bf16
    s_ref, t_ref : (1, 64) f32  folded BN scale / shift (conv bias absorbed)
    o_ref : (rows, 64)   bf16   pooled+ReLU'd conv1 activations, rows (b,ph,pw)
    """
    z = jnp.dot(p_ref[...], w_ref[...], preferred_element_type=jnp.float32)
    z = z * s_ref[...] + t_ref[...]                # BN affine before pool max
    m = z[0:rows]
    for s in range(1, 4):                          # max over the 2x2 pool window
        m = jnp.maximum(m, z[s * rows:(s + 1) * rows])
    o_ref[...] = jnp.maximum(m, 0.0).astype(o_ref.dtype)


def _conv2_fc_heads_kernel(
    p_ref, w2_ref, s2_ref, t2_ref,
    wf1_ref, sf1_ref, tf1_ref,
    wf2_ref, sf2_ref, tf2_ref,
    wcd1_ref, scd1_ref, tcd1_ref,
    wout_ref, bout_ref,
    o_ref, *, batch):
    """conv2 GEMM + BN + pool + ReLU, flatten-fused fc1, fc2, fused heads.

    p_ref  : (4*16*B, 1600) bf16  conv2 im2col; 4 pool-sub-position row groups,
                                  rows within a group ordered (pos, b)
    w2_ref : (1600, 50) bf16 ; s2/t2 : (1, 50) f32
    wf1_ref: (16, 50, 100) bf16 per spatial position ; sf1/tf1 : (1, 100) f32
    wf2_ref: (100, 100) bf16 ; sf2/tf2 : (1, 100) f32
    wcd1_ref: (100, 100) bf16 = [c_fc1 | d_fc1] ; scd1/tcd1 : (1, 100) f32
    wout_ref: (100, 128) bf16 block-diagonal (c_fc2 -> cols 0:10,
              d_fc2 -> cols 10:20, rest zero) ; bout_ref : (1, 128) f32
    o_ref  : (B, 128) f32 lane-dense output slab
    """
    rows = 16 * batch

    # conv2 as one big GEMM, BN affine, then 2x2 max-pool over the row groups.
    z = jnp.dot(p_ref[...], w2_ref[...], preferred_element_type=jnp.float32)
    z = z * s2_ref[...] + t2_ref[...]
    m = z[0:rows]
    for s in range(1, 4):
        m = jnp.maximum(m, z[s * rows:(s + 1) * rows])
    h2 = jnp.maximum(m, 0.0).astype(jnp.bfloat16)           # (16*B, 50)

    # flatten + fc1 fused as a sum over the 16 pooled spatial positions
    acc = jnp.dot(h2[0:batch, :], wf1_ref[0], preferred_element_type=jnp.float32)
    for p in range(1, 16):
        acc = acc + jnp.dot(h2[p * batch:(p + 1) * batch, :], wf1_ref[p],
                            preferred_element_type=jnp.float32)
    h = jnp.maximum(acc * sf1_ref[...] + tf1_ref[...], 0.0).astype(jnp.bfloat16)

    # fc2 + BN + ReLU -> feature
    zf = jnp.dot(h, wf2_ref[...], preferred_element_type=jnp.float32)
    feature = jnp.maximum(zf * sf2_ref[...] + tf2_ref[...], 0.0).astype(jnp.bfloat16)

    # fused class/domain head entry (ReverseLayerF is identity in the forward)
    zc = jnp.dot(feature, wcd1_ref[...], preferred_element_type=jnp.float32)
    hcd = jnp.maximum(zc * scd1_ref[...] + tcd1_ref[...], 0.0).astype(jnp.bfloat16)

    out = jnp.dot(hcd, wout_ref[...], preferred_element_type=jnp.float32) + bout_ref[...]
    o_ref[...] = out.astype(o_ref.dtype)


# ---------------------------------------------------------------------------
# Wrapper-side layout plumbing (pure data movement, no arithmetic)
# ---------------------------------------------------------------------------
def _im2col_nhwc(x, k):
    """(B,H,W,C) -> (B,H-k+1,W-k+1,k*k*C); feature order (ky, kx, c)."""
    B, H, W, C = x.shape
    oh, ow = H - k + 1, W - k + 1
    cols = []
    for ky in range(k):
        for kx in range(k):
            cols.append(x[:, ky:ky + oh, kx:kx + ow, :])
    return jnp.concatenate(cols, axis=-1)


def _pool_slabs(p, pos_major):
    """Split conv-output-position patches (B, OH, OW, F) into the 4 sub-positions
    of each 2x2 max-pool window, concatenated along rows -> (4*rows, F).
    Within each sub-position group rows are ordered (b, ph, pw) if not
    pos_major, else (ph, pw, b)."""
    B, OH, OW, F = p.shape
    slabs = []
    for sy in range(2):
        for sx in range(2):
            s = p[:, sy::2, sx::2, :]                  # (B, OH//2, OW//2, F)
            if pos_major:
                s = jnp.transpose(s, (1, 2, 0, 3))     # (PH, PW, B, F)
            slabs.append(s.reshape(-1, F))
    return jnp.concatenate(slabs, axis=0)


def _single_block_call(kernel, out_shape, args):
    """pallas_call with grid=(1,) and full-array blocks (small-B fast path)."""
    def full_spec(shape):
        n = len(shape)
        return pl.BlockSpec(shape, lambda i, _n=n: (0,) * _n)

    return pl.pallas_call(
        kernel,
        out_shape=out_shape,
        grid_spec=pltpu.PrefetchScalarGridSpec(
            num_scalar_prefetch=0,
            grid=(1,),
            in_specs=[full_spec(a.shape) for a in args],
            out_specs=full_spec(out_shape.shape),
        ),
        compiler_params=pltpu.CompilerParams(dimension_semantics=("arbitrary",)),
    )(*args)


# ---------------------------------------------------------------------------
# Forward pass
# ---------------------------------------------------------------------------
@jax.jit
def cnn_model2_forward(x, alpha, kp):
    """CNNModel2 forward. Returns (class_output [B,10], domain_output [B,10])."""
    del alpha  # ReverseLayerF is identity in the forward pass
    B = x.shape[0]
    xe = jnp.broadcast_to(x.astype(jnp.float32), (B, 3, 28, 28))
    xh = jnp.transpose(xe, (0, 2, 3, 1))                       # NHWC (B,28,28,3)

    # --- conv1 stage ---
    slabs1 = _pool_slabs(_im2col_nhwc(xh, 5), pos_major=False).astype(jnp.bfloat16)
    h1 = _single_block_call(
        functools.partial(_conv1_bn_pool_relu_kernel, rows=B * 12 * 12),
        jax.ShapeDtypeStruct((B * 12 * 12, 64), jnp.bfloat16),
        (slabs1, kp["w1"], kp["s1"], kp["t1"]),
    )                                                           # (B*144, 64)

    # --- conv2 + FC stack + fused class/domain heads ---
    h1p = h1.reshape(B, 12, 12, 64)
    slabs2 = _pool_slabs(_im2col_nhwc(h1p, 5), pos_major=True).astype(jnp.bfloat16)
    out = _single_block_call(
        functools.partial(_conv2_fc_heads_kernel, batch=B),
        jax.ShapeDtypeStruct((B, 128), jnp.float32),
        (slabs2, kp["w2"], kp["s2"], kp["t2"],
         kp["wf1"], kp["sf1"], kp["tf1"],
         kp["wf2"], kp["sf2"], kp["tf2"],
         kp["wcd1"], kp["scd1"], kp["tcd1"],
         kp["wout"], kp["bout"]),
    )
    return out[:, 0:10], out[:, 10:20]


# ---------------------------------------------------------------------------
# Parameter init (PyTorch layouts) and kernel-layout preparation
# ---------------------------------------------------------------------------
def init_params(key):
    P = {}

    def nxt():
        nonlocal key
        key, k = jax.random.split(key)
        return k

    def uniform(shape, bound):
        return jax.random.uniform(nxt(), shape, jnp.float32, -bound, bound)

    def bn(name, c):
        P[name + "_g"] = jax.random.uniform(nxt(), (c,), jnp.float32, 0.5, 1.5)
        P[name + "_b"] = uniform((c,), 0.1)
        P[name + "_m"] = uniform((c,), 0.1)
        P[name + "_v"] = jax.random.uniform(nxt(), (c,), jnp.float32, 0.5, 1.5)

    def conv(name, co, ci, k):
        b = 1.0 / (ci * k * k) ** 0.5
        P[name + "_w"] = uniform((co, ci, k, k), b)
        P[name + "_b"] = uniform((co,), b)

    def linear(name, co, ci):
        b = 1.0 / ci ** 0.5
        P[name + "_w"] = uniform((co, ci), b)
        P[name + "_b"] = uniform((co,), b)

    conv("c1", 64, 3, 5);   bn("bn1", 64)
    conv("c2", 50, 64, 5);  bn("bn2", 50)
    linear("fc1", 100, 800); bn("fbn1", 100)
    linear("fc2", 100, 100); bn("fbn2", 100)
    linear("c_fc1", 50, 100); bn("cbn1", 50)
    linear("c_fc2", 10, 50)
    linear("d_fc1", 50, 100); bn("dbn1", 50)
    linear("d_fc2", 10, 50)
    return P


def prepare_params(P):
    """Fold BN + biases into scale/shift, re-layout / fuse / pad weights, bf16."""
    def fold(prefix, bias):
        s = P[prefix + "_g"] / jnp.sqrt(P[prefix + "_v"] + BN_EPS)
        t = P[prefix + "_b"] + (bias - P[prefix + "_m"]) * s
        return (s.reshape(1, -1).astype(jnp.float32),
                t.reshape(1, -1).astype(jnp.float32))

    kp = {}
    # conv1: (64,3,5,5) -> (ky,kx,ci,co) -> (75,64)
    kp["w1"] = jnp.transpose(P["c1_w"], (2, 3, 1, 0)).reshape(75, 64).astype(jnp.bfloat16)
    kp["s1"], kp["t1"] = fold("bn1", P["c1_b"])
    # conv2: (50,64,5,5) -> (1600,50)
    kp["w2"] = jnp.transpose(P["c2_w"], (2, 3, 1, 0)).reshape(1600, 50).astype(jnp.bfloat16)
    kp["s2"], kp["t2"] = fold("bn2", P["c2_b"])
    # fc1: (100, 800=c*16+qh*4+qw) -> per-position (16, 50, 100) (NCHW->NHWC flatten fix)
    kp["wf1"] = (jnp.transpose(P["fc1_w"].reshape(100, 50, 4, 4), (2, 3, 1, 0))
                 .reshape(16, 50, 100).astype(jnp.bfloat16))
    kp["sf1"], kp["tf1"] = fold("fbn1", P["fc1_b"])
    # fc2
    kp["wf2"] = P["fc2_w"].T.astype(jnp.bfloat16)
    kp["sf2"], kp["tf2"] = fold("fbn2", P["fc2_b"])
    # fused head entry: [c_fc1 | d_fc1] -> (100, 100)
    kp["wcd1"] = jnp.concatenate([P["c_fc1_w"].T, P["d_fc1_w"].T], axis=1).astype(jnp.bfloat16)
    sc, tc = fold("cbn1", P["c_fc1_b"])
    sd, td = fold("dbn1", P["d_fc1_b"])
    kp["scd1"] = jnp.concatenate([sc, sd], axis=1)
    kp["tcd1"] = jnp.concatenate([tc, td], axis=1)
    # fused, lane-dense head output: block-diagonal (100, 128)
    wout = jnp.zeros((100, 128), jnp.float32)
    wout = wout.at[0:50, 0:10].set(P["c_fc2_w"].T)
    wout = wout.at[50:100, 10:20].set(P["d_fc2_w"].T)
    kp["wout"] = wout.astype(jnp.bfloat16)
    bout = jnp.zeros((1, 128), jnp.float32)
    bout = bout.at[0, 0:10].set(P["c_fc2_b"])
    bout = bout.at[0, 10:20].set(P["d_fc2_b"])
    kp["bout"] = bout
    return kp


# ---------------------------------------------------------------------------
# Pure-JAX reference (eval-mode CNNModel2; bf16 matmul operands, f32 accumulate)
# ---------------------------------------------------------------------------
def reference_forward(x, P):
    B = x.shape[0]
    h = jnp.broadcast_to(x.astype(jnp.float32), (B, 3, 28, 28))

    def conv(h, w, b):
        y = jax.lax.conv_general_dilated(
            h.astype(jnp.bfloat16), w.astype(jnp.bfloat16),
            window_strides=(1, 1), padding="VALID",
            dimension_numbers=("NCHW", "OIHW", "NCHW"),
            preferred_element_type=jnp.float32)
        return y + b.reshape(1, -1, 1, 1)

    def bn(h, prefix, axis):
        shape = [1] * h.ndim
        shape[axis] = -1
        g, bt, m, v = [P[prefix + s].reshape(shape) for s in ("_g", "_b", "_m", "_v")]
        return (h - m) * (g / jnp.sqrt(v + BN_EPS)) + bt

    def pool(h):
        b, c, hh, ww = h.shape
        return h.reshape(b, c, hh // 2, 2, ww // 2, 2).max(axis=(3, 5))

    def linear(h, w, b):
        return jnp.dot(h.astype(jnp.bfloat16), w.T.astype(jnp.bfloat16),
                       preferred_element_type=jnp.float32) + b

    h = jnp.maximum(pool(bn(conv(h, P["c1_w"], P["c1_b"]), "bn1", 1)), 0.0)
    h = jnp.maximum(pool(bn(conv(h, P["c2_w"], P["c2_b"]), "bn2", 1)), 0.0)
    h = h.reshape(B, -1)                                   # NCHW flatten (50*4*4)
    h = jnp.maximum(bn(linear(h, P["fc1_w"], P["fc1_b"]), "fbn1", 1), 0.0)
    feature = jnp.maximum(bn(linear(h, P["fc2_w"], P["fc2_b"]), "fbn2", 1), 0.0)
    c = jnp.maximum(bn(linear(feature, P["c_fc1_w"], P["c_fc1_b"]), "cbn1", 1), 0.0)
    c = linear(c, P["c_fc2_w"], P["c_fc2_b"])
    d = jnp.maximum(bn(linear(feature, P["d_fc1_w"], P["d_fc1_b"]), "dbn1", 1), 0.0)
    d = linear(d, P["d_fc2_w"], P["d_fc2_b"])
    return c, d


if __name__ == "__main__":
    B = 2
    key = jax.random.PRNGKey(0)
    k_x, k_p = jax.random.split(key)
    x = jax.random.normal(k_x, (B, 1, 28, 28), dtype=jnp.float32)  # expand -> 3 channels
    alpha = jnp.float32(0.5)

    P = init_params(k_p)
    kparams = prepare_params(P)

    class_out, domain_out = cnn_model2_forward(x, alpha, kparams)
    class_out, domain_out = jax.block_until_ready((class_out, domain_out))

    ref_c, ref_d = reference_forward(x, P)
    assert class_out.shape == (B, 10)
    assert domain_out.shape == (B, 10)
    assert jnp.allclose(class_out, ref_c, atol=2e-2, rtol=2e-2)
    assert jnp.allclose(domain_out, ref_d, atol=2e-2, rtol=2e-2)

    print("KERNEL_OK")
</pallas_src>

<mosaic_0001>
module attributes {stable_mosaic.version = 11 : i64} {
  func.func @_conv1_bn_pool_relu_kernel(%arg0: i32, %arg1: memref<1152x75xbf16, #tpu.memory_space<vmem>>, %arg2: memref<75x64xbf16, #tpu.memory_space<vmem>>, %arg3: memref<1x64xf32, #tpu.memory_space<vmem>>, %arg4: memref<1x64xf32, #tpu.memory_space<vmem>>, %arg5: memref<288x64xbf16, #tpu.memory_space<vmem>>) attributes {dimension_semantics = [#tpu.dimension_semantics<arbitrary>], iteration_bounds = array<i64: 1>, scalar_prefetch = 0 : i64, scratch_operands = 0 : i64, tpu.core_type = #tpu.core_type<tc>, window_params = [{pipeline_mode = #tpu.pipeline_mode<synchronous>, transform_indices = @transform_0, window_bounds = array<i64: 1152, 75>}, {pipeline_mode = #tpu.pipeline_mode<synchronous>, transform_indices = @transform_1, window_bounds = array<i64: 75, 64>}, {pipeline_mode = #tpu.pipeline_mode<synchronous>, transform_indices = @transform_2, window_bounds = array<i64: 1, 64>}, {pipeline_mode = #tpu.pipeline_mode<synchronous>, transform_indices = @transform_3, window_bounds = array<i64: 1, 64>}, {pipeline_mode = #tpu.pipeline_mode<synchronous>, transform_indices = @transform_4, window_bounds = array<i64: 288, 64>}]} {
    %c0 = arith.constant 0 : index
    %c0_0 = arith.constant 0 : index
    %0 = vector.load %arg1[%c0, %c0_0] : memref<1152x75xbf16, #tpu.memory_space<vmem>>, vector<1152x75xbf16>
    %c0_1 = arith.constant 0 : index
    %c0_2 = arith.constant 0 : index
    %1 = vector.load %arg2[%c0_1, %c0_2] : memref<75x64xbf16, #tpu.memory_space<vmem>>, vector<75x64xbf16>
    %cst = arith.constant dense<0.000000e+00> : vector<1152x64xf32>
    %2 = tpu.matmul %0, %1, %cst {dimension_numbers = #tpu.dot_dimension_numbers<[1], [0], [0], [1], [0, 0, 1, 1], [], []>} : vector<1152x75xbf16>, vector<75x64xbf16>, vector<1152x64xf32> -> vector<1152x64xf32>
    %c0_3 = arith.constant 0 : index
    %c0_4 = arith.constant 0 : index
    %3 = vector.load %arg3[%c0_3, %c0_4] : memref<1x64xf32, #tpu.memory_space<vmem>>, vector<1x64xf32>
    %4 = vector.broadcast %3 : vector<1x64xf32> to vector<1152x64xf32>
    %5 = arith.mulf %2, %4 : vector<1152x64xf32>
    %c0_5 = arith.constant 0 : index
    %c0_6 = arith.constant 0 : index
    %6 = vector.load %arg4[%c0_5, %c0_6] : memref<1x64xf32, #tpu.memory_space<vmem>>, vector<1x64xf32>
    %7 = vector.broadcast %6 : vector<1x64xf32> to vector<1152x64xf32>
    %8 = arith.addf %5, %7 : vector<1152x64xf32>
    %9 = vector.extract_strided_slice %8 {offsets = [0, 0], sizes = [288, 64], strides = [1, 1]} : vector<1152x64xf32> to vector<288x64xf32>
    %10 = vector.extract_strided_slice %8 {offsets = [288, 0], sizes = [288, 64], strides = [1, 1]} : vector<1152x64xf32> to vector<288x64xf32>
    %11 = arith.maximumf %9, %10 : vector<288x64xf32>
    %12 = vector.extract_strided_slice %8 {offsets = [576, 0], sizes = [288, 64], strides = [1, 1]} : vector<1152x64xf32> to vector<288x64xf32>
    %13 = arith.maximumf %11, %12 : vector<288x64xf32>
    %14 = vector.extract_strided_slice %8 {offsets = [864, 0], sizes = [288, 64], strides = [1, 1]} : vector<1152x64xf32> to vector<288x64xf32>
    %15 = arith.maximumf %13, %14 : vector<288x64xf32>
    %cst_7 = arith.constant 0.000000e+00 : f32
    %16 = vector.broadcast %cst_7 : f32 to vector<288x64xf32>
    %17 = arith.maximumf %15, %16 : vector<288x64xf32>
    %18 = arith.truncf %17 : vector<288x64xf32> to vector<288x64xbf16>
    %c0_8 = arith.constant 0 : index
    %c0_9 = arith.constant 0 : index
    %19 = vector.load %arg5[%c0_8, %c0_9] : memref<288x64xbf16, #tpu.memory_space<vmem>>, vector<288x64xbf16>
    tpu.vector_store %arg5[%c0_8, %c0_9], %18 {strides = array<i32>} : memref<288x64xbf16, #tpu.memory_space<vmem>>, vector<288x64xbf16>,
    return
  }
  func.func @transform_0(%arg0: i32) -> (i32, i32) {
    %c0_i32 = arith.constant 0 : i32
    %c0_i32_0 = arith.constant 0 : i32
    %c0_i32_1 = arith.constant 0 : i32
    return %c0_i32, %c0_i32_0 : i32, i32
  }
  func.func @transform_1(%arg0: i32) -> (i32, i32) {
    %c0_i32 = arith.constant 0 : i32
    %c0_i32_0 = arith.constant 0 : i32
    %c0_i32_1 = arith.constant 0 : i32
    return %c0_i32, %c0_i32_0 : i32, i32
  }
  func.func @transform_2(%arg0: i32) -> (i32, i32) {
    %c0_i32 = arith.constant 0 : i32
    %c0_i32_0 = arith.constant 0 : i32
    %c0_i32_1 = arith.constant 0 : i32
    return %c0_i32, %c0_i32_0 : i32, i32
  }
  func.func @transform_3(%arg0: i32) -> (i32, i32) {
    %c0_i32 = arith.constant 0 : i32
    %c0_i32_0 = arith.constant 0 : i32
    %c0_i32_1 = arith.constant 0 : i32
    return %c0_i32, %c0_i32_0 : i32, i32
  }
  func.func @transform_4(%arg0: i32) -> (i32, i32) {
    %c0_i32 = arith.constant 0 : i32
    %c0_i32_0 = arith.constant 0 : i32
    %c0_i32_1 = arith.constant 0 : i32
    return %c0_i32, %c0_i32_0 : i32, i32
  }
}

module attributes {stable_mosaic.version = 11 : i64} {
  func.func @_conv2_fc_heads_kernel(%arg0: i32, %arg1: memref<128x1600xbf16, #tpu.memory_space<vmem>>, %arg2: memref<1600x50xbf16, #tpu.memory_space<vmem>>, %arg3: memref<1x50xf32, #tpu.memory_space<vmem>>, %arg4: memref<1x50xf32, #tpu.memory_space<vmem>>, %arg5: memref<16x50x100xbf16, #tpu.memory_space<vmem>>, %arg6: memref<1x100xf32, #tpu.memory_space<vmem>>, %arg7: memref<1x100xf32, #tpu.memory_space<vmem>>, %arg8: memref<100x100xbf16, #tpu.memory_space<vmem>>, %arg9: memref<1x100xf32, #tpu.memory_space<vmem>>, %arg10: memref<1x100xf32, #tpu.memory_space<vmem>>, %arg11: memref<100x100xbf16, #tpu.memory_space<vmem>>, %arg12: memref<1x100xf32, #tpu.memory_space<vmem>>, %arg13: memref<1x100xf32, #tpu.memory_space<vmem>>, %arg14: memref<100x128xbf16, #tpu.memory_space<vmem>>, %arg15: memref<1x128xf32, #tpu.memory_space<vmem>>, %arg16: memref<2x128xf32, #tpu.memory_space<vmem>>) attributes {dimension_semantics = [#tpu.dimension_semantics<arbitrary>], iteration_bounds = array<i64: 1>, scalar_prefetch = 0 : i64, scratch_operands = 0 : i64, tpu.core_type = #tpu.core_type<tc>, window_params = [{pipeline_mode = #tpu.pipeline_mode<synchronous>, transform_indices = @transform_0, window_bounds = array<i64: 128, 1600>}, {pipeline_mode = #tpu.pipeline_mode<synchronous>, transform_indices = @transform_1, window_bounds = array<i64: 1600, 50>}, {pipeline_mode = #tpu.pipeline_mode<synchronous>, transform_indices = @transform_2, window_bounds = array<i64: 1, 50>}, {pipeline_mode = #tpu.pipeline_mode<synchronous>, transform_indices = @transform_3, window_bounds = array<i64: 1, 50>}, {pipeline_mode = #tpu.pipeline_mode<synchronous>, transform_indices = @transform_4, window_bounds = array<i64: 16, 50, 100>}, {pipeline_mode = #tpu.pipeline_mode<synchronous>, transform_indices = @transform_5, window_bounds = array<i64: 1, 100>}, {pipeline_mode = #tpu.pipeline_mode<synchronous>, transform_indices = @transform_6, window_bounds = array<i64: 1, 100>}, {pipeline_mode = #tpu.pipeline_mode<synchronous>, transform_indices = @transform_7, window_bounds = array<i64: 100, 100>}, {pipeline_mode = #tpu.pipeline_mode<synchronous>, transform_indices = @transform_8, window_bounds = array<i64: 1, 100>}, {pipeline_mode = #tpu.pipeline_mode<synchronous>, transform_indices = @transform_9, window_bounds = array<i64: 1, 100>}, {pipeline_mode = #tpu.pipeline_mode<synchronous>, transform_indices = @transform_10, window_bounds = array<i64: 100, 100>}, {pipeline_mode = #tpu.pipeline_mode<synchronous>, transform_indices = @transform_11, window_bounds = array<i64: 1, 100>}, {pipeline_mode = #tpu.pipeline_mode<synchronous>, transform_indices = @transform_12, window_bounds = array<i64: 1, 100>}, {pipeline_mode = #tpu.pipeline_mode<synchronous>, transform_indices = @transform_13, window_bounds = array<i64: 100, 128>}, {pipeline_mode = #tpu.pipeline_mode<synchronous>, transform_indices = @transform_14, window_bounds = array<i64: 1, 128>}, {pipeline_mode = #tpu.pipeline_mode<synchronous>, transform_indices = @transform_15, window_bounds = array<i64: 2, 128>}]} {
    %c0 = arith.constant 0 : index
    %c0_0 = arith.constant 0 : index
    %0 = vector.load %arg1[%c0, %c0_0] : memref<128x1600xbf16, #tpu.memory_space<vmem>>, vector<128x1600xbf16>
    %c0_1 = arith.constant 0 : index
    %c0_2 = arith.constant 0 : index
    %1 = vector.load %arg2[%c0_1, %c0_2] : memref<1600x50xbf16, #tpu.memory_space<vmem>>, vector<1600x50xbf16>
    %cst = arith.constant dense<0.000000e+00> : vector<128x50xf32>
    %2 = tpu.matmul %0, %1, %cst {dimension_numbers = #tpu.dot_dimension_numbers<[1], [0], [0], [1], [0, 0, 1, 1], [], []>} : vector<128x1600xbf16>, vector<1600x50xbf16>, vector<128x50xf32> -> vector<128x50xf32>
    %c0_3 = arith.constant 0 : index
    %c0_4 = arith.constant 0 : index
    %3 = vector.load %arg3[%c0_3, %c0_4] : memref<1x50xf32, #tpu.memory_space<vmem>>, vector<1x50xf32>
    %4 = vector.broadcast %3 : vector<1x50xf32> to vector<128x50xf32>
    %5 = arith.mulf %2, %4 : vector<128x50xf32>
    %c0_5 = arith.constant 0 : index
    %c0_6 = arith.constant 0 : index
    %6 = vector.load %arg4[%c0_5, %c0_6] : memref<1x50xf32, #tpu.memory_space<vmem>>, vector<1x50xf32>
    %7 = vector.broadcast %6 : vector<1x50xf32> to vector<128x50xf32>
    %8 = arith.addf %5, %7 : vector<128x50xf32>
    %9 = vector.extract_strided_slice %8 {offsets = [0, 0], sizes = [32, 50], strides = [1, 1]} : vector<128x50xf32> to vector<32x50xf32>
    %10 = vector.extract_strided_slice %8 {offsets = [32, 0], sizes = [32, 50], strides = [1, 1]} : vector<128x50xf32> to vector<32x50xf32>
    %11 = arith.maximumf %9, %10 : vector<32x50xf32>
    %12 = vector.extract_strided_slice %8 {offsets = [64, 0], sizes = [32, 50], strides = [1, 1]} : vector<128x50xf32> to vector<32x50xf32>
    %13 = arith.maximumf %11, %12 : vector<32x50xf32>
    %14 = vector.extract_strided_slice %8 {offsets = [96, 0], sizes = [32, 50], strides = [1, 1]} : vector<128x50xf32> to vector<32x50xf32>
    %15 = arith.maximumf %13, %14 : vector<32x50xf32>
    %cst_7 = arith.constant 0.000000e+00 : f32
    %16 = vector.broadcast %cst_7 : f32 to vector<32x50xf32>
    %17 = arith.maximumf %15, %16 : vector<32x50xf32>
    %18 = arith.truncf %17 : vector<32x50xf32> to vector<32x50xbf16>
    %19 = vector.extract_strided_slice %18 {offsets = [0, 0], sizes = [2, 50], strides = [1, 1]} : vector<32x50xbf16> to vector<2x50xbf16>
    %c0_8 = arith.constant 0 : index
    %c0_9 = arith.constant 0 : index
    %c0_10 = arith.constant 0 : index
    %20 = vector.load %arg5[%c0_8, %c0_9, %c0_10] : memref<16x50x100xbf16, #tpu.memory_space<vmem>>, vector<1x50x100xbf16>
    %21 = vector.shape_cast %20 : vector<1x50x100xbf16> to vector<50x100xbf16>
    %cst_11 = arith.constant dense<0.000000e+00> : vector<2x100xf32>
    %22 = tpu.matmul %19, %21, %cst_11 {dimension_numbers = #tpu.dot_dimension_numbers<[1], [0], [0], [1], [0, 0, 1, 1], [], []>} : vector<2x50xbf16>, vector<50x100xbf16>, vector<2x100xf32> -> vector<2x100xf32>
    %23 = vector.extract_strided_slice %18 {offsets = [2, 0], sizes = [2, 50], strides = [1, 1]} : vector<32x50xbf16> to vector<2x50xbf16>
    %c1 = arith.constant 1 : index
    %c0_12 = arith.constant 0 : index
    %c0_13 = arith.constant 0 : index
    %24 = vector.load %arg5[%c1, %c0_12, %c0_13] : memref<16x50x100xbf16, #tpu.memory_space<vmem>>, vector<1x50x100xbf16>
    %25 = vector.shape_cast %24 : vector<1x50x100xbf16> to vector<50x100xbf16>
    %cst_14 = arith.constant dense<0.000000e+00> : vector<2x100xf32>
    %26 = tpu.matmul %23, %25, %cst_14 {dimension_numbers = #tpu.dot_dimension_numbers<[1], [0], [0], [1], [0, 0, 1, 1], [], []>} : vector<2x50xbf16>, vector<50x100xbf16>, vector<2x100xf32> -> vector<2x100xf32>
    %27 = arith.addf %22, %26 : vector<2x100xf32>
    %28 = vector.extract_strided_slice %18 {offsets = [4, 0], sizes = [2, 50], strides = [1, 1]} : vector<32x50xbf16> to vector<2x50xbf16>
    %c2 = arith.constant 2 : index
    %c0_15 = arith.constant 0 : index
    %c0_16 = arith.constant 0 : index
    %29 = vector.load %arg5[%c2, %c0_15, %c0_16] : memref<16x50x100xbf16, #tpu.memory_space<vmem>>, vector<1x50x100xbf16>
    %30 = vector.shape_cast %29 : vector<1x50x100xbf16> to vector<50x100xbf16>
    %cst_17 = arith.constant dense<0.000000e+00> : vector<2x100xf32>
    %31 = tpu.matmul %28, %30, %cst_17 {dimension_numbers = #tpu.dot_dimension_numbers<[1], [0], [0], [1], [0, 0, 1, 1], [], []>} : vector<2x50xbf16>, vector<50x100xbf16>, vector<2x100xf32> -> vector<2x100xf32>
    %32 = arith.addf %27, %31 : vector<2x100xf32>
    %33 = vector.extract_strided_slice %18 {offsets = [6, 0], sizes = [2, 50], strides = [1, 1]} : vector<32x50xbf16> to vector<2x50xbf16>
    %c3 = arith.constant 3 : index
    %c0_18 = arith.constant 0 : index
    %c0_19 = arith.constant 0 : index
    %34 = vector.load %arg5[%c3, %c0_18, %c0_19] : memref<16x50x100xbf16, #tpu.memory_space<vmem>>, vector<1x50x100xbf16>
    %35 = vector.shape_cast %34 : vector<1x50x100xbf16> to vector<50x100xbf16>
    %cst_20 = arith.constant dense<0.000000e+00> : vector<2x100xf32>
    %36 = tpu.matmul %33, %35, %cst_20 {dimension_numbers = #tpu.dot_dimension_numbers<[1], [0], [0], [1], [0, 0, 1, 1], [], []>} : vector<2x50xbf16>, vector<50x100xbf16>, vector<2x100xf32> -> vector<2x100xf32>
    %37 = arith.addf %32, %36 : vector<2x100xf32>
    %38 = vector.extract_strided_slice %18 {offsets = [8, 0], sizes = [2, 50], strides = [1, 1]} : vector<32x50xbf16> to vector<2x50xbf16>
    %c4 = arith.constant 4 : index
    %c0_21 = arith.constant 0 : index
    %c0_22 = arith.constant 0 : index
    %39 = vector.load %arg5[%c4, %c0_21, %c0_22] : memref<16x50x100xbf16, #tpu.memory_space<vmem>>, vector<1x50x100xbf16>
    %40 = vector.shape_cast %39 : vector<1x50x100xbf16> to vector<50x100xbf16>
    %cst_23 = arith.constant dense<0.000000e+00> : vector<2x100xf32>
    %41 = tpu.matmul %38, %40, %cst_23 {dimension_numbers = #tpu.dot_dimension_numbers<[1], [0], [0], [1], [0, 0, 1, 1], [], []>} : vector<2x50xbf16>, vector<50x100xbf16>, vector<2x100xf32> -> vector<2x100xf32>
    %42 = arith.addf %37, %41 : vector<2x100xf32>
    %43 = vector.extract_strided_slice %18 {offsets = [10, 0], sizes = [2, 50], strides = [1, 1]} : vector<32x50xbf16> to vector<2x50xbf16>
    %c5 = arith.constant 5 : index
    %c0_24 = arith.constant 0 : index
    %c0_25 = arith.constant 0 : index
    %44 = vector.load %arg5[%c5, %c0_24, %c0_25] : memref<16x50x100xbf16, #tpu.memory_space<vmem>>, vector<1x50x100xbf16>
    %45 = vector.shape_cast %44 : vector<1x50x100xbf16> to vector<50x100xbf16>
    %cst_26 = arith.constant dense<0.000000e+00> : vector<2x100xf32>
    %46 = tpu.matmul %43, %45, %cst_26 {dimension_numbers = #tpu.dot_dimension_numbers<[1], [0], [0], [1], [0, 0, 1, 1], [], []>} : vector<2x50xbf16>, vector<50x100xbf16>, vector<2x100xf32> -> vector<2x100xf32>
    %47 = arith.addf %42, %46 : vector<2x100xf32>
    %48 = vector.extract_strided_slice %18 {offsets = [12, 0], sizes = [2, 50], strides = [1, 1]} : vector<32x50xbf16> to vector<2x50xbf16>
    %c6 = arith.constant 6 : index
    %c0_27 = arith.constant 0 : index
    %c0_28 = arith.constant 0 : index
    %49 = vector.load %arg5[%c6, %c0_27, %c0_28] : memref<16x50x100xbf16, #tpu.memory_space<vmem>>, vector<1x50x100xbf16>
    %50 = vector.shape_cast %49 : vector<1x50x100xbf16> to vector<50x100xbf16>
    %cst_29 = arith.constant dense<0.000000e+00> : vector<2x100xf32>
    %51 = tpu.matmul %48, %50, %cst_29 {dimension_numbers = #tpu.dot_dimension_numbers<[1], [0], [0], [1], [0, 0, 1, 1], [], []>} : vector<2x50xbf16>, vector<50x100xbf16>, vector<2x100xf32> -> vector<2x100xf32>
    %52 = arith.addf %47, %51 : vector<2x100xf32>
    %53 = vector.extract_strided_slice %18 {offsets = [14, 0], sizes = [2, 50], strides = [1, 1]} : vector<32x50xbf16> to vector<2x50xbf16>
    %c7 = arith.constant 7 : index
    %c0_30 = arith.constant 0 : index
    %c0_31 = arith.constant 0 : index
    %54 = vector.load %arg5[%c7, %c0_30, %c0_31] : memref<16x50x100xbf16, #tpu.memory_space<vmem>>, vector<1x50x100xbf16>
    %55 = vector.shape_cast %54 : vector<1x50x100xbf16> to vector<50x100xbf16>
    %cst_32 = arith.constant dense<0.000000e+00> : vector<2x100xf32>
    %56 = tpu.matmul %53, %55, %cst_32 {dimension_numbers = #tpu.dot_dimension_numbers<[1], [0], [0], [1], [0, 0, 1, 1], [], []>} : vector<2x50xbf16>, vector<50x100xbf16>, vector<2x100xf32> -> vector<2x100xf32>
    %57 = arith.addf %52, %56 : vector<2x100xf32>
    %58 = vector.extract_strided_slice %18 {offsets = [16, 0], sizes = [2, 50], strides = [1, 1]} : vector<32x50xbf16> to vector<2x50xbf16>
    %c8 = arith.constant 8 : index
    %c0_33 = arith.constant 0 : index
    %c0_34 = arith.constant 0 : index
    %59 = vector.load %arg5[%c8, %c0_33, %c0_34] : memref<16x50x100xbf16, #tpu.memory_space<vmem>>, vector<1x50x100xbf16>
    %60 = vector.shape_cast %59 : vector<1x50x100xbf16> to vector<50x100xbf16>
    %cst_35 = arith.constant dense<0.000000e+00> : vector<2x100xf32>
    %61 = tpu.matmul %58, %60, %cst_35 {dimension_numbers = #tpu.dot_dimension_numbers<[1], [0], [0], [1], [0, 0, 1, 1], [], []>} : vector<2x50xbf16>, vector<50x100xbf16>, vector<2x100xf32> -> vector<2x100xf32>
    %62 = arith.addf %57, %61 : vector<2x100xf32>
    %63 = vector.extract_strided_slice %18 {offsets = [18, 0], sizes = [2, 50], strides = [1, 1]} : vector<32x50xbf16> to vector<2x50xbf16>
    %c9 = arith.constant 9 : index
    %c0_36 = arith.constant 0 : index
    %c0_37 = arith.constant 0 : index
    %64 = vector.load %arg5[%c9, %c0_36, %c0_37] : memref<16x50x100xbf16, #tpu.memory_space<vmem>>, vector<1x50x100xbf16>
    %65 = vector.shape_cast %64 : vector<1x50x100xbf16> to vector<50x100xbf16>
    %cst_38 = arith.constant dense<0.000000e+00> : vector<2x100xf32>
    %66 = tpu.matmul %63, %65, %cst_38 {dimension_numbers = #tpu.dot_dimension_numbers<[1], [0], [0], [1], [0, 0, 1, 1], [], []>} : vector<2x50xbf16>, vector<50x100xbf16>, vector<2x100xf32> -> vector<2x100xf32>
    %67 = arith.addf %62, %66 : vector<2x100xf32>
    %68 = vector.extract_strided_slice %18 {offsets = [20, 0], sizes = [2, 50], strides = [1, 1]} : vector<32x50xbf16> to vector<2x50xbf16>
    %c10 = arith.constant 10 : index
    %c0_39 = arith.constant 0 : index
    %c0_40 = arith.constant 0 : index
    %69 = vector.load %arg5[%c10, %c0_39, %c0_40] : memref<16x50x100xbf16, #tpu.memory_space<vmem>>, vector<1x50x100xbf16>
    %70 = vector.shape_cast %69 : vector<1x50x100xbf16> to vector<50x100xbf16>
    %cst_41 = arith.constant dense<0.000000e+00> : vector<2x100xf32>
    %71 = tpu.matmul %68, %70, %cst_41 {dimension_numbers = #tpu.dot_dimension_numbers<[1], [0], [0], [1], [0, 0, 1, 1], [], []>} : vector<2x50xbf16>, vector<50x100xbf16>, vector<2x100xf32> -> vector<2x100xf32>
    %72 = arith.addf %67, %71 : vector<2x100xf32>
    %73 = vector.extract_strided_slice %18 {offsets = [22, 0], sizes = [2, 50], strides = [1, 1]} : vector<32x50xbf16> to vector<2x50xbf16>
    %c11 = arith.constant 11 : index
    %c0_42 = arith.constant 0 : index
    %c0_43 = arith.constant 0 : index
    %74 = vector.load %arg5[%c11, %c0_42, %c0_43] : memref<16x50x100xbf16, #tpu.memory_space<vmem>>, vector<1x50x100xbf16>
    %75 = vector.shape_cast %74 : vector<1x50x100xbf16> to vector<50x100xbf16>
    %cst_44 = arith.constant dense<0.000000e+00> : vector<2x100xf32>
    %76 = tpu.matmul %73, %75, %cst_44 {dimension_numbers = #tpu.dot_dimension_numbers<[1], [0], [0], [1], [0, 0, 1, 1], [], []>} : vector<2x50xbf16>, vector<50x100xbf16>, vector<2x100xf32> -> vector<2x100xf32>
    %77 = arith.addf %72, %76 : vector<2x100xf32>
    %78 = vector.extract_strided_slice %18 {offsets = [24, 0], sizes = [2, 50], strides = [1, 1]} : vector<32x50xbf16> to vector<2x50xbf16>
    %c12 = arith.constant 12 : index
    %c0_45 = arith.constant 0 : index
    %c0_46 = arith.constant 0 : index
    %79 = vector.load %arg5[%c12, %c0_45, %c0_46] : memref<16x50x100xbf16, #tpu.memory_space<vmem>>, vector<1x50x100xbf16>
    %80 = vector.shape_cast %79 : vector<1x50x100xbf16> to vector<50x100xbf16>
    %cst_47 = arith.constant dense<0.000000e+00> : vector<2x100xf32>
    %81 = tpu.matmul %78, %80, %cst_47 {dimension_numbers = #tpu.dot_dimension_numbers<[1], [0], [0], [1], [0, 0, 1, 1], [], []>} : vector<2x50xbf16>, vector<50x100xbf16>, vector<2x100xf32> -> vector<2x100xf32>
    %82 = arith.addf %77, %81 : vector<2x100xf32>
    %83 = vector.extract_strided_slice %18 {offsets = [26, 0], sizes = [2, 50], strides = [1, 1]} : vector<32x50xbf16> to vector<2x50xbf16>
    %c13 = arith.constant 13 : index
    %c0_48 = arith.constant 0 : index
    %c0_49 = arith.constant 0 : index
    %84 = vector.load %arg5[%c13, %c0_48, %c0_49] : memref<16x50x100xbf16, #tpu.memory_space<vmem>>, vector<1x50x100xbf16>
    %85 = vector.shape_cast %84 : vector<1x50x100xbf16> to vector<50x100xbf16>
    %cst_50 = arith.constant dense<0.000000e+00> : vector<2x100xf32>
    %86 = tpu.matmul %83, %85, %cst_50 {dimension_numbers = #tpu.dot_dimension_numbers<[1], [0], [0], [1], [0, 0, 1, 1], [], []>} : vector<2x50xbf16>, vector<50x100xbf16>, vector<2x100xf32> -> vector<2x100xf32>
    %87 = arith.addf %82, %86 : vector<2x100xf32>
    %88 = vector.extract_strided_slice %18 {offsets = [28, 0], sizes = [2, 50], strides = [1, 1]} : vector<32x50xbf16> to vector<2x50xbf16>
    %c14 = arith.constant 14 : index
    %c0_51 = arith.constant 0 : index
    %c0_52 = arith.constant 0 : index
    %89 = vector.load %arg5[%c14, %c0_51, %c0_52] : memref<16x50x100xbf16, #tpu.memory_space<vmem>>, vector<1x50x100xbf16>
    %90 = vector.shape_cast %89 : vector<1x50x100xbf16> to vector<50x100xbf16>
    %cst_53 = arith.constant dense<0.000000e+00> : vector<2x100xf32>
    %91 = tpu.matmul %88, %90, %cst_53 {dimension_numbers = #tpu.dot_dimension_numbers<[1], [0], [0], [1], [0, 0, 1, 1], [], []>} : vector<2x50xbf16>, vector<50x100xbf16>, vector<2x100xf32> -> vector<2x100xf32>
    %92 = arith.addf %87, %91 : vector<2x100xf32>
    %93 = vector.extract_strided_slice %18 {offsets = [30, 0], sizes = [2, 50], strides = [1, 1]} : vector<32x50xbf16> to vector<2x50xbf16>
    %c15 = arith.constant 15 : index
    %c0_54 = arith.constant 0 : index
    %c0_55 = arith.constant 0 : index
    %94 = vector.load %arg5[%c15, %c0_54, %c0_55] : memref<16x50x100xbf16, #tpu.memory_space<vmem>>, vector<1x50x100xbf16>
    %95 = vector.shape_cast %94 : vector<1x50x100xbf16> to vector<50x100xbf16>
    %cst_56 = arith.constant dense<0.000000e+00> : vector<2x100xf32>
    %96 = tpu.matmul %93, %95, %cst_56 {dimension_numbers = #tpu.dot_dimension_numbers<[1], [0], [0], [1], [0, 0, 1, 1], [], []>} : vector<2x50xbf16>, vector<50x100xbf16>, vector<2x100xf32> -> vector<2x100xf32>
    %97 = arith.addf %92, %96 : vector<2x100xf32>
    %c0_57 = arith.constant 0 : index
    %c0_58 = arith.constant 0 : index
    %98 = vector.load %arg6[%c0_57, %c0_58] : memref<1x100xf32, #tpu.memory_space<vmem>>, vector<1x100xf32>
    %99 = vector.broadcast %98 : vector<1x100xf32> to vector<2x100xf32>
    %100 = arith.mulf %97, %99 : vector<2x100xf32>
    %c0_59 = arith.constant 0 : index
    %c0_60 = arith.constant 0 : index
    %101 = vector.load %arg7[%c0_59, %c0_60] : memref<1x100xf32, #tpu.memory_space<vmem>>, vector<1x100xf32>
    %102 = vector.broadcast %101 : vector<1x100xf32> to vector<2x100xf32>
    %103 = arith.addf %100, %102 : vector<2x100xf32>
    %cst_61 = arith.constant 0.000000e+00 : f32
    %104 = vector.broadcast %cst_61 : f32 to vector<2x100xf32>
    %105 = arith.maximumf %103, %104 : vector<2x100xf32>
    %106 = arith.truncf %105 : vector<2x100xf32> to vector<2x100xbf16>
    %c0_62 = arith.constant 0 : index
    %c0_63 = arith.constant 0 : index
    %107 = vector.load %arg8[%c0_62, %c0_63] : memref<100x100xbf16, #tpu.memory_space<vmem>>, vector<100x100xbf16>
    %cst_64 = arith.constant dense<0.000000e+00> : vector<2x100xf32>
    %108 = tpu.matmul %106, %107, %cst_64 {dimension_numbers = #tpu.dot_dimension_numbers<[1], [0], [0], [1], [0, 0, 1, 1], [], []>} : vector<2x100xbf16>, vector<100x100xbf16>, vector<2x100xf32> -> vector<2x100xf32>
    %c0_65 = arith.constant 0 : index
    %c0_66 = arith.constant 0 : index
    %109 = vector.load %arg9[%c0_65, %c0_66] : memref<1x100xf32, #tpu.memory_space<vmem>>, vector<1x100xf32>
    %110 = vector.broadcast %109 : vector<1x100xf32> to vector<2x100xf32>
    %111 = arith.mulf %108, %110 : vector<2x100xf32>
    %c0_67 = arith.constant 0 : index
    %c0_68 = arith.constant 0 : index
    %112 = vector.load %arg10[%c0_67, %c0_68] : memref<1x100xf32, #tpu.memory_space<vmem>>, vector<1x100xf32>
    %113 = vector.broadcast %112 : vector<1x100xf32> to vector<2x100xf32>
    %114 = arith.addf %111, %113 : vector<2x100xf32>
    %cst_69 = arith.constant 0.000000e+00 : f32
    %115 = vector.broadcast %cst_69 : f32 to vector<2x100xf32>
    %116 = arith.maximumf %114, %115 : vector<2x100xf32>
    %117 = arith.truncf %116 : vector<2x100xf32> to vector<2x100xbf16>
    %c0_70 = arith.constant 0 : index
    %c0_71 = arith.constant 0 : index
    %118 = vector.load %arg11[%c0_70, %c0_71] : memref<100x100xbf16, #tpu.memory_space<vmem>>, vector<100x100xbf16>
    %cst_72 = arith.constant dense<0.000000e+00> : vector<2x100xf32>
    %119 = tpu.matmul %117, %118, %cst_72 {dimension_numbers = #tpu.dot_dimension_numbers<[1], [0], [0], [1], [0, 0, 1, 1], [], []>} : vector<2x100xbf16>, vector<100x100xbf16>, vector<2x100xf32> -> vector<2x100xf32>
    %c0_73 = arith.constant 0 : index
    %c0_74 = arith.constant 0 : index
    %120 = vector.load %arg12[%c0_73, %c0_74] : memref<1x100xf32, #tpu.memory_space<vmem>>, vector<1x100xf32>
    %121 = vector.broadcast %120 : vector<1x100xf32> to vector<2x100xf32>
    %122 = arith.mulf %119, %121 : vector<2x100xf32>
    %c0_75 = arith.constant 0 : index
    %c0_76 = arith.constant 0 : index
    %123 = vector.load %arg13[%c0_75, %c0_76] : memref<1x100xf32, #tpu.memory_space<vmem>>, vector<1x100xf32>
    %124 = vector.broadcast %123 : vector<1x100xf32> to vector<2x100xf32>
    %125 = arith.addf %122, %124 : vector<2x100xf32>
    %cst_77 = arith.constant 0.000000e+00 : f32
    %126 = vector.broadcast %cst_77 : f32 to vector<2x100xf32>
    %127 = arith.maximumf %125, %126 : vector<2x100xf32>
    %128 = arith.truncf %127 : vector<2x100xf32> to vector<2x100xbf16>
    %c0_78 = arith.constant 0 : index
    %c0_79 = arith.constant 0 : index
    %129 = vector.load %arg14[%c0_78, %c0_79] : memref<100x128xbf16, #tpu.memory_space<vmem>>, vector<100x128xbf16>
    %cst_80 = arith.constant dense<0.000000e+00> : vector<2x128xf32>
    %130 = tpu.matmul %128, %129, %cst_80 {dimension_numbers = #tpu.dot_dimension_numbers<[1], [0], [0], [1], [0, 0, 1, 1], [], []>} : vector<2x100xbf16>, vector<100x128xbf16>, vector<2x128xf32> -> vector<2x128xf32>
    %c0_81 = arith.constant 0 : index
    %c0_82 = arith.constant 0 : index
    %131 = vector.load %arg15[%c0_81, %c0_82] : memref<1x128xf32, #tpu.memory_space<vmem>>, vector<1x128xf32>
    %132 = vector.broadcast %131 : vector<1x128xf32> to vector<2x128xf32>
    %133 = arith.addf %130, %132 : vector<2x128xf32>
    %c0_83 = arith.constant 0 : index
    %c0_84 = arith.constant 0 : index
    %134 = vector.load %arg16[%c0_83, %c0_84] : memref<2x128xf32, #tpu.memory_space<vmem>>, vector<2x128xf32>
    tpu.vector_store %arg16[%c0_83, %c0_84], %133 {strides = array<i32>} : memref<2x128xf32, #tpu.memory_space<vmem>>, vector<2x128xf32>,
    return
  }
  func.func @transform_0(%arg0: i32) -> (i32, i32) {
    %c0_i32 = arith.constant 0 : i32
    %c0_i32_0 = arith.constant 0 : i32
    %c0_i32_1 = arith.constant 0 : i32
    return %c0_i32, %c0_i32_0 : i32, i32
  }
  func.func @transform_1(%arg0: i32) -> (i32, i32) {
    %c0_i32 = arith.constant 0 : i32
    %c0_i32_0 = arith.constant 0 : i32
    %c0_i32_1 = arith.constant 0 : i32
    return %c0_i32, %c0_i32_0 : i32, i32
  }
  func.func @transform_2(%arg0: i32) -> (i32, i32) {
    %c0_i32 = arith.constant 0 : i32
    %c0_i32_0 = arith.constant 0 : i32
    %c0_i32_1 = arith.constant 0 : i32
    return %c0_i32, %c0_i32_0 : i32, i32
  }
  func.func @transform_3(%arg0: i32) -> (i32, i32) {
    %c0_i32 = arith.constant 0 : i32
    %c0_i32_0 = arith.constant 0 : i32
    %c0_i32_1 = arith.constant 0 : i32
    return %c0_i32, %c0_i32_0 : i32, i32
  }
  func.func @transform_4(%arg0: i32) -> (i32, i32, i32) {
    %c0_i32 = arith.constant 0 : i32
    %c0_i32_0 = arith.constant 0 : i32
    %c0_i32_1 = arith.constant 0 : i32
    %c0_i32_2 = arith.constant 0 : i32
    return %c0_i32, %c0_i32_0, %c0_i32_1 : i32, i32, i32
  }
  func.func @transform_5(%arg0: i32) -> (i32, i32) {
    %c0_i32 = arith.constant 0 : i32
    %c0_i32_0 = arith.constant 0 : i32
    %c0_i32_1 = arith.constant 0 : i32
    return %c0_i32, %c0_i32_0 : i32, i32
  }
  func.func @transform_6(%arg0: i32) -> (i32, i32) {
    %c0_i32 = arith.constant 0 : i32
    %c0_i32_0 = arith.constant 0 : i32
    %c0_i32_1 = arith.constant 0 : i32
    return %c0_i32, %c0_i32_0 : i32, i32
  }
  func.func @transform_7(%arg0: i32) -> (i32, i32) {
    %c0_i32 = arith.constant 0 : i32
    %c0_i32_0 = arith.constant 0 : i32
    %c0_i32_1 = arith.constant 0 : i32
    return %c0_i32, %c0_i32_0 : i32, i32
  }
  func.func @transform_8(%arg0: i32) -> (i32, i32) {
    %c0_i32 = arith.constant 0 : i32
    %c0_i32_0 = arith.constant 0 : i32
    %c0_i32_1 = arith.constant 0 : i32
    return %c0_i32, %c0_i32_0 : i32, i32
  }
  func.func @transform_9(%arg0: i32) -> (i32, i32) {
    %c0_i32 = arith.constant 0 : i32
    %c0_i32_0 = arith.constant 0 : i32
    %c0_i32_1 = arith.constant 0 : i32
    return %c0_i32, %c0_i32_0 : i32, i32
  }
  func.func @transform_10(%arg0: i32) -> (i32, i32) {
    %c0_i32 = arith.constant 0 : i32
    %c0_i32_0 = arith.constant 0 : i32
    %c0_i32_1 = arith.constant 0 : i32
    return %c0_i32, %c0_i32_0 : i32, i32
  }
  func.func @transform_11(%arg0: i32) -> (i32, i32) {
    %c0_i32 = arith.constant 0 : i32
    %c0_i32_0 = arith.constant 0 : i32
    %c0_i32_1 = arith.constant 0 : i32
    return %c0_i32, %c0_i32_0 : i32, i32
  }
  func.func @transform_12(%arg0: i32) -> (i32, i32) {
    %c0_i32 = arith.constant 0 : i32
    %c0_i32_0 = arith.constant 0 : i32
    %c0_i32_1 = arith.constant 0 : i32
    return %c0_i32, %c0_i32_0 : i32, i32
  }
  func.func @transform_13(%arg0: i32) -> (i32, i32) {
    %c0_i32 = arith.constant 0 : i32
    %c0_i32_0 = arith.constant 0 : i32
    %c0_i32_1 = arith.constant 0 : i32
    return %c0_i32, %c0_i32_0 : i32, i32
  }
  func.func @transform_14(%arg0: i32) -> (i32, i32) {
    %c0_i32 = arith.constant 0 : i32
    %c0_i32_0 = arith.constant 0 : i32
    %c0_i32_1 = arith.constant 0 : i32
    return %c0_i32, %c0_i32_0 : i32, i32
  }
  func.func @transform_15(%arg0: i32) -> (i32, i32) {
    %c0_i32 = arith.constant 0 : i32
    %c0_i32_0 = arith.constant 0 : i32
    %c0_i32_1 = arith.constant 0 : i32
    return %c0_i32, %c0_i32_0 : i32, i32
  }
}

</mosaic_0001>

<llo_original>
// kernel: cnn_model2_forward.2
$region0: #{cnn_model2_forward.2}
  #allocation0 [shape = 'u32[]', space=smem, size = 0x4, offset = 0x4, fixed_abs, tag = 'smem constant byte address 0x4 - core index']
  #allocation1 [shape = 'u32[144,128]{1,0:T(1,128)}', space=vmem, size = 0x12000, scoped, tag = 'internal scratch']
  %s0 = inlined_call_operand.vmem [shape: bf16[1152,75], index: 0, kind: input, shape index: {}]
  %s1 = inlined_call_operand.vmem [shape: bf16[75,64], index: 1, kind: input, shape index: {}]
  %s2 = inlined_call_operand.vmem [shape: f32[1,64], index: 2, kind: input, shape index: {}]
  %s3 = inlined_call_operand.vmem [shape: f32[1,64], index: 3, kind: input, shape index: {}]
  %s4 = inlined_call_operand.vmem [shape: bf16[288,64], index: 4, kind: output, shape index: {}]
  %s5 = sld [smem:[#allocation0]]
  $region26: #{cnn_model2_forward.2} parent=0
    _
  %s7 = ssub.s32 1, %s5
  %s8 = scalar_select 0, %s7, %s5
  // Predicated region
  $region2: #{cnn_model2_forward.2} parent=0 // pred_check
    _
  $region3: #{cnn_model2_forward.2} parent=0 // pred_check_branch
    %10 = sbr.rel (0) target = $region5
  $region4: #{cnn_model2_forward.2} parent=0 // pred_region
    _
  $region5: #{cnn_model2_forward.2} parent=0 // pred_fallthru
    _
  // Predicated region
  $region6: #{cnn_model2_forward.2} parent=0 // pred_check
    _
  $region7: #{cnn_model2_forward.2} parent=0 // pred_check_branch
    %12 = sbr.rel (0) target = $region9
  $region8: #{cnn_model2_forward.2} parent=0 // pred_region
    _
  $region9: #{cnn_model2_forward.2} parent=0 // pred_fallthru
    _
  // Predicated region
  $region10: #{cnn_model2_forward.2} parent=0 // pred_check
    _
  $region11: #{cnn_model2_forward.2} parent=0 // pred_check_branch
    %14 = sbr.rel (0) target = $region13
  $region12: #{cnn_model2_forward.2} parent=0 // pred_region
    _
  $region13: #{cnn_model2_forward.2} parent=0 // pred_fallthru
    _
  // Predicated region
  $region14: #{cnn_model2_forward.2} parent=0 // pred_check
    _
  $region15: #{cnn_model2_forward.2} parent=0 // pred_check_branch
    %16 = sbr.rel (0) target = $region17
  $region16: #{cnn_model2_forward.2} parent=0 // pred_region
    _
  $region17: #{cnn_model2_forward.2} parent=0 // pred_fallthru
    _
  %v18 = vld [vmem:[%s0] sm:$0xf]
  %v19 = vld [vmem:[%s0 + $0x4] sm:$0xf]
  %v20 = vld [vmem:[%s0 + $0x8] sm:$0xf]
  %v21 = vld [vmem:[%s0 + $0xc] sm:$0xf]
  %v22 = vld [vmem:[%s0 + $0x10] sm:$0xf]
  %v23 = vld [vmem:[%s0 + $0x14] sm:$0xf]
  %v24 = vld [vmem:[%s0 + $0x18] sm:$0xf]
  %v25 = vld [vmem:[%s0 + $0x1c] sm:$0xf]
  %v26 = vld [vmem:[%s0 + $0x20] sm:$0xf]
  %v27 = vld [vmem:[%s0 + $0x24] sm:$0xf]
  %v28 = vld [vmem:[%s0 + $0x28] sm:$0xf]
  %v29 = vld [vmem:[%s0 + $0x2c] sm:$0xf]
  %v30 = vld [vmem:[%s0 + $0x30] sm:$0xf]
  %v31 = vld [vmem:[%s0 + $0x34] sm:$0xf]
  %v32 = vld [vmem:[%s0 + $0x38] sm:$0xf]
  %v33 = vld [vmem:[%s0 + $0x3c] sm:$0xf]
  %v34 = vld [vmem:[%s0 + $0x40] sm:$0xf]
  %v35 = vld [vmem:[%s0 + $0x44] sm:$0xf]
  %v36 = vld [vmem:[%s0 + $0x48] sm:$0xf]
  %v37 = vld [vmem:[%s0 + $0x4c] sm:$0xf]
  %v38 = vld [vmem:[%s0 + $0x50] sm:$0xf]
  %v39 = vld [vmem:[%s0 + $0x54] sm:$0xf]
  %v40 = vld [vmem:[%s0 + $0x58] sm:$0xf]
  %v41 = vld [vmem:[%s0 + $0x5c] sm:$0xf]
  %v42 = vld [vmem:[%s0 + $0x60] sm:$0xf]
  %v43 = vld [vmem:[%s0 + $0x64] sm:$0xf]
  %v44 = vld [vmem:[%s0 + $0x68] sm:$0xf]
  %v45 = vld [vmem:[%s0 + $0x6c] sm:$0xf]
  %v46 = vld [vmem:[%s0 + $0x70] sm:$0xf]
  %v47 = vld [vmem:[%s0 + $0x74] sm:$0xf]
  %v48 = vld [vmem:[%s0 + $0x78] sm:$0xf]
  %v49 = vld [vmem:[%s0 + $0x7c] sm:$0xf]
  %v50 = vld [vmem:[%s0 + $0x80] sm:$0xf]
  %v51 = vld [vmem:[%s0 + $0x84] sm:$0xf]
  %v52 = vld [vmem:[%s0 + $0x88] sm:$0xf]
  %v53 = vld [vmem:[%s0 + $0x8c] sm:$0xf]
  %v54 = vld [vmem:[%s0 + $0x90] sm:$0xf]
  %v55 = vld [vmem:[%s0 + $0x94] sm:$0xf]
  %v56 = vld [vmem:[%s0 + $0x98] sm:$0xf]
  %v57 = vld [vmem:[%s0 + $0x9c] sm:$0xf]
  %v58 = vld [vmem:[%s0 + $0xa0] sm:$0xf]
  %v59 = vld [vmem:[%s0 + $0xa4] sm:$0xf]
  %v60 = vld [vmem:[%s0 + $0xa8] sm:$0xf]
  %v61 = vld [vmem:[%s0 + $0xac] sm:$0xf]
  %v62 = vld [vmem:[%s0 + $0xb0] sm:$0xf]
  %v63 = vld [vmem:[%s0 + $0xb4] sm:$0xf]
  %v64 = vld [vmem:[%s0 + $0xb8] sm:$0xf]
  %v65 = vld [vmem:[%s0 + $0xbc] sm:$0xf]
  %v66 = vld [vmem:[%s0 + $0xc0] sm:$0xf]
  %v67 = vld [vmem:[%s0 + $0xc4] sm:$0xf]
  %v68 = vld [vmem:[%s0 + $0xc8] sm:$0xf]
  %v69 = vld [vmem:[%s0 + $0xcc] sm:$0xf]
  %v70 = vld [vmem:[%s0 + $0xd0] sm:$0xf]
  %v71 = vld [vmem:[%s0 + $0xd4] sm:$0xf]
  %v72 = vld [vmem:[%s0 + $0xd8] sm:$0xf]
  %v73 = vld [vmem:[%s0 + $0xdc] sm:$0xf]
  %v74 = vld [vmem:[%s0 + $0xe0] sm:$0xf]
  %v75 = vld [vmem:[%s0 + $0xe4] sm:$0xf]
  %v76 = vld [vmem:[%s0 + $0xe8] sm:$0xf]
  %v77 = vld [vmem:[%s0 + $0xec] sm:$0xf]
  %v78 = vld [vmem:[%s0 + $0xf0] sm:$0xf]
  %v79 = vld [vmem:[%s0 + $0xf4] sm:$0xf]
  %v80 = vld [vmem:[%s0 + $0xf8] sm:$0xf]
  %v81 = vld [vmem:[%s0 + $0xfc] sm:$0xf]
  %v82 = vld [vmem:[%s0 + $0x100] sm:$0xf]
  %v83 = vld [vmem:[%s0 + $0x104] sm:$0xf]
  %v84 = vld [vmem:[%s0 + $0x108] sm:$0xf]
  %v85 = vld [vmem:[%s0 + $0x10c] sm:$0xf]
  %v86 = vld [vmem:[%s0 + $0x110] sm:$0xf]
  %v87 = vld [vmem:[%s0 + $0x114] sm:$0xf]
  %v88 = vld [vmem:[%s0 + $0x118] sm:$0xf]
  %v89 = vld [vmem:[%s0 + $0x11c] sm:$0xf]
  %v90 = vld [vmem:[%s0 + $0x120] sm:$0xf]
  %v91 = vld [vmem:[%s0 + $0x124] sm:$0xf]
  %v92 = vld [vmem:[%s0 + $0x128] sm:$0xf]
  %v93 = vld [vmem:[%s0 + $0x12c] sm:$0xf]
  %v94 = vld [vmem:[%s0 + $0x130] sm:$0xf]
  %v95 = vld [vmem:[%s0 + $0x134] sm:$0xf]
  %v96 = vld [vmem:[%s0 + $0x138] sm:$0xf]
  %v97 = vld [vmem:[%s0 + $0x13c] sm:$0xf]
  %v98 = vld [vmem:[%s0 + $0x140] sm:$0xf]
  %v99 = vld [vmem:[%s0 + $0x144] sm:$0xf]
  %v100 = vld [vmem:[%s0 + $0x148] sm:$0xf]
  %v101 = vld [vmem:[%s0 + $0x14c] sm:$0xf]
  %v102 = vld [vmem:[%s0 + $0x150] sm:$0xf]
  %v103 = vld [vmem:[%s0 + $0x154] sm:$0xf]
  %v104 = vld [vmem:[%s0 + $0x158] sm:$0xf]
  %v105 = vld [vmem:[%s0 + $0x15c] sm:$0xf]
  %v106 = vld [vmem:[%s0 + $0x160] sm:$0xf]
  %v107 = vld [vmem:[%s0 + $0x164] sm:$0xf]
  %v108 = vld [vmem:[%s0 + $0x168] sm:$0xf]
  %v109 = vld [vmem:[%s0 + $0x16c] sm:$0xf]
  %v110 = vld [vmem:[%s0 + $0x170] sm:$0xf]
  %v111 = vld [vmem:[%s0 + $0x174] sm:$0xf]
  %v112 = vld [vmem:[%s0 + $0x178] sm:$0xf]
  %v113 = vld [vmem:[%s0 + $0x17c] sm:$0xf]
  %v114 = vld [vmem:[%s0 + $0x180] sm:$0xf]
  %v115 = vld [vmem:[%s0 + $0x184] sm:$0xf]
  %v116 = vld [vmem:[%s0 + $0x188] sm:$0xf]
  %v117 = vld [vmem:[%s0 + $0x18c] sm:$0xf]
  %v118 = vld [vmem:[%s0 + $0x190] sm:$0xf]
  %v119 = vld [vmem:[%s0 + $0x194] sm:$0xf]
  %v120 = vld [vmem:[%s0 + $0x198] sm:$0xf]
  %v121 = vld [vmem:[%s0 + $0x19c] sm:$0xf]
  %v122 = vld [vmem:[%s0 + $0x1a0] sm:$0xf]
  %v123 = vld [vmem:[%s0 + $0x1a4] sm:$0xf]
  %v124 = vld [vmem:[%s0 + $0x1a8] sm:$0xf]
  %v125 = vld [vmem:[%s0 + $0x1ac] sm:$0xf]
  %v126 = vld [vmem:[%s0 + $0x1b0] sm:$0xf]
  %v127 = vld [vmem:[%s0 + $0x1b4] sm:$0xf]
  %v128 = vld [vmem:[%s0 + $0x1b8] sm:$0xf]
  %v129 = vld [vmem:[%s0 + $0x1bc] sm:$0xf]
  %v130 = vld [vmem:[%s0 + $0x1c0] sm:$0xf]
  %v131 = vld [vmem:[%s0 + $0x1c4] sm:$0xf]
  %v132 = vld [vmem:[%s0 + $0x1c8] sm:$0xf]
  %v133 = vld [vmem:[%s0 + $0x1cc] sm:$0xf]
  %v134 = vld [vmem:[%s0 + $0x1d0] sm:$0xf]
  %v135 = vld [vmem:[%s0 + $0x1d4] sm:$0xf]
  %v136 = vld [vmem:[%s0 + $0x1d8] sm:$0xf]
  %v137 = vld [vmem:[%s0 + $0x1dc] sm:$0xf]
  %v138 = vld [vmem:[%s0 + $0x1e0] sm:$0xf]
  %v139 = vld [vmem:[%s0 + $0x1e4] sm:$0xf]
  %v140 = vld [vmem:[%s0 + $0x1e8] sm:$0xf]
  %v141 = vld [vmem:[%s0 + $0x1ec] sm:$0xf]
  %v142 = vld [vmem:[%s0 + $0x1f0] sm:$0xf]
  %v143 = vld [vmem:[%s0 + $0x1f4] sm:$0xf]
  %v144 = vld [vmem:[%s0 + $0x1f8] sm:$0xf]
  %v145 = vld [vmem:[%s0 + $0x1fc] sm:$0xf]
  %v146 = vld [vmem:[%s0 + $0x200] sm:$0xf]
  %v147 = vld [vmem:[%s0 + $0x204] sm:$0xf]
  %v148 = vld [vmem:[%s0 + $0x208] sm:$0xf]
  %v149 = vld [vmem:[%s0 + $0x20c] sm:$0xf]
  %v150 = vld [vmem:[%s0 + $0x210] sm:$0xf]
  %v151 = vld [vmem:[%s0 + $0x214] sm:$0xf]
  %v152 = vld [vmem:[%s0 + $0x218] sm:$0xf]
  %v153 = vld [vmem:[%s0 + $0x21c] sm:$0xf]
  %v154 = vld [vmem:[%s0 + $0x220] sm:$0xf]
  %v155 = vld [vmem:[%s0 + $0x224] sm:$0xf]
  %v156 = vld [vmem:[%s0 + $0x228] sm:$0xf]
  %v157 = vld [vmem:[%s0 + $0x22c] sm:$0xf]
  %v158 = vld [vmem:[%s0 + $0x230] sm:$0xf]
  %v159 = vld [vmem:[%s0 + $0x234] sm:$0xf]
  %v160 = vld [vmem:[%s0 + $0x238] sm:$0xf]
  %v161 = vld [vmem:[%s0 + $0x23c] sm:$0xf]
  %v162 = vld [vmem:[%s1] sm:$0xf]
  %v163 = vld [vmem:[%s1 + $0x4] sm:$0xf]
  %v164 = vld [vmem:[%s1 + $0x8] sm:$0xf]
  %v165 = vld [vmem:[%s1 + $0xc] sm:$0xf]
  %v166 = vld [vmem:[%s1 + $0x10] sm:$0xf]
  %v167 = vld [vmem:[%s1 + $0x14] sm:$0xf]
  %v168 = vld [vmem:[%s1 + $0x18] sm:$0xf]
  %v169 = vld [vmem:[%s1 + $0x1c] sm:$0xf]
  %v170 = vld [vmem:[%s1 + $0x20] sm:$0xf]
  %v171 = vld [vmem:[%s1 + $0x24] sm:$0x3]
  %v316 = vunpack.c.l.b16 %v18
  %v317 = vunpack.c.l.b16 %v19
  %v318 = vunpack.c.l.b16 %v20
  %v319 = vunpack.c.l.b16 %v21
  %v320 = vunpack.c.l.b16 %v22
  %v321 = vunpack.c.l.b16 %v23
  %v322 = vunpack.c.l.b16 %v24
  %v323 = vunpack.c.l.b16 %v25
  %v324 = vunpack.c.l.b16 %v26
  %v325 = vunpack.c.l.b16 %v27
  %v326 = vunpack.c.l.b16 %v28
  %v327 = vunpack.c.l.b16 %v29
  %v328 = vunpack.c.l.b16 %v30
  %v329 = vunpack.c.l.b16 %v31
  %v330 = vunpack.c.l.b16 %v32
  %v331 = vunpack.c.l.b16 %v33
  %v332 = vunpack.c.l.b16 %v34
  %v333 = vunpack.c.l.b16 %v35
  %v334 = vunpack.c.l.b16 %v36
  %v335 = vunpack.c.l.b16 %v37
  %v336 = vunpack.c.l.b16 %v38
  %v337 = vunpack.c.l.b16 %v39
  %v338 = vunpack.c.l.b16 %v40
  %v339 = vunpack.c.l.b16 %v41
  %v340 = vunpack.c.l.b16 %v42
  %v341 = vunpack.c.l.b16 %v43
  %v342 = vunpack.c.l.b16 %v44
  %v343 = vunpack.c.l.b16 %v45
  %v344 = vunpack.c.l.b16 %v46
  %v345 = vunpack.c.l.b16 %v47
  %v346 = vunpack.c.l.b16 %v48
  %v347 = vunpack.c.l.b16 %v49
  %v348 = vunpack.c.l.b16 %v50
  %v349 = vunpack.c.l.b16 %v51
  %v350 = vunpack.c.l.b16 %v52
  %v351 = vunpack.c.l.b16 %v53
  %v352 = vunpack.c.l.b16 %v54
  %v353 = vunpack.c.l.b16 %v55
  %v354 = vunpack.c.l.b16 %v56
  %v355 = vunpack.c.l.b16 %v57
  %v356 = vunpack.c.l.b16 %v58
  %v357 = vunpack.c.l.b16 %v59
  %v358 = vunpack.c.l.b16 %v60
  %v359 = vunpack.c.l.b16 %v61
  %v360 = vunpack.c.l.b16 %v62
  %v361 = vunpack.c.l.b16 %v63
  %v362 = vunpack.c.l.b16 %v64
  %v363 = vunpack.c.l.b16 %v65
  %v364 = vunpack.c.l.b16 %v66
  %v365 = vunpack.c.l.b16 %v67
  %v366 = vunpack.c.l.b16 %v68
  %v367 = vunpack.c.l.b16 %v69
  %v368 = vunpack.c.l.b16 %v70
  %v369 = vunpack.c.l.b16 %v71
  %v370 = vunpack.c.l.b16 %v72
  %v371 = vunpack.c.l.b16 %v73
  %v372 = vunpack.c.l.b16 %v74
  %v373 = vunpack.c.l.b16 %v75
  %v374 = vunpack.c.l.b16 %v76
  %v375 = vunpack.c.l.b16 %v77
  %v376 = vunpack.c.l.b16 %v78
  %v377 = vunpack.c.l.b16 %v79
  %v378 = vunpack.c.l.b16 %v80
  %v379 = vunpack.c.l.b16 %v81
  %v380 = vunpack.c.l.b16 %v82
  %v381 = vunpack.c.l.b16 %v83
  %v382 = vunpack.c.l.b16 %v84
  %v383 = vunpack.c.l.b16 %v85
  %v384 = vunpack.c.l.b16 %v86
  %v385 = vunpack.c.l.b16 %v87
  %v386 = vunpack.c.l.b16 %v88
  %v387 = vunpack.c.l.b16 %v89
  %v388 = vunpack.c.l.b16 %v90
  %v389 = vunpack.c.l.b16 %v91
  %v390 = vunpack.c.l.b16 %v92
  %v391 = vunpack.c.l.b16 %v93
  %v392 = vunpack.c.l.b16 %v94
  %v393 = vunpack.c.l.b16 %v95
  %v394 = vunpack.c.l.b16 %v96
  %v395 = vunpack.c.l.b16 %v97
  %v396 = vunpack.c.l.b16 %v98
  %v397 = vunpack.c.l.b16 %v99
  %v398 = vunpack.c.l.b16 %v100
  %v399 = vunpack.c.l.b16 %v101
  %v400 = vunpack.c.l.b16 %v102
  %v401 = vunpack.c.l.b16 %v103
  %v402 = vunpack.c.l.b16 %v104
  %v403 = vunpack.c.l.b16 %v105
  %v404 = vunpack.c.l.b16 %v106
  %v405 = vunpack.c.l.b16 %v107
  %v406 = vunpack.c.l.b16 %v108
  %v407 = vunpack.c.l.b16 %v109
  %v408 = vunpack.c.l.b16 %v110
  %v409 = vunpack.c.l.b16 %v111
  %v410 = vunpack.c.l.b16 %v112
  %v411 = vunpack.c.l.b16 %v113
  %v412 = vunpack.c.l.b16 %v114
  %v413 = vunpack.c.l.b16 %v115
  %v414 = vunpack.c.l.b16 %v116
  %v415 = vunpack.c.l.b16 %v117
  %v416 = vunpack.c.l.b16 %v118
  %v417 = vunpack.c.l.b16 %v119
  %v418 = vunpack.c.l.b16 %v120
  %v419 = vunpack.c.l.b16 %v121
  %v420 = vunpack.c.l.b16 %v122
  %v421 = vunpack.c.l.b16 %v123
  %v422 = vunpack.c.l.b16 %v124
  %v423 = vunpack.c.l.b16 %v125
  %v424 = vunpack.c.l.b16 %v126
  %v425 = vunpack.c.l.b16 %v127
  %v426 = vunpack.c.l.b16 %v128
  %v427 = vunpack.c.l.b16 %v129
  %v428 = vunpack.c.l.b16 %v130
  %v429 = vunpack.c.l.b16 %v131
  %v430 = vunpack.c.l.b16 %v132
  %v431 = vunpack.c.l.b16 %v133
  %v432 = vunpack.c.l.b16 %v134
  %v433 = vunpack.c.l.b16 %v135
  %v434 = vunpack.c.l.b16 %v136
  %v435 = vunpack.c.l.b16 %v137
  %v436 = vunpack.c.l.b16 %v138
  %v437 = vunpack.c.l.b16 %v139
  %v438 = vunpack.c.l.b16 %v140
  %v439 = vunpack.c.l.b16 %v141
  %v440 = vunpack.c.l.b16 %v142
  %v441 = vunpack.c.l.b16 %v143
  %v442 = vunpack.c.l.b16 %v144
  %v443 = vunpack.c.l.b16 %v145
  %v444 = vunpack.c.l.b16 %v146
  %v445 = vunpack.c.l.b16 %v147
  %v446 = vunpack.c.l.b16 %v148
  %v447 = vunpack.c.l.b16 %v149
  %v448 = vunpack.c.l.b16 %v150
  %v449 = vunpack.c.l.b16 %v151
  %v450 = vunpack.c.l.b16 %v152
  %v451 = vunpack.c.l.b16 %v153
  %v452 = vunpack.c.l.b16 %v154
  %v453 = vunpack.c.l.b16 %v155
  %v454 = vunpack.c.l.b16 %v156
  %v455 = vunpack.c.l.b16 %v157
  %v456 = vunpack.c.l.b16 %v158
  %v457 = vunpack.c.l.b16 %v159
  %v458 = vunpack.c.l.b16 %v160
  %v459 = vunpack.c.l.b16 %v161
  %v460 = vpack.c.b16 %v317, %v316
  %v461 = vpack.c.b16 %v319, %v318
  %v462 = vpack.c.b16 %v321, %v320
  %v463 = vpack.c.b16 %v323, %v322
  %v464 = vpack.c.b16 %v325, %v324
  %v465 = vpack.c.b16 %v327, %v326
  %v466 = vpack.c.b16 %v329, %v328
  %v467 = vpack.c.b16 %v331, %v330
  %v468 = vpack.c.b16 %v333, %v332
  %v469 = vpack.c.b16 %v335, %v334
  %v470 = vpack.c.b16 %v337, %v336
  %v471 = vpack.c.b16 %v339, %v338
  %v472 = vpack.c.b16 %v341, %v340
  %v473 = vpack.c.b16 %v343, %v342
  %v474 = vpack.c.b16 %v345, %v344
  %v475 = vpack.c.b16 %v347, %v346
  %v476 = vpack.c.b16 %v349, %v348
  %v477 = vpack.c.b16 %v351, %v350
  %v478 = vpack.c.b16 %v353, %v352
  %v479 = vpack.c.b16 %v355, %v354
  %v480 = vpack.c.b16 %v357, %v356
  %v481 = vpack.c.b16 %v359, %v358
  %v482 = vpack.c.b16 %v361, %v360
  %v483 = vpack.c.b16 %v363, %v362
  %v484 = vpack.c.b16 %v365, %v364
  %v485 = vpack.c.b16 %v367, %v366
  %v486 = vpack.c.b16 %v369, %v368
  %v487 = vpack.c.b16 %v371, %v370
  %v488 = vpack.c.b16 %v373, %v372
  %v489 = vpack.c.b16 %v375, %v374
  %v490 = vpack.c.b16 %v377, %v376
  %v491 = vpack.c.b16 %v379, %v378
  %v492 = vpack.c.b16 %v381, %v380
  %v493 = vpack.c.b16 %v383, %v382
  %v494 = vpack.c.b16 %v385, %v384
  %v495 = vpack.c.b16 %v387, %v386
  %v496 = vpack.c.b16 %v389, %v388
  %v497 = vpack.c.b16 %v391, %v390
  %v498 = vpack.c.b16 %v393, %v392
  %v499 = vpack.c.b16 %v395, %v394
  %v500 = vpack.c.b16 %v397, %v396
  %v501 = vpack.c.b16 %v399, %v398
  %v502 = vpack.c.b16 %v401, %v400
  %v503 = vpack.c.b16 %v403, %v402
  %v504 = vpack.c.b16 %v405, %v404
  %v505 = vpack.c.b16 %v407, %v406
  %v506 = vpack.c.b16 %v409, %v408
  %v507 = vpack.c.b16 %v411, %v410
  %v508 = vpack.c.b16 %v413, %v412
  %v509 = vpack.c.b16 %v415, %v414
  %v510 = vpack.c.b16 %v417, %v416
  %v511 = vpack.c.b16 %v419, %v418
  %v512 = vpack.c.b16 %v421, %v420
  %v513 = vpack.c.b16 %v423, %v422
  %v514 = vpack.c.b16 %v425, %v424
  %v515 = vpack.c.b16 %v427, %v426
  %v516 = vpack.c.b16 %v429, %v428
  %v517 = vpack.c.b16 %v431, %v430
  %v518 = vpack.c.b16 %v433, %v432
  %v519 = vpack.c.b16 %v435, %v434
  %v520 = vpack.c.b16 %v437, %v436
  %v521 = vpack.c.b16 %v439, %v438
  %v522 = vpack.c.b16 %v441, %v440
  %v523 = vpack.c.b16 %v443, %v442
  %v524 = vpack.c.b16 %v445, %v444
  %v525 = vpack.c.b16 %v447, %v446
  %v526 = vpack.c.b16 %v449, %v448
  %v527 = vpack.c.b16 %v451, %v450
  %v528 = vpack.c.b16 %v453, %v452
  %v529 = vpack.c.b16 %v455, %v454
  %v530 = vpack.c.b16 %v457, %v456
  %v531 = vpack.c.b16 %v459, %v458
  %v542 = vunpack.c.l.b16 %v162
  %v543 = vunpack.c.l.b16 %v163
  %v544 = vunpack.c.l.b16 %v164
  %v545 = vunpack.c.l.b16 %v165
  %v546 = vunpack.c.l.b16 %v166
  %v547 = vunpack.c.l.b16 %v167
  %v548 = vunpack.c.l.b16 %v168
  %v549 = vunpack.c.l.b16 %v169
  %v550 = vunpack.c.l.b16 %v170
  %v551 = vunpack.c.l.b16 %v171
  %v552 = vpack.c.b16 %v543, %v542
  %v553 = vpack.c.b16 %v545, %v544
  %v554 = vpack.c.b16 %v547, %v546
  %v555 = vpack.c.b16 %v549, %v548
  %v556 = vpack.c.b16 %v551, %v550
  %vm561 = vcmask 613376
  %v563 = vsel %vm561, %v460, 0
  %v566 = vsel %vm561, %v461, 0
  %v569 = vsel %vm561, %v462, 0
  %v572 = vsel %vm561, %v463, 0
  %v575 = vsel %vm561, %v464, 0
  %v578 = vsel %vm561, %v465, 0
  %v581 = vsel %vm561, %v466, 0
  %v584 = vsel %vm561, %v467, 0
  %v587 = vsel %vm561, %v468, 0
  %v590 = vsel %vm561, %v469, 0
  %v593 = vsel %vm561, %v470, 0
  %v596 = vsel %vm561, %v471, 0
  %v599 = vsel %vm561, %v472, 0
  %v602 = vsel %vm561, %v473, 0
  %v605 = vsel %vm561, %v474, 0
  %v608 = vsel %vm561, %v475, 0
  %v611 = vsel %vm561, %v476, 0
  %v614 = vsel %vm561, %v477, 0
  %v617 = vsel %vm561, %v478, 0
  %v620 = vsel %vm561, %v479, 0
  %v623 = vsel %vm561, %v480, 0
  %v626 = vsel %vm561, %v481, 0
  %v629 = vsel %vm561, %v482, 0
  %v632 = vsel %vm561, %v483, 0
  %v635 = vsel %vm561, %v484, 0
  %v638 = vsel %vm561, %v485, 0
  %v641 = vsel %vm561, %v486, 0
  %v644 = vsel %vm561, %v487, 0
  %v647 = vsel %vm561, %v488, 0
  %v650 = vsel %vm561, %v489, 0
  %v653 = vsel %vm561, %v490, 0
  %v656 = vsel %vm561, %v491, 0
  %v659 = vsel %vm561, %v492, 0
  %v662 = vsel %vm561, %v493, 0
  %v665 = vsel %vm561, %v494, 0
  %v668 = vsel %vm561, %v495, 0
  %v671 = vsel %vm561, %v496, 0
  %v674 = vsel %vm561, %v497, 0
  %v677 = vsel %vm561, %v498, 0
  %v680 = vsel %vm561, %v499, 0
  %v683 = vsel %vm561, %v500, 0
  %v686 = vsel %vm561, %v501, 0
  %v689 = vsel %vm561, %v502, 0
  %v692 = vsel %vm561, %v503, 0
  %v695 = vsel %vm561, %v504, 0
  %v698 = vsel %vm561, %v505, 0
  %v701 = vsel %vm561, %v506, 0
  %v704 = vsel %vm561, %v507, 0
  %v707 = vsel %vm561, %v508, 0
  %v710 = vsel %vm561, %v509, 0
  %v713 = vsel %vm561, %v510, 0
  %v716 = vsel %vm561, %v511, 0
  %v719 = vsel %vm561, %v512, 0
  %v722 = vsel %vm561, %v513, 0
  %v725 = vsel %vm561, %v514, 0
  %v728 = vsel %vm561, %v515, 0
  %v731 = vsel %vm561, %v516, 0
  %v734 = vsel %vm561, %v517, 0
  %v737 = vsel %vm561, %v518, 0
  %v740 = vsel %vm561, %v519, 0
  %v743 = vsel %vm561, %v520, 0
  %v746 = vsel %vm561, %v521, 0
  %v749 = vsel %vm561, %v522, 0
  %v752 = vsel %vm561, %v523, 0
  %v755 = vsel %vm561, %v524, 0
  %v758 = vsel %vm561, %v525, 0
  %v761 = vsel %vm561, %v526, 0
  %v764 = vsel %vm561, %v527, 0
  %v767 = vsel %vm561, %v528, 0
  %v770 = vsel %vm561, %v529, 0
  %v773 = vsel %vm561, %v530, 0
  %v776 = vsel %vm561, %v531, 0
  %vm778 = vcmask 1044480
  %vm779 = vcmask 1045504
  %v780 = vsel %vm778, 4294967295, 65535
  %v781 = vsel %vm779, %v780, 0
  %v783 = vand.u32 %v556, %v781
  %785 = vmatprep.subr.bf16.mxu0 0
  %786 = vmatpush1.bf16.msra.mxu0 %v552
  %787 = vmatprep.subr.bf16.mxu0 0
  %788 = vmatpush1.bf16.msra.mxu0 %v553
  %789 = vmatprep.subr.bf16.mxu0 0
  %790 = vmatpush1.bf16.msra.mxu0 %v554
  %791 = vmatprep.subr.bf16.mxu0 0
  %792 = vmatpush1.bf16.msra.mxu0 %v555
  %793 = vmatprep.subr.bf16.mxu0 0
  %794 = vmatpush1.bf16.msra.mxu0 %v783
  %795 = vmatprep.subr.bf16.mxu0 0
  %796 = vmatpush1.bf16.msra.mxu0 0
  %797 = vmatprep.subr.bf16.mxu0 0
  %798 = vmatpush1.bf16.msra.mxu0 0
  %799 = vmatprep.subr.bf16.mxu0 0
  %800 = vmatpush1.bf16.msra.mxu0 0
  %801 = vmatprep.subr.bf16.mxu0 0
  %802 = vmatpush1.bf16.msra.mxu0 0
  %803 = vmatprep.subr.bf16.mxu0 0
  %804 = vmatpush1.bf16.msra.mxu0 0
  %805 = vmatprep.subr.bf16.mxu0 0
  %806 = vmatpush1.bf16.msra.mxu0 0
  %807 = vmatprep.subr.bf16.mxu0 0
  %808 = vmatpush1.bf16.msra.mxu0 0
  %809 = vmatprep.subr.bf16.mxu0 0
  %810 = vmatpush1.bf16.msra.mxu0 0
  %811 = vmatprep.subr.bf16.mxu0 0
  %812 = vmatpush1.bf16.msra.mxu0 0
  %813 = vmatprep.subr.bf16.mxu0 0
  %814 = vmatpush1.bf16.msra.mxu0 0
  %815 = vmatprep.subr.bf16.mxu0 0
  %816 = vmatpush1.bf16.msra.mxu0 0
  %817 = vmatprep.mubr.bf16.mxu0 0
  %818 = vmatmul.mubr.bf16.gmra.mrb[0].mxu0 %v563
  %v819 = vpop.f32.mrb[0].mxu0
  %v820 = vadd.f32 0.0, %v819
  %v821 = vpop.f32.mrb[0].mxu0
  %v822 = vpop.f32.mrb[0].mxu0
  %v823 = vadd.f32 0.0, %v822
  %v824 = vpop.f32.mrb[0].mxu0
  %825 = vmatprep.mubr.bf16.mxu0 0
  %826 = vmatmul.mubr.bf16.gmra.mrb[0].mxu0 %v566
  %v827 = vpop.f32.mrb[0].mxu0
  %v828 = vadd.f32 0.0, %v827
  %v829 = vpop.f32.mrb[0].mxu0
  %v830 = vpop.f32.mrb[0].mxu0
  %v831 = vadd.f32 0.0, %v830
  %v832 = vpop.f32.mrb[0].mxu0
  %833 = vmatprep.mubr.bf16.mxu0 0
  %834 = vmatmul.mubr.bf16.gmra.mrb[0].mxu0 %v569
  %v835 = vpop.f32.mrb[0].mxu0
  %v836 = vadd.f32 0.0, %v835
  %v837 = vpop.f32.mrb[0].mxu0
  %v838 = vpop.f32.mrb[0].mxu0
  %v839 = vadd.f32 0.0, %v838
  %v840 = vpop.f32.mrb[0].mxu0
  %841 = vmatprep.mubr.bf16.mxu0 0
  %842 = vmatmul.mubr.bf16.gmra.mrb[0].mxu0 %v572
  %v843 = vpop.f32.mrb[0].mxu0
  %v844 = vadd.f32 0.0, %v843
  %v845 = vpop.f32.mrb[0].mxu0
  %v846 = vpop.f32.mrb[0].mxu0
  %v847 = vadd.f32 0.0, %v846
  %v848 = vpop.f32.mrb[0].mxu0
  %849 = vmatprep.mubr.bf16.mxu0 0
  %850 = vmatmul.mubr.bf16.gmra.mrb[0].mxu0 %v575
  %v851 = vpop.f32.mrb[0].mxu0
  %v852 = vadd.f32 0.0, %v851
  %v853 = vpop.f32.mrb[0].mxu0
  %v854 = vpop.f32.mrb[0].mxu0
  %v855 = vadd.f32 0.0, %v854
  %v856 = vpop.f32.mrb[0].mxu0
  %857 = vmatprep.mubr.bf16.mxu0 0
  %858 = vmatmul.mubr.bf16.gmra.mrb[0].mxu0 %v578
  %v859 = vpop.f32.mrb[0].mxu0
  %v860 = vadd.f32 0.0, %v859
  %v861 = vpop.f32.mrb[0].mxu0
  %v862 = vpop.f32.mrb[0].mxu0
  %v863 = vadd.f32 0.0, %v862
  %v864 = vpop.f32.mrb[0].mxu0
  %865 = vmatprep.mubr.bf16.mxu0 0
  %866 = vmatmul.mubr.bf16.gmra.mrb[0].mxu0 %v581
  %v867 = vpop.f32.mrb[0].mxu0
  %v868 = vadd.f32 0.0, %v867
  %v869 = vpop.f32.mrb[0].mxu0
  %v870 = vpop.f32.mrb[0].mxu0
  %v871 = vadd.f32 0.0, %v870
  %v872 = vpop.f32.mrb[0].mxu0
  %873 = vmatprep.mubr.bf16.mxu0 0
  %874 = vmatmul.mubr.bf16.gmra.mrb[0].mxu0 %v584
  %v875 = vpop.f32.mrb[0].mxu0
  %v876 = vadd.f32 0.0, %v875
  %v877 = vpop.f32.mrb[0].mxu0
  %v878 = vpop.f32.mrb[0].mxu0
  %v879 = vadd.f32 0.0, %v878
  %v880 = vpop.f32.mrb[0].mxu0
  %881 = vmatprep.mubr.bf16.mxu0 0
  %882 = vmatmul.mubr.bf16.gmra.mrb[0].mxu0 %v587
  %v883 = vpop.f32.mrb[0].mxu0
  %v884 = vadd.f32 0.0, %v883
  %v885 = vpop.f32.mrb[0].mxu0
  %v886 = vpop.f32.mrb[0].mxu0
  %v887 = vadd.f32 0.0, %v886
  %v888 = vpop.f32.mrb[0].mxu0
  %889 = vmatprep.mubr.bf16.mxu0 0
  %890 = vmatmul.mubr.bf16.gmra.mrb[0].mxu0 %v590
  %v891 = vpop.f32.mrb[0].mxu0
  %v892 = vadd.f32 0.0, %v891
  %v893 = vpop.f32.mrb[0].mxu0
  %v894 = vpop.f32.mrb[0].mxu0
  %v895 = vadd.f32 0.0, %v894
  %v896 = vpop.f32.mrb[0].mxu0
  %897 = vmatprep.mubr.bf16.mxu0 0
  %898 = vmatmul.mubr.bf16.gmra.mrb[0].mxu0 %v593
  %v899 = vpop.f32.mrb[0].mxu0
  %v900 = vadd.f32 0.0, %v899
  %v901 = vpop.f32.mrb[0].mxu0
  %v902 = vpop.f32.mrb[0].mxu0
  %v903 = vadd.f32 0.0, %v902
  %v904 = vpop.f32.mrb[0].mxu0
  %905 = vmatprep.mubr.bf16.mxu0 0
  %906 = vmatmul.mubr.bf16.gmra.mrb[0].mxu0 %v596
  %v907 = vpop.f32.mrb[0].mxu0
  %v908 = vadd.f32 0.0, %v907
  %v909 = vpop.f32.mrb[0].mxu0
  %v910 = vpop.f32.mrb[0].mxu0
  %v911 = vadd.f32 0.0, %v910
  %v912 = vpop.f32.mrb[0].mxu0
  %913 = vmatprep.mubr.bf16.mxu0 0
  %914 = vmatmul.mubr.bf16.gmra.mrb[0].mxu0 %v599
  %v915 = vpop.f32.mrb[0].mxu0
  %v916 = vadd.f32 0.0, %v915
  %v917 = vpop.f32.mrb[0].mxu0
  %v918 = vpop.f32.mrb[0].mxu0
  %v919 = vadd.f32 0.0, %v918
  %v920 = vpop.f32.mrb[0].mxu0
  %921 = vmatprep.mubr.bf16.mxu0 0
  %922 = vmatmul.mubr.bf16.gmra.mrb[0].mxu0 %v602
  %v923 = vpop.f32.mrb[0].mxu0
  %v924 = vadd.f32 0.0, %v923
  %v925 = vpop.f32.mrb[0].mxu0
  %v926 = vpop.f32.mrb[0].mxu0
  %v927 = vadd.f32 0.0, %v926
  %v928 = vpop.f32.mrb[0].mxu0
  %929 = vmatprep.mubr.bf16.mxu0 0
  %930 = vmatmul.mubr.bf16.gmra.mrb[0].mxu0 %v605
  %v931 = vpop.f32.mrb[0].mxu0
  %v932 = vadd.f32 0.0, %v931
  %v933 = vpop.f32.mrb[0].mxu0
  %v934 = vpop.f32.mrb[0].mxu0
  %v935 = vadd.f32 0.0, %v934
  %v936 = vpop.f32.mrb[0].mxu0
  %937 = vmatprep.mubr.bf16.mxu0 0
  %938 = vmatmul.mubr.bf16.gmra.mrb[0].mxu0 %v608
  %v939 = vpop.f32.mrb[0].mxu0
  %v940 = vadd.f32 0.0, %v939
  %v941 = vpop.f32.mrb[0].mxu0
  %v942 = vpop.f32.mrb[0].mxu0
  %v943 = vadd.f32 0.0, %v942
  %v944 = vpop.f32.mrb[0].mxu0
  %945 = vmatprep.mubr.bf16.mxu0 0
  %946 = vmatmul.mubr.bf16.gmra.mrb[0].mxu0 %v611
  %v947 = vpop.f32.mrb[0].mxu0
  %v948 = vadd.f32 0.0, %v947
  %v949 = vpop.f32.mrb[0].mxu0
  %v950 = vpop.f32.mrb[0].mxu0
  %v951 = vadd.f32 0.0, %v950
  %v952 = vpop.f32.mrb[0].mxu0
  %953 = vmatprep.mubr.bf16.mxu0 0
  %954 = vmatmul.mubr.bf16.gmra.mrb[0].mxu0 %v614
  %v955 = vpop.f32.mrb[0].mxu0
  %v956 = vadd.f32 0.0, %v955
  %v957 = vpop.f32.mrb[0].mxu0
  %v958 = vpop.f32.mrb[0].mxu0
  %v959 = vadd.f32 0.0, %v958
  %v960 = vpop.f32.mrb[0].mxu0
  %961 = vmatprep.mubr.bf16.mxu0 0
  %962 = vmatmul.mubr.bf16.gmra.mrb[0].mxu0 %v617
  %v963 = vpop.f32.mrb[0].mxu0
  %v964 = vadd.f32 0.0, %v963
  %v965 = vpop.f32.mrb[0].mxu0
  %v966 = vpop.f32.mrb[0].mxu0
  %v967 = vadd.f32 0.0, %v966
  %v968 = vpop.f32.mrb[0].mxu0
  %969 = vmatprep.mubr.bf16.mxu0 0
  %970 = vmatmul.mubr.bf16.gmra.mrb[0].mxu0 %v620
  %v971 = vpop.f32.mrb[0].mxu0
  %v972 = vadd.f32 0.0, %v971
  %v973 = vpop.f32.mrb[0].mxu0
  %v974 = vpop.f32.mrb[0].mxu0
  %v975 = vadd.f32 0.0, %v974
  %v976 = vpop.f32.mrb[0].mxu0
  %977 = vmatprep.mubr.bf16.mxu0 0
  %978 = vmatmul.mubr.bf16.gmra.mrb[0].mxu0 %v623
  %v979 = vpop.f32.mrb[0].mxu0
  %v980 = vadd.f32 0.0, %v979
  %v981 = vpop.f32.mrb[0].mxu0
  %v982 = vpop.f32.mrb[0].mxu0
  %v983 = vadd.f32 0.0, %v982
  %v984 = vpop.f32.mrb[0].mxu0
  %985 = vmatprep.mubr.bf16.mxu0 0
  %986 = vmatmul.mubr.bf16.gmra.mrb[0].mxu0 %v626
  %v987 = vpop.f32.mrb[0].mxu0
  %v988 = vadd.f32 0.0, %v987
  %v989 = vpop.f32.mrb[0].mxu0
  %v990 = vpop.f32.mrb[0].mxu0
  %v991 = vadd.f32 0.0, %v990
  %v992 = vpop.f32.mrb[0].mxu0
  %993 = vmatprep.mubr.bf16.mxu0 0
  %994 = vmatmul.mubr.bf16.gmra.mrb[0].mxu0 %v629
  %v995 = vpop.f32.mrb[0].mxu0
  %v996 = vadd.f32 0.0, %v995
  %v997 = vpop.f32.mrb[0].mxu0
  %v998 = vpop.f32.mrb[0].mxu0
  %v999 = vadd.f32 0.0, %v998
  %v1000 = vpop.f32.mrb[0].mxu0
  %1001 = vmatprep.mubr.bf16.mxu0 0
  %1002 = vmatmul.mubr.bf16.gmra.mrb[0].mxu0 %v632
  %v1003 = vpop.f32.mrb[0].mxu0
  %v1004 = vadd.f32 0.0, %v1003
  %v1005 = vpop.f32.mrb[0].mxu0
  %v1006 = vpop.f32.mrb[0].mxu0
  %v1007 = vadd.f32 0.0, %v1006
  %v1008 = vpop.f32.mrb[0].mxu0
  %1009 = vmatprep.mubr.bf16.mxu0 0
  %1010 = vmatmul.mubr.bf16.gmra.mrb[0].mxu0 %v635
  %v1011 = vpop.f32.mrb[0].mxu0
  %v1012 = vadd.f32 0.0, %v1011
  %v1013 = vpop.f32.mrb[0].mxu0
  %v1014 = vpop.f32.mrb[0].mxu0
  %v1015 = vadd.f32 0.0, %v1014
  %v1016 = vpop.f32.mrb[0].mxu0
  %1017 = vmatprep.mubr.bf16.mxu0 0
  %1018 = vmatmul.mubr.bf16.gmra.mrb[0].mxu0 %v638
  %v1019 = vpop.f32.mrb[0].mxu0
  %v1020 = vadd.f32 0.0, %v1019
  %v1021 = vpop.f32.mrb[0].mxu0
  %v1022 = vpop.f32.mrb[0].mxu0
  %v1023 = vadd.f32 0.0, %v1022
  %v1024 = vpop.f32.mrb[0].mxu0
  %1025 = vmatprep.mubr.bf16.mxu0 0
  %1026 = vmatmul.mubr.bf16.gmra.mrb[0].mxu0 %v641
  %v1027 = vpop.f32.mrb[0].mxu0
  %v1028 = vadd.f32 0.0, %v1027
  %v1029 = vpop.f32.mrb[0].mxu0
  %v1030 = vpop.f32.mrb[0].mxu0
  %v1031 = vadd.f32 0.0, %v1030
  %v1032 = vpop.f32.mrb[0].mxu0
  %1033 = vmatprep.mubr.bf16.mxu0 0
  %1034 = vmatmul.mubr.bf16.gmra.mrb[0].mxu0 %v644
  %v1035 = vpop.f32.mrb[0].mxu0
  %v1036 = vadd.f32 0.0, %v1035
  %v1037 = vpop.f32.mrb[0].mxu0
  %v1038 = vpop.f32.mrb[0].mxu0
  %v1039 = vadd.f32 0.0, %v1038
  %v1040 = vpop.f32.mrb[0].mxu0
  %1041 = vmatprep.mubr.bf16.mxu0 0
  %1042 = vmatmul.mubr.bf16.gmra.mrb[0].mxu0 %v647
  %v1043 = vpop.f32.mrb[0].mxu0
  %v1044 = vadd.f32 0.0, %v1043
  %v1045 = vpop.f32.mrb[0].mxu0
  %v1046 = vpop.f32.mrb[0].mxu0
  %v1047 = vadd.f32 0.0, %v1046
  %v1048 = vpop.f32.mrb[0].mxu0
  %1049 = vmatprep.mubr.bf16.mxu0 0
  %1050 = vmatmul.mubr.bf16.gmra.mrb[0].mxu0 %v650
  %v1051 = vpop.f32.mrb[0].mxu0
  %v1052 = vadd.f32 0.0, %v1051
  %v1053 = vpop.f32.mrb[0].mxu0
  %v1054 = vpop.f32.mrb[0].mxu0
  %v1055 = vadd.f32 0.0, %v1054
  %v1056 = vpop.f32.mrb[0].mxu0
  %1057 = vmatprep.mubr.bf16.mxu0 0
  %1058 = vmatmul.mubr.bf16.gmra.mrb[0].mxu0 %v653
  %v1059 = vpop.f32.mrb[0].mxu0
  %v1060 = vadd.f32 0.0, %v1059
  %v1061 = vpop.f32.mrb[0].mxu0
  %v1062 = vpop.f32.mrb[0].mxu0
  %v1063 = vadd.f32 0.0, %v1062
  %v1064 = vpop.f32.mrb[0].mxu0
  %1065 = vmatprep.mubr.bf16.mxu0 0
  %1066 = vmatmul.mubr.bf16.gmra.mrb[0].mxu0 %v656
  %v1067 = vpop.f32.mrb[0].mxu0
  %v1068 = vadd.f32 0.0, %v1067
  %v1069 = vpop.f32.mrb[0].mxu0
  %v1070 = vpop.f32.mrb[0].mxu0
  %v1071 = vadd.f32 0.0, %v1070
  %v1072 = vpop.f32.mrb[0].mxu0
  %1073 = vmatprep.mubr.bf16.mxu0 0
  %1074 = vmatmul.mubr.bf16.gmra.mrb[0].mxu0 %v659
  %v1075 = vpop.f32.mrb[0].mxu0
  %v1076 = vadd.f32 0.0, %v1075
  %v1077 = vpop.f32.mrb[0].mxu0
  %v1078 = vpop.f32.mrb[0].mxu0
  %v1079 = vadd.f32 0.0, %v1078
  %v1080 = vpop.f32.mrb[0].mxu0
  %1081 = vmatprep.mubr.bf16.mxu0 0
  %1082 = vmatmul.mubr.bf16.gmra.mrb[0].mxu0 %v662
  %v1083 = vpop.f32.mrb[0].mxu0
  %v1084 = vadd.f32 0.0, %v1083
  %v1085 = vpop.f32.mrb[0].mxu0
  %v1086 = vpop.f32.mrb[0].mxu0
  %v1087 = vadd.f32 0.0, %v1086
  %v1088 = vpop.f32.mrb[0].mxu0
  %1089 = vmatprep.mubr.bf16.mxu0 0
  %1090 = vmatmul.mubr.bf16.gmra.mrb[0].mxu0 %v665
  %v1091 = vpop.f32.mrb[0].mxu0
  %v1092 = vadd.f32 0.0, %v1091
  %v1093 = vpop.f32.mrb[0].mxu0
  %v1094 = vpop.f32.mrb[0].mxu0
  %v1095 = vadd.f32 0.0, %v1094
  %v1096 = vpop.f32.mrb[0].mxu0
  %1097 = vmatprep.mubr.bf16.mxu0 0
  %1098 = vmatmul.mubr.bf16.gmra.mrb[0].mxu0 %v668
  %v1099 = vpop.f32.mrb[0].mxu0
  %v1100 = vadd.f32 0.0, %v1099
  %v1101 = vpop.f32.mrb[0].mxu0
  %v1102 = vpop.f32.mrb[0].mxu0
  %v1103 = vadd.f32 0.0, %v1102
  %v1104 = vpop.f32.mrb[0].mxu0
  %1105 = vmatprep.mubr.bf16.mxu0 0
  %1106 = vmatmul.mubr.bf16.gmra.mrb[0].mxu0 %v671
  %v1107 = vpop.f32.mrb[0].mxu0
  %v1108 = vadd.f32 0.0, %v1107
  %v1109 = vpop.f32.mrb[0].mxu0
  %v1110 = vpop.f32.mrb[0].mxu0
  %v1111 = vadd.f32 0.0, %v1110
  %v1112 = vpop.f32.mrb[0].mxu0
  %1113 = vmatprep.mubr.bf16.mxu0 0
  %1114 = vmatmul.mubr.bf16.gmra.mrb[0].mxu0 %v674
  %v1115 = vpop.f32.mrb[0].mxu0
  %v1116 = vadd.f32 0.0, %v1115
  %v1117 = vpop.f32.mrb[0].mxu0
  %v1118 = vpop.f32.mrb[0].mxu0
  %v1119 = vadd.f32 0.0, %v1118
  %v1120 = vpop.f32.mrb[0].mxu0
  %1121 = vmatprep.mubr.bf16.mxu0 0
  %1122 = vmatmul.mubr.bf16.gmra.mrb[0].mxu0 %v677
  %v1123 = vpop.f32.mrb[0].mxu0
  %v1124 = vadd.f32 0.0, %v1123
  %v1125 = vpop.f32.mrb[0].mxu0
  %v1126 = vpop.f32.mrb[0].mxu0
  %v1127 = vadd.f32 0.0, %v1126
  %v1128 = vpop.f32.mrb[0].mxu0
  %1129 = vmatprep.mubr.bf16.mxu0 0
  %1130 = vmatmul.mubr.bf16.gmra.mrb[0].mxu0 %v680
  %v1131 = vpop.f32.mrb[0].mxu0
  %v1132 = vadd.f32 0.0, %v1131
  %v1133 = vpop.f32.mrb[0].mxu0
  %v1134 = vpop.f32.mrb[0].mxu0
  %v1135 = vadd.f32 0.0, %v1134
  %v1136 = vpop.f32.mrb[0].mxu0
  %1137 = vmatprep.mubr.bf16.mxu0 0
  %1138 = vmatmul.mubr.bf16.gmra.mrb[0].mxu0 %v683
  %v1139 = vpop.f32.mrb[0].mxu0
  %v1140 = vadd.f32 0.0, %v1139
  %v1141 = vpop.f32.mrb[0].mxu0
  %v1142 = vpop.f32.mrb[0].mxu0
  %v1143 = vadd.f32 0.0, %v1142
  %v1144 = vpop.f32.mrb[0].mxu0
  %1145 = vmatprep.mubr.bf16.mxu0 0
  %1146 = vmatmul.mubr.bf16.gmra.mrb[0].mxu0 %v686
  %v1147 = vpop.f32.mrb[0].mxu0
  %v1148 = vadd.f32 0.0, %v1147
  %v1149 = vpop.f32.mrb[0].mxu0
  %v1150 = vpop.f32.mrb[0].mxu0
  %v1151 = vadd.f32 0.0, %v1150
  %v1152 = vpop.f32.mrb[0].mxu0
  %1153 = vmatprep.mubr.bf16.mxu0 0
  %1154 = vmatmul.mubr.bf16.gmra.mrb[0].mxu0 %v689
  %v1155 = vpop.f32.mrb[0].mxu0
  %v1156 = vadd.f32 0.0, %v1155
  %v1157 = vpop.f32.mrb[0].mxu0
  %v1158 = vpop.f32.mrb[0].mxu0
  %v1159 = vadd.f32 0.0, %v1158
  %v1160 = vpop.f32.mrb[0].mxu0
  %1161 = vmatprep.mubr.bf16.mxu0 0
  %1162 = vmatmul.mubr.bf16.gmra.mrb[0].mxu0 %v692
  %v1163 = vpop.f32.mrb[0].mxu0
  %v1164 = vadd.f32 0.0, %v1163
  %v1165 = vpop.f32.mrb[0].mxu0
  %v1166 = vpop.f32.mrb[0].mxu0
  %v1167 = vadd.f32 0.0, %v1166
  %v1168 = vpop.f32.mrb[0].mxu0
  %1169 = vmatprep.mubr.bf16.mxu0 0
  %1170 = vmatmul.mubr.bf16.gmra.mrb[0].mxu0 %v695
  %v1171 = vpop.f32.mrb[0].mxu0
  %v1172 = vadd.f32 0.0, %v1171
  %v1173 = vpop.f32.mrb[0].mxu0
  %v1174 = vpop.f32.mrb[0].mxu0
  %v1175 = vadd.f32 0.0, %v1174
  %v1176 = vpop.f32.mrb[0].mxu0
  %1177 = vmatprep.mubr.bf16.mxu0 0
  %1178 = vmatmul.mubr.bf16.gmra.mrb[0].mxu0 %v698
  %v1179 = vpop.f32.mrb[0].mxu0
  %v1180 = vadd.f32 0.0, %v1179
  %v1181 = vpop.f32.mrb[0].mxu0
  %v1182 = vpop.f32.mrb[0].mxu0
  %v1183 = vadd.f32 0.0, %v1182
  %v1184 = vpop.f32.mrb[0].mxu0
  %1185 = vmatprep.mubr.bf16.mxu0 0
  %1186 = vmatmul.mubr.bf16.gmra.mrb[0].mxu0 %v701
  %v1187 = vpop.f32.mrb[0].mxu0
  %v1188 = vadd.f32 0.0, %v1187
  %v1189 = vpop.f32.mrb[0].mxu0
  %v1190 = vpop.f32.mrb[0].mxu0
  %v1191 = vadd.f32 0.0, %v1190
  %v1192 = vpop.f32.mrb[0].mxu0
  %1193 = vmatprep.mubr.bf16.mxu0 0
  %1194 = vmatmul.mubr.bf16.gmra.mrb[0].mxu0 %v704
  %v1195 = vpop.f32.mrb[0].mxu0
  %v1196 = vadd.f32 0.0, %v1195
  %v1197 = vpop.f32.mrb[0].mxu0
  %v1198 = vpop.f32.mrb[0].mxu0
  %v1199 = vadd.f32 0.0, %v1198
  %v1200 = vpop.f32.mrb[0].mxu0
  %1201 = vmatprep.mubr.bf16.mxu0 0
  %1202 = vmatmul.mubr.bf16.gmra.mrb[0].mxu0 %v707
  %v1203 = vpop.f32.mrb[0].mxu0
  %v1204 = vadd.f32 0.0, %v1203
  %v1205 = vpop.f32.mrb[0].mxu0
  %v1206 = vpop.f32.mrb[0].mxu0
  %v1207 = vadd.f32 0.0, %v1206
  %v1208 = vpop.f32.mrb[0].mxu0
  %1209 = vmatprep.mubr.bf16.mxu0 0
  %1210 = vmatmul.mubr.bf16.gmra.mrb[0].mxu0 %v710
  %v1211 = vpop.f32.mrb[0].mxu0
  %v1212 = vadd.f32 0.0, %v1211
  %v1213 = vpop.f32.mrb[0].mxu0
  %v1214 = vpop.f32.mrb[0].mxu0
  %v1215 = vadd.f32 0.0, %v1214
  %v1216 = vpop.f32.mrb[0].mxu0
  %1217 = vmatprep.mubr.bf16.mxu0 0
  %1218 = vmatmul.mubr.bf16.gmra.mrb[0].mxu0 %v713
  %v1219 = vpop.f32.mrb[0].mxu0
  %v1220 = vadd.f32 0.0, %v1219
  %v1221 = vpop.f32.mrb[0].mxu0
  %v1222 = vpop.f32.mrb[0].mxu0
  %v1223 = vadd.f32 0.0, %v1222
  %v1224 = vpop.f32.mrb[0].mxu0
  %1225 = vmatprep.mubr.bf16.mxu0 0
  %1226 = vmatmul.mubr.bf16.gmra.mrb[0].mxu0 %v716
  %v1227 = vpop.f32.mrb[0].mxu0
  %v1228 = vadd.f32 0.0, %v1227
  %v1229 = vpop.f32.mrb[0].mxu0
  %v1230 = vpop.f32.mrb[0].mxu0
  %v1231 = vadd.f32 0.0, %v1230
  %v1232 = vpop.f32.mrb[0].mxu0
  %1233 = vmatprep.mubr.bf16.mxu0 0
  %1234 = vmatmul.mubr.bf16.gmra.mrb[0].mxu0 %v719
  %v1235 = vpop.f32.mrb[0].mxu0
  %v1236 = vadd.f32 0.0, %v1235
  %v1237 = vpop.f32.mrb[0].mxu0
  %v1238 = vpop.f32.mrb[0].mxu0
  %v1239 = vadd.f32 0.0, %v1238
  %v1240 = vpop.f32.mrb[0].mxu0
  %1241 = vmatprep.mubr.bf16.mxu0 0
  %1242 = vmatmul.mubr.bf16.gmra.mrb[0].mxu0 %v722
  %v1243 = vpop.f32.mrb[0].mxu0
  %v1244 = vadd.f32 0.0, %v1243
  %v1245 = vpop.f32.mrb[0].mxu0
  %v1246 = vpop.f32.mrb[0].mxu0
  %v1247 = vadd.f32 0.0, %v1246
  %v1248 = vpop.f32.mrb[0].mxu0
  %1249 = vmatprep.mubr.bf16.mxu0 0
  %1250 = vmatmul.mubr.bf16.gmra.mrb[0].mxu0 %v725
  %v1251 = vpop.f32.mrb[0].mxu0
  %v1252 = vadd.f32 0.0, %v1251
  %v1253 = vpop.f32.mrb[0].mxu0
  %v1254 = vpop.f32.mrb[0].mxu0
  %v1255 = vadd.f32 0.0, %v1254
  %v1256 = vpop.f32.mrb[0].mxu0
  %1257 = vmatprep.mubr.bf16.mxu0 0
  %1258 = vmatmul.mubr.bf16.gmra.mrb[0].mxu0 %v728
  %v1259 = vpop.f32.mrb[0].mxu0
  %v1260 = vadd.f32 0.0, %v1259
  %v1261 = vpop.f32.mrb[0].mxu0
  %v1262 = vpop.f32.mrb[0].mxu0
  %v1263 = vadd.f32 0.0, %v1262
  %v1264 = vpop.f32.mrb[0].mxu0
  %1265 = vmatprep.mubr.bf16.mxu0 0
  %1266 = vmatmul.mubr.bf16.gmra.mrb[0].mxu0 %v731
  %v1267 = vpop.f32.mrb[0].mxu0
  %v1268 = vadd.f32 0.0, %v1267
  %v1269 = vpop.f32.mrb[0].mxu0
  %v1270 = vpop.f32.mrb[0].mxu0
  %v1271 = vadd.f32 0.0, %v1270
  %v1272 = vpop.f32.mrb[0].mxu0
  %1273 = vmatprep.mubr.bf16.mxu0 0
  %1274 = vmatmul.mubr.bf16.gmra.mrb[0].mxu0 %v734
  %v1275 = vpop.f32.mrb[0].mxu0
  %v1276 = vadd.f32 0.0, %v1275
  %v1277 = vpop.f32.mrb[0].mxu0
  %v1278 = vpop.f32.mrb[0].mxu0
  %v1279 = vadd.f32 0.0, %v1278
  %v1280 = vpop.f32.mrb[0].mxu0
  %1281 = vmatprep.mubr.bf16.mxu0 0
  %1282 = vmatmul.mubr.bf16.gmra.mrb[0].mxu0 %v737
  %v1283 = vpop.f32.mrb[0].mxu0
  %v1284 = vadd.f32 0.0, %v1283
  %v1285 = vpop.f32.mrb[0].mxu0
  %v1286 = vpop.f32.mrb[0].mxu0
  %v1287 = vadd.f32 0.0, %v1286
  %v1288 = vpop.f32.mrb[0].mxu0
  %1289 = vmatprep.mubr.bf16.mxu0 0
  %1290 = vmatmul.mubr.bf16.gmra.mrb[0].mxu0 %v740
  %v1291 = vpop.f32.mrb[0].mxu0
  %v1292 = vadd.f32 0.0, %v1291
  %v1293 = vpop.f32.mrb[0].mxu0
  %v1294 = vpop.f32.mrb[0].mxu0
  %v1295 = vadd.f32 0.0, %v1294
  %v1296 = vpop.f32.mrb[0].mxu0
  %1297 = vmatprep.mubr.bf16.mxu0 0
  %1298 = vmatmul.mubr.bf16.gmra.mrb[0].mxu0 %v743
  %v1299 = vpop.f32.mrb[0].mxu0
  %v1300 = vadd.f32 0.0, %v1299
  %v1301 = vpop.f32.mrb[0].mxu0
  %v1302 = vpop.f32.mrb[0].mxu0
  %v1303 = vadd.f32 0.0, %v1302
  %v1304 = vpop.f32.mrb[0].mxu0
  %1305 = vmatprep.mubr.bf16.mxu0 0
  %1306 = vmatmul.mubr.bf16.gmra.mrb[0].mxu0 %v746
  %v1307 = vpop.f32.mrb[0].mxu0
  %v1308 = vadd.f32 0.0, %v1307
  %v1309 = vpop.f32.mrb[0].mxu0
  %v1310 = vpop.f32.mrb[0].mxu0
  %v1311 = vadd.f32 0.0, %v1310
  %v1312 = vpop.f32.mrb[0].mxu0
  %1313 = vmatprep.mubr.bf16.mxu0 0
  %1314 = vmatmul.mubr.bf16.gmra.mrb[0].mxu0 %v749
  %v1315 = vpop.f32.mrb[0].mxu0
  %v1316 = vadd.f32 0.0, %v1315
  %v1317 = vpop.f32.mrb[0].mxu0
  %v1318 = vpop.f32.mrb[0].mxu0
  %v1319 = vadd.f32 0.0, %v1318
  %v1320 = vpop.f32.mrb[0].mxu0
  %1321 = vmatprep.mubr.bf16.mxu0 0
  %1322 = vmatmul.mubr.bf16.gmra.mrb[0].mxu0 %v752
  %v1323 = vpop.f32.mrb[0].mxu0
  %v1324 = vadd.f32 0.0, %v1323
  %v1325 = vpop.f32.mrb[0].mxu0
  %v1326 = vpop.f32.mrb[0].mxu0
  %v1327 = vadd.f32 0.0, %v1326
  %v1328 = vpop.f32.mrb[0].mxu0
  %1329 = vmatprep.mubr.bf16.mxu0 0
  %1330 = vmatmul.mubr.bf16.gmra.mrb[0].mxu0 %v755
  %v1331 = vpop.f32.mrb[0].mxu0
  %v1332 = vadd.f32 0.0, %v1331
  %v1333 = vpop.f32.mrb[0].mxu0
  %v1334 = vpop.f32.mrb[0].mxu0
  %v1335 = vadd.f32 0.0, %v1334
  %v1336 = vpop.f32.mrb[0].mxu0
  %1337 = vmatprep.mubr.bf16.mxu0 0
  %1338 = vmatmul.mubr.bf16.gmra.mrb[0].mxu0 %v758
  %v1339 = vpop.f32.mrb[0].mxu0
  %v1340 = vadd.f32 0.0, %v1339
  %v1341 = vpop.f32.mrb[0].mxu0
  %v1342 = vpop.f32.mrb[0].mxu0
  %v1343 = vadd.f32 0.0, %v1342
  %v1344 = vpop.f32.mrb[0].mxu0
  %1345 = vmatprep.mubr.bf16.mxu0 0
  %1346 = vmatmul.mubr.bf16.gmra.mrb[0].mxu0 %v761
  %v1347 = vpop.f32.mrb[0].mxu0
  %v1348 = vadd.f32 0.0, %v1347
  %v1349 = vpop.f32.mrb[0].mxu0
  %v1350 = vpop.f32.mrb[0].mxu0
  %v1351 = vadd.f32 0.0, %v1350
  %v1352 = vpop.f32.mrb[0].mxu0
  %1353 = vmatprep.mubr.bf16.mxu0 0
  %1354 = vmatmul.mubr.bf16.gmra.mrb[0].mxu0 %v764
  %v1355 = vpop.f32.mrb[0].mxu0
  %v1356 = vadd.f32 0.0, %v1355
  %v1357 = vpop.f32.mrb[0].mxu0
  %v1358 = vpop.f32.mrb[0].mxu0
  %v1359 = vadd.f32 0.0, %v1358
  %v1360 = vpop.f32.mrb[0].mxu0
  %1361 = vmatprep.mubr.bf16.mxu0 0
  %1362 = vmatmul.mubr.bf16.gmra.mrb[0].mxu0 %v767
  %v1363 = vpop.f32.mrb[0].mxu0
  %v1364 = vadd.f32 0.0, %v1363
  %v1365 = vpop.f32.mrb[0].mxu0
  %v1366 = vpop.f32.mrb[0].mxu0
  %v1367 = vadd.f32 0.0, %v1366
  %v1368 = vpop.f32.mrb[0].mxu0
  %1369 = vmatprep.mubr.bf16.mxu0 0
  %1370 = vmatmul.mubr.bf16.gmra.mrb[0].mxu0 %v770
  %v1371 = vpop.f32.mrb[0].mxu0
  %v1372 = vadd.f32 0.0, %v1371
  %v1373 = vpop.f32.mrb[0].mxu0
  %v1374 = vpop.f32.mrb[0].mxu0
  %v1375 = vadd.f32 0.0, %v1374
  %v1376 = vpop.f32.mrb[0].mxu0
  %1377 = vmatprep.mubr.bf16.mxu0 0
  %1378 = vmatmul.mubr.bf16.gmra.mrb[0].mxu0 %v773
  %v1379 = vpop.f32.mrb[0].mxu0
  %v1380 = vadd.f32 0.0, %v1379
  %v1381 = vpop.f32.mrb[0].mxu0
  %v1382 = vpop.f32.mrb[0].mxu0
  %v1383 = vadd.f32 0.0, %v1382
  %v1384 = vpop.f32.mrb[0].mxu0
  %1385 = vmatprep.mubr.bf16.mxu0 0
  %1386 = vmatmul.mubr.bf16.gmra.mrb[0].mxu0 %v776
  %v1387 = vpop.f32.mrb[0].mxu0
  %v1388 = vadd.f32 0.0, %v1387
  %v1389 = vpop.f32.mrb[0].mxu0
  %v1390 = vpop.f32.mrb[0].mxu0
  %v1391 = vadd.f32 0.0, %v1390
  %v1392 = vpop.f32.mrb[0].mxu0
  %1393 = vdwg.mxu0
  %v1394 = vld [vmem:[%s2] sm:$0x1]
  %v1396 = vlaneseq
  %v1397 = vshrl.u32 %v1396, 7
  %v1398 = vsub.s32 0, %v1397
  %v1399 = vrot.slane %v1394, %v1398
  %v1401 = vmul.f32 %v820, %v1399
  %v1402 = vmul.f32 %v823, %v1399
  %v1403 = vmul.f32 %v828, %v1399
  %v1404 = vmul.f32 %v831, %v1399
  %v1405 = vmul.f32 %v836, %v1399
  %v1406 = vmul.f32 %v839, %v1399
  %v1407 = vmul.f32 %v844, %v1399
  %v1408 = vmul.f32 %v847, %v1399
  %v1409 = vmul.f32 %v852, %v1399
  %v1410 = vmul.f32 %v855, %v1399
  %v1411 = vmul.f32 %v860, %v1399
  %v1412 = vmul.f32 %v863, %v1399
  %v1413 = vmul.f32 %v868, %v1399
  %v1414 = vmul.f32 %v871, %v1399
  %v1415 = vmul.f32 %v876, %v1399
  %v1416 = vmul.f32 %v879, %v1399
  %v1417 = vmul.f32 %v884, %v1399
  %v1418 = vmul.f32 %v887, %v1399
  %v1419 = vmul.f32 %v892, %v1399
  %v1420 = vmul.f32 %v895, %v1399
  %v1421 = vmul.f32 %v900, %v1399
  %v1422 = vmul.f32 %v903, %v1399
  %v1423 = vmul.f32 %v908, %v1399
  %v1424 = vmul.f32 %v911, %v1399
  %v1425 = vmul.f32 %v916, %v1399
  %v1426 = vmul.f32 %v919, %v1399
  %v1427 = vmul.f32 %v924, %v1399
  %v1428 = vmul.f32 %v927, %v1399
  %v1429 = vmul.f32 %v932, %v1399
  %v1430 = vmul.f32 %v935, %v1399
  %v1431 = vmul.f32 %v940, %v1399
  %v1432 = vmul.f32 %v943, %v1399
  %v1433 = vmul.f32 %v948, %v1399
  %v1434 = vmul.f32 %v951, %v1399
  %v1435 = vmul.f32 %v956, %v1399
  %v1436 = vmul.f32 %v959, %v1399
  %v1437 = vmul.f32 %v964, %v1399
  %v1438 = vmul.f32 %v967, %v1399
  %v1439 = vmul.f32 %v972, %v1399
  %v1440 = vmul.f32 %v975, %v1399
  %v1441 = vmul.f32 %v980, %v1399
  %v1442 = vmul.f32 %v983, %v1399
  %v1443 = vmul.f32 %v988, %v1399
  %v1444 = vmul.f32 %v991, %v1399
  %v1445 = vmul.f32 %v996, %v1399
  %v1446 = vmul.f32 %v999, %v1399
  %v1447 = vmul.f32 %v1004, %v1399
  %v1448 = vmul.f32 %v1007, %v1399
  %v1449 = vmul.f32 %v1012, %v1399
  %v1450 = vmul.f32 %v1015, %v1399
  %v1451 = vmul.f32 %v1020, %v1399
  %v1452 = vmul.f32 %v1023, %v1399
  %v1453 = vmul.f32 %v1028, %v1399
  %v1454 = vmul.f32 %v1031, %v1399
  %v1455 = vmul.f32 %v1036, %v1399
  %v1456 = vmul.f32 %v1039, %v1399
  %v1457 = vmul.f32 %v1044, %v1399
  %v1458 = vmul.f32 %v1047, %v1399
  %v1459 = vmul.f32 %v1052, %v1399
  %v1460 = vmul.f32 %v1055, %v1399
  %v1461 = vmul.f32 %v1060, %v1399
  %v1462 = vmul.f32 %v1063, %v1399
  %v1463 = vmul.f32 %v1068, %v1399
  %v1464 = vmul.f32 %v1071, %v1399
  %v1465 = vmul.f32 %v1076, %v1399
  %v1466 = vmul.f32 %v1079, %v1399
  %v1467 = vmul.f32 %v1084, %v1399
  %v1468 = vmul.f32 %v1087, %v1399
  %v1469 = vmul.f32 %v1092, %v1399
  %v1470 = vmul.f32 %v1095, %v1399
  %v1471 = vmul.f32 %v1100, %v1399
  %v1472 = vmul.f32 %v1103, %v1399
  %v1473 = vmul.f32 %v1108, %v1399
  %v1474 = vmul.f32 %v1111, %v1399
  %v1475 = vmul.f32 %v1116, %v1399
  %v1476 = vmul.f32 %v1119, %v1399
  %v1477 = vmul.f32 %v1124, %v1399
  %v1478 = vmul.f32 %v1127, %v1399
  %v1479 = vmul.f32 %v1132, %v1399
  %v1480 = vmul.f32 %v1135, %v1399
  %v1481 = vmul.f32 %v1140, %v1399
  %v1482 = vmul.f32 %v1143, %v1399
  %v1483 = vmul.f32 %v1148, %v1399
  %v1484 = vmul.f32 %v1151, %v1399
  %v1485 = vmul.f32 %v1156, %v1399
  %v1486 = vmul.f32 %v1159, %v1399
  %v1487 = vmul.f32 %v1164, %v1399
  %v1488 = vmul.f32 %v1167, %v1399
  %v1489 = vmul.f32 %v1172, %v1399
  %v1490 = vmul.f32 %v1175, %v1399
  %v1491 = vmul.f32 %v1180, %v1399
  %v1492 = vmul.f32 %v1183, %v1399
  %v1493 = vmul.f32 %v1188, %v1399
  %v1494 = vmul.f32 %v1191, %v1399
  %v1495 = vmul.f32 %v1196, %v1399
  %v1496 = vmul.f32 %v1199, %v1399
  %v1497 = vmul.f32 %v1204, %v1399
  %v1498 = vmul.f32 %v1207, %v1399
  %v1499 = vmul.f32 %v1212, %v1399
  %v1500 = vmul.f32 %v1215, %v1399
  %v1501 = vmul.f32 %v1220, %v1399
  %v1502 = vmul.f32 %v1223, %v1399
  %v1503 = vmul.f32 %v1228, %v1399
  %v1504 = vmul.f32 %v1231, %v1399
  %v1505 = vmul.f32 %v1236, %v1399
  %v1506 = vmul.f32 %v1239, %v1399
  %v1507 = vmul.f32 %v1244, %v1399
  %v1508 = vmul.f32 %v1247, %v1399
  %v1509 = vmul.f32 %v1252, %v1399
  %v1510 = vmul.f32 %v1255, %v1399
  %v1511 = vmul.f32 %v1260, %v1399
  %v1512 = vmul.f32 %v1263, %v1399
  %v1513 = vmul.f32 %v1268, %v1399
  %v1514 = vmul.f32 %v1271, %v1399
  %v1515 = vmul.f32 %v1276, %v1399
  %v1516 = vmul.f32 %v1279, %v1399
  %v1517 = vmul.f32 %v1284, %v1399
  %v1518 = vmul.f32 %v1287, %v1399
  %v1519 = vmul.f32 %v1292, %v1399
  %v1520 = vmul.f32 %v1295, %v1399
  %v1521 = vmul.f32 %v1300, %v1399
  %v1522 = vmul.f32 %v1303, %v1399
  %v1523 = vmul.f32 %v1308, %v1399
  %v1524 = vmul.f32 %v1311, %v1399
  %v1525 = vmul.f32 %v1316, %v1399
  %v1526 = vmul.f32 %v1319, %v1399
  %v1527 = vmul.f32 %v1324, %v1399
  %v1528 = vmul.f32 %v1327, %v1399
  %v1529 = vmul.f32 %v1332, %v1399
  %v1530 = vmul.f32 %v1335, %v1399
  %v1531 = vmul.f32 %v1340, %v1399
  %v1532 = vmul.f32 %v1343, %v1399
  %v1533 = vmul.f32 %v1348, %v1399
  %v1534 = vmul.f32 %v1351, %v1399
  %v1535 = vmul.f32 %v1356, %v1399
  %v1536 = vmul.f32 %v1359, %v1399
  %v1537 = vmul.f32 %v1364, %v1399
  %v1538 = vmul.f32 %v1367, %v1399
  %v1539 = vmul.f32 %v1372, %v1399
  %v1540 = vmul.f32 %v1375, %v1399
  %v1541 = vmul.f32 %v1380, %v1399
  %v1542 = vmul.f32 %v1383, %v1399
  %v1543 = vmul.f32 %v1388, %v1399
  %v1544 = vmul.f32 %v1391, %v1399
  %v1545 = vld [vmem:[%s3] sm:$0x1]
  %v1547 = vlaneseq
  %v1548 = vshrl.u32 %v1547, 7
  %v1549 = vsub.s32 0, %v1548
  %v1550 = vrot.slane %v1545, %v1549
  %v1552 = vadd.f32 %v1401, %v1550
  %v1553 = vadd.f32 %v1402, %v1550
  %v1554 = vadd.f32 %v1403, %v1550
  %v1555 = vadd.f32 %v1404, %v1550
  %v1556 = vadd.f32 %v1405, %v1550
  %v1557 = vadd.f32 %v1406, %v1550
  %v1558 = vadd.f32 %v1407, %v1550
  %v1559 = vadd.f32 %v1408, %v1550
  %v1560 = vadd.f32 %v1409, %v1550
  %v1561 = vadd.f32 %v1410, %v1550
  %v1562 = vadd.f32 %v1411, %v1550
  %v1563 = vadd.f32 %v1412, %v1550
  %v1564 = vadd.f32 %v1413, %v1550
  %v1565 = vadd.f32 %v1414, %v1550
  %v1566 = vadd.f32 %v1415, %v1550
  %v1567 = vadd.f32 %v1416, %v1550
  %v1568 = vadd.f32 %v1417, %v1550
  %v1569 = vadd.f32 %v1418, %v1550
  %v1570 = vadd.f32 %v1419, %v1550
  %v1571 = vadd.f32 %v1420, %v1550
  %v1572 = vadd.f32 %v1421, %v1550
  %v1573 = vadd.f32 %v1422, %v1550
  %v1574 = vadd.f32 %v1423, %v1550
  %v1575 = vadd.f32 %v1424, %v1550
  %v1576 = vadd.f32 %v1425, %v1550
  %v1577 = vadd.f32 %v1426, %v1550
  %v1578 = vadd.f32 %v1427, %v1550
  %v1579 = vadd.f32 %v1428, %v1550
  %v1580 = vadd.f32 %v1429, %v1550
  %v1581 = vadd.f32 %v1430, %v1550
  %v1582 = vadd.f32 %v1431, %v1550
  %v1583 = vadd.f32 %v1432, %v1550
  %v1584 = vadd.f32 %v1433, %v1550
  %v1585 = vadd.f32 %v1434, %v1550
  %v1586 = vadd.f32 %v1435, %v1550
  %v1587 = vadd.f32 %v1436, %v1550
  %v1588 = vadd.f32 %v1437, %v1550
  %v1589 = vadd.f32 %v1438, %v1550
  %v1590 = vadd.f32 %v1439, %v1550
  %v1591 = vadd.f32 %v1440, %v1550
  %v1592 = vadd.f32 %v1441, %v1550
  %v1593 = vadd.f32 %v1442, %v1550
  %v1594 = vadd.f32 %v1443, %v1550
  %v1595 = vadd.f32 %v1444, %v1550
  %v1596 = vadd.f32 %v1445, %v1550
  %v1597 = vadd.f32 %v1446, %v1550
  %v1598 = vadd.f32 %v1447, %v1550
  %v1599 = vadd.f32 %v1448, %v1550
  %v1600 = vadd.f32 %v1449, %v1550
  %v1601 = vadd.f32 %v1450, %v1550
  %v1602 = vadd.f32 %v1451, %v1550
  %v1603 = vadd.f32 %v1452, %v1550
  %v1604 = vadd.f32 %v1453, %v1550
  %v1605 = vadd.f32 %v1454, %v1550
  %v1606 = vadd.f32 %v1455, %v1550
  %v1607 = vadd.f32 %v1456, %v1550
  %v1608 = vadd.f32 %v1457, %v1550
  %v1609 = vadd.f32 %v1458, %v1550
  %v1610 = vadd.f32 %v1459, %v1550
  %v1611 = vadd.f32 %v1460, %v1550
  %v1612 = vadd.f32 %v1461, %v1550
  %v1613 = vadd.f32 %v1462, %v1550
  %v1614 = vadd.f32 %v1463, %v1550
  %v1615 = vadd.f32 %v1464, %v1550
  %v1616 = vadd.f32 %v1465, %v1550
  %v1617 = vadd.f32 %v1466, %v1550
  %v1618 = vadd.f32 %v1467, %v1550
  %v1619 = vadd.f32 %v1468, %v1550
  %v1620 = vadd.f32 %v1469, %v1550
  %v1621 = vadd.f32 %v1470, %v1550
  %v1622 = vadd.f32 %v1471, %v1550
  %v1623 = vadd.f32 %v1472, %v1550
  %v1624 = vadd.f32 %v1473, %v1550
  %v1625 = vadd.f32 %v1474, %v1550
  %v1626 = vadd.f32 %v1475, %v1550
  %v1627 = vadd.f32 %v1476, %v1550
  %v1628 = vadd.f32 %v1477, %v1550
  %v1629 = vadd.f32 %v1478, %v1550
  %v1630 = vadd.f32 %v1479, %v1550
  %v1631 = vadd.f32 %v1480, %v1550
  %v1632 = vadd.f32 %v1481, %v1550
  %v1633 = vadd.f32 %v1482, %v1550
  %v1634 = vadd.f32 %v1483, %v1550
  %v1635 = vadd.f32 %v1484, %v1550
  %v1636 = vadd.f32 %v1485, %v1550
  %v1637 = vadd.f32 %v1486, %v1550
  %v1638 = vadd.f32 %v1487, %v1550
  %v1639 = vadd.f32 %v1488, %v1550
  %v1640 = vadd.f32 %v1489, %v1550
  %v1641 = vadd.f32 %v1490, %v1550
  %v1642 = vadd.f32 %v1491, %v1550
  %v1643 = vadd.f32 %v1492, %v1550
  %v1644 = vadd.f32 %v1493, %v1550
  %v1645 = vadd.f32 %v1494, %v1550
  %v1646 = vadd.f32 %v1495, %v1550
  %v1647 = vadd.f32 %v1496, %v1550
  %v1648 = vadd.f32 %v1497, %v1550
  %v1649 = vadd.f32 %v1498, %v1550
  %v1650 = vadd.f32 %v1499, %v1550
  %v1651 = vadd.f32 %v1500, %v1550
  %v1652 = vadd.f32 %v1501, %v1550
  %v1653 = vadd.f32 %v1502, %v1550
  %v1654 = vadd.f32 %v1503, %v1550
  %v1655 = vadd.f32 %v1504, %v1550
  %v1656 = vadd.f32 %v1505, %v1550
  %v1657 = vadd.f32 %v1506, %v1550
  %v1658 = vadd.f32 %v1507, %v1550
  %v1659 = vadd.f32 %v1508, %v1550
  %v1660 = vadd.f32 %v1509, %v1550
  %v1661 = vadd.f32 %v1510, %v1550
  %v1662 = vadd.f32 %v1511, %v1550
  %v1663 = vadd.f32 %v1512, %v1550
  %v1664 = vadd.f32 %v1513, %v1550
  %v1665 = vadd.f32 %v1514, %v1550
  %v1666 = vadd.f32 %v1515, %v1550
  %v1667 = vadd.f32 %v1516, %v1550
  %v1668 = vadd.f32 %v1517, %v1550
  %v1669 = vadd.f32 %v1518, %v1550
  %v1670 = vadd.f32 %v1519, %v1550
  %v1671 = vadd.f32 %v1520, %v1550
  %v1672 = vadd.f32 %v1521, %v1550
  %v1673 = vadd.f32 %v1522, %v1550
  %v1674 = vadd.f32 %v1523, %v1550
  %v1675 = vadd.f32 %v1524, %v1550
  %v1676 = vadd.f32 %v1525, %v1550
  %v1677 = vadd.f32 %v1526, %v1550
  %v1678 = vadd.f32 %v1527, %v1550
  %v1679 = vadd.f32 %v1528, %v1550
  %v1680 = vadd.f32 %v1529, %v1550
  %v1681 = vadd.f32 %v1530, %v1550
  %v1682 = vadd.f32 %v1531, %v1550
  %v1683 = vadd.f32 %v1532, %v1550
  %v1684 = vadd.f32 %v1533, %v1550
  %v1685 = vadd.f32 %v1534, %v1550
  %v1686 = vadd.f32 %v1535, %v1550
  %v1687 = vadd.f32 %v1536, %v1550
  %v1688 = vadd.f32 %v1537, %v1550
  %v1689 = vadd.f32 %v1538, %v1550
  %v1690 = vadd.f32 %v1539, %v1550
  %v1691 = vadd.f32 %v1540, %v1550
  %v1692 = vadd.f32 %v1541, %v1550
  %v1693 = vadd.f32 %v1542, %v1550
  %v1694 = vadd.f32 %v1543, %v1550
  %v1695 = vadd.f32 %v1544, %v1550
  %v1696 = vmax.f32 %v1552, %v1588
  %v1697 = vmax.f32 %v1553, %v1589
  %v1698 = vmax.f32 %v1554, %v1590
  %v1699 = vmax.f32 %v1555, %v1591
  %v1700 = vmax.f32 %v1556, %v1592
  %v1701 = vmax.f32 %v1557, %v1593
  %v1702 = vmax.f32 %v1558, %v1594
  %v1703 = vmax.f32 %v1559, %v1595
  %v1704 = vmax.f32 %v1560, %v1596
  %v1705 = vmax.f32 %v1561, %v1597
  %v1706 = vmax.f32 %v1562, %v1598
  %v1707 = vmax.f32 %v1563, %v1599
  %v1708 = vmax.f32 %v1564, %v1600
  %v1709 = vmax.f32 %v1565, %v1601
  %v1710 = vmax.f32 %v1566, %v1602
  %v1711 = vmax.f32 %v1567, %v1603
  %v1712 = vmax.f32 %v1568, %v1604
  %v1713 = vmax.f32 %v1569, %v1605
  %v1714 = vmax.f32 %v1570, %v1606
  %v1715 = vmax.f32 %v1571, %v1607
  %v1716 = vmax.f32 %v1572, %v1608
  %v1717 = vmax.f32 %v1573, %v1609
  %v1718 = vmax.f32 %v1574, %v1610
  %v1719 = vmax.f32 %v1575, %v1611
  %v1720 = vmax.f32 %v1576, %v1612
  %v1721 = vmax.f32 %v1577, %v1613
  %v1722 = vmax.f32 %v1578, %v1614
  %v1723 = vmax.f32 %v1579, %v1615
  %v1724 = vmax.f32 %v1580, %v1616
  %v1725 = vmax.f32 %v1581, %v1617
  %v1726 = vmax.f32 %v1582, %v1618
  %v1727 = vmax.f32 %v1583, %v1619
  %v1728 = vmax.f32 %v1584, %v1620
  %v1729 = vmax.f32 %v1585, %v1621
  %v1730 = vmax.f32 %v1586, %v1622
  %v1731 = vmax.f32 %v1587, %v1623
  %v1732 = vmax.f32 %v1696, %v1624
  %v1733 = vmax.f32 %v1697, %v1625
  %v1734 = vmax.f32 %v1698, %v1626
  %v1735 = vmax.f32 %v1699, %v1627
  %v1736 = vmax.f32 %v1700, %v1628
  %v1737 = vmax.f32 %v1701, %v1629
  %v1738 = vmax.f32 %v1702, %v1630
  %v1739 = vmax.f32 %v1703, %v1631
  %v1740 = vmax.f32 %v1704, %v1632
  %v1741 = vmax.f32 %v1705, %v1633
  %v1742 = vmax.f32 %v1706, %v1634
  %v1743 = vmax.f32 %v1707, %v1635
  %v1744 = vmax.f32 %v1708, %v1636
  %v1745 = vmax.f32 %v1709, %v1637
  %v1746 = vmax.f32 %v1710, %v1638
  %v1747 = vmax.f32 %v1711, %v1639
  %v1748 = vmax.f32 %v1712, %v1640
  %v1749 = vmax.f32 %v1713, %v1641
  %v1750 = vmax.f32 %v1714, %v1642
  %v1751 = vmax.f32 %v1715, %v1643
  %v1752 = vmax.f32 %v1716, %v1644
  %v1753 = vmax.f32 %v1717, %v1645
  %v1754 = vmax.f32 %v1718, %v1646
  %v1755 = vmax.f32 %v1719, %v1647
  %v1756 = vmax.f32 %v1720, %v1648
  %v1757 = vmax.f32 %v1721, %v1649
  %v1758 = vmax.f32 %v1722, %v1650
  %v1759 = vmax.f32 %v1723, %v1651
  %v1760 = vmax.f32 %v1724, %v1652
  %v1761 = vmax.f32 %v1725, %v1653
  %v1762 = vmax.f32 %v1726, %v1654
  %v1763 = vmax.f32 %v1727, %v1655
  %v1764 = vmax.f32 %v1728, %v1656
  %v1765 = vmax.f32 %v1729, %v1657
  %v1766 = vmax.f32 %v1730, %v1658
  %v1767 = vmax.f32 %v1731, %v1659
  %v1768 = vmax.f32 %v1732, %v1660
  %v1769 = vmax.f32 %v1733, %v1661
  %v1770 = vmax.f32 %v1734, %v1662
  %v1771 = vmax.f32 %v1735, %v1663
  %v1772 = vmax.f32 %v1736, %v1664
  %v1773 = vmax.f32 %v1737, %v1665
  %v1774 = vmax.f32 %v1738, %v1666
  %v1775 = vmax.f32 %v1739, %v1667
  %v1776 = vmax.f32 %v1740, %v1668
  %v1777 = vmax.f32 %v1741, %v1669
  %v1778 = vmax.f32 %v1742, %v1670
  %v1779 = vmax.f32 %v1743, %v1671
  %v1780 = vmax.f32 %v1744, %v1672
  %v1781 = vmax.f32 %v1745, %v1673
  %v1782 = vmax.f32 %v1746, %v1674
  %v1783 = vmax.f32 %v1747, %v1675
  %v1784 = vmax.f32 %v1748, %v1676
  %v1785 = vmax.f32 %v1749, %v1677
  %v1786 = vmax.f32 %v1750, %v1678
  %v1787 = vmax.f32 %v1751, %v1679
  %v1788 = vmax.f32 %v1752, %v1680
  %v1789 = vmax.f32 %v1753, %v1681
  %v1790 = vmax.f32 %v1754, %v1682
  %v1791 = vmax.f32 %v1755, %v1683
  %v1792 = vmax.f32 %v1756, %v1684
  %v1793 = vmax.f32 %v1757, %v1685
  %v1794 = vmax.f32 %v1758, %v1686
  %v1795 = vmax.f32 %v1759, %v1687
  %v1796 = vmax.f32 %v1760, %v1688
  %v1797 = vmax.f32 %v1761, %v1689
  %v1798 = vmax.f32 %v1762, %v1690
  %v1799 = vmax.f32 %v1763, %v1691
  %v1800 = vmax.f32 %v1764, %v1692
  %v1801 = vmax.f32 %v1765, %v1693
  %v1802 = vmax.f32 %v1766, %v1694
  %v1803 = vmax.f32 %v1767, %v1695
  %v1804 = vmax.f32 %v1768, 0.0
  %v1805 = vmax.f32 %v1769, 0.0
  %v1806 = vmax.f32 %v1770, 0.0
  %v1807 = vmax.f32 %v1771, 0.0
  %v1808 = vmax.f32 %v1772, 0.0
  %v1809 = vmax.f32 %v1773, 0.0
  %v1810 = vmax.f32 %v1774, 0.0
  %v1811 = vmax.f32 %v1775, 0.0
  %v1812 = vmax.f32 %v1776, 0.0
  %v1813 = vmax.f32 %v1777, 0.0
  %v1814 = vmax.f32 %v1778, 0.0
  %v1815 = vmax.f32 %v1779, 0.0
  %v1816 = vmax.f32 %v1780, 0.0
  %v1817 = vmax.f32 %v1781, 0.0
  %v1818 = vmax.f32 %v1782, 0.0
  %v1819 = vmax.f32 %v1783, 0.0
  %v1820 = vmax.f32 %v1784, 0.0
  %v1821 = vmax.f32 %v1785, 0.0
  %v1822 = vmax.f32 %v1786, 0.0
  %v1823 = vmax.f32 %v1787, 0.0
  %v1824 = vmax.f32 %v1788, 0.0
  %v1825 = vmax.f32 %v1789, 0.0
  %v1826 = vmax.f32 %v1790, 0.0
  %v1827 = vmax.f32 %v1791, 0.0
  %v1828 = vmax.f32 %v1792, 0.0
  %v1829 = vmax.f32 %v1793, 0.0
  %v1830 = vmax.f32 %v1794, 0.0
  %v1831 = vmax.f32 %v1795, 0.0
  %v1832 = vmax.f32 %v1796, 0.0
  %v1833 = vmax.f32 %v1797, 0.0
  %v1834 = vmax.f32 %v1798, 0.0
  %v1835 = vmax.f32 %v1799, 0.0
  %v1836 = vmax.f32 %v1800, 0.0
  %v1837 = vmax.f32 %v1801, 0.0
  %v1838 = vmax.f32 %v1802, 0.0
  %v1839 = vmax.f32 %v1803, 0.0
  %v1840 = vpack.c.bf16 %v1805, %v1804
  %v1841 = vpack.c.bf16 %v1807, %v1806
  %v1842 = vpack.c.bf16 %v1809, %v1808
  %v1843 = vpack.c.bf16 %v1811, %v1810
  %v1844 = vpack.c.bf16 %v1813, %v1812
  %v1845 = vpack.c.bf16 %v1815, %v1814
  %v1846 = vpack.c.bf16 %v1817, %v1816
  %v1847 = vpack.c.bf16 %v1819, %v1818
  %v1848 = vpack.c.bf16 %v1821, %v1820
  %v1849 = vpack.c.bf16 %v1823, %v1822
  %v1850 = vpack.c.bf16 %v1825, %v1824
  %v1851 = vpack.c.bf16 %v1827, %v1826
  %v1852 = vpack.c.bf16 %v1829, %v1828
  %v1853 = vpack.c.bf16 %v1831, %v1830
  %v1854 = vpack.c.bf16 %v1833, %v1832
  %v1855 = vpack.c.bf16 %v1835, %v1834
  %v1856 = vpack.c.bf16 %v1837, %v1836
  %v1857 = vpack.c.bf16 %v1839, %v1838
  %v1876 = vunpack.c.l.b16 %v1840
  %v1877 = vunpack.c.h.b16 %v1840
  %v1878 = vunpack.c.l.b16 %v1841
  %v1879 = vunpack.c.h.b16 %v1841
  %v1880 = vunpack.c.l.b16 %v1842
  %v1881 = vunpack.c.h.b16 %v1842
  %v1882 = vunpack.c.l.b16 %v1843
  %v1883 = vunpack.c.h.b16 %v1843
  %v1884 = vunpack.c.l.b16 %v1844
  %v1885 = vunpack.c.h.b16 %v1844
  %v1886 = vunpack.c.l.b16 %v1845
  %v1887 = vunpack.c.h.b16 %v1845
  %v1888 = vunpack.c.l.b16 %v1846
  %v1889 = vunpack.c.h.b16 %v1846
  %v1890 = vunpack.c.l.b16 %v1847
  %v1891 = vunpack.c.h.b16 %v1847
  %v1892 = vunpack.c.l.b16 %v1848
  %v1893 = vunpack.c.h.b16 %v1848
  %v1894 = vunpack.c.l.b16 %v1849
  %v1895 = vunpack.c.h.b16 %v1849
  %v1896 = vunpack.c.l.b16 %v1850
  %v1897 = vunpack.c.h.b16 %v1850
  %v1898 = vunpack.c.l.b16 %v1851
  %v1899 = vunpack.c.h.b16 %v1851
  %v1900 = vunpack.c.l.b16 %v1852
  %v1901 = vunpack.c.h.b16 %v1852
  %v1902 = vunpack.c.l.b16 %v1853
  %v1903 = vunpack.c.h.b16 %v1853
  %v1904 = vunpack.c.l.b16 %v1854
  %v1905 = vunpack.c.h.b16 %v1854
  %v1906 = vunpack.c.l.b16 %v1855
  %v1907 = vunpack.c.h.b16 %v1855
  %v1908 = vunpack.c.l.b16 %v1856
  %v1909 = vunpack.c.h.b16 %v1856
  %v1910 = vunpack.c.l.b16 %v1857
  %v1911 = vunpack.c.h.b16 %v1857
  %v1912 = vpack.c.b16 %v1876, %v1876
  %v1913 = vpack.c.b16 %v1877, %v1877
  %v1914 = vpack.c.b16 %v1878, %v1878
  %v1915 = vpack.c.b16 %v1879, %v1879
  %v1916 = vpack.c.b16 %v1880, %v1880
  %v1917 = vpack.c.b16 %v1881, %v1881
  %v1918 = vpack.c.b16 %v1882, %v1882
  %v1919 = vpack.c.b16 %v1883, %v1883
  %v1920 = vpack.c.b16 %v1884, %v1884
  %v1921 = vpack.c.b16 %v1885, %v1885
  %v1922 = vpack.c.b16 %v1886, %v1886
  %v1923 = vpack.c.b16 %v1887, %v1887
  %v1924 = vpack.c.b16 %v1888, %v1888
  %v1925 = vpack.c.b16 %v1889, %v1889
  %v1926 = vpack.c.b16 %v1890, %v1890
  %v1927 = vpack.c.b16 %v1891, %v1891
  %v1928 = vpack.c.b16 %v1892, %v1892
  %v1929 = vpack.c.b16 %v1893, %v1893
  %v1930 = vpack.c.b16 %v1894, %v1894
  %v1931 = vpack.c.b16 %v1895, %v1895
  %v1932 = vpack.c.b16 %v1896, %v1896
  %v1933 = vpack.c.b16 %v1897, %v1897
  %v1934 = vpack.c.b16 %v1898, %v1898
  %v1935 = vpack.c.b16 %v1899, %v1899
  %v1936 = vpack.c.b16 %v1900, %v1900
  %v1937 = vpack.c.b16 %v1901, %v1901
  %v1938 = vpack.c.b16 %v1902, %v1902
  %v1939 = vpack.c.b16 %v1903, %v1903
  %v1940 = vpack.c.b16 %v1904, %v1904
  %v1941 = vpack.c.b16 %v1905, %v1905
  %v1942 = vpack.c.b16 %v1906, %v1906
  %v1943 = vpack.c.b16 %v1907, %v1907
  %v1944 = vpack.c.b16 %v1908, %v1908
  %v1945 = vpack.c.b16 %v1909, %v1909
  %v1946 = vpack.c.b16 %v1910, %v1910
  %v1947 = vpack.c.b16 %v1911, %v1911
  %vm1984 = vcmask 519168
  %1985 = vst.msk [vmem:[%s4] sm:$0xf] %vm1984, %v1912
  %1986 = vst.msk [vmem:[%s4 + $0x4] sm:$0xf] %vm1984, %v1913
  %1987 = vst.msk [vmem:[%s4 + $0x8] sm:$0xf] %vm1984, %v1914
  %1988 = vst.msk [vmem:[%s4 + $0xc] sm:$0xf] %vm1984, %v1915
  %1989 = vst.msk [vmem:[%s4 + $0x10] sm:$0xf] %vm1984, %v1916
  %1990 = vst.msk [vmem:[%s4 + $0x14] sm:$0xf] %vm1984, %v1917
  %1991 = vst.msk [vmem:[%s4 + $0x18] sm:$0xf] %vm1984, %v1918
  %1992 = vst.msk [vmem:[%s4 + $0x1c] sm:$0xf] %vm1984, %v1919
  %1993 = vst.msk [vmem:[%s4 + $0x20] sm:$0xf] %vm1984, %v1920
  %1994 = vst.msk [vmem:[%s4 + $0x24] sm:$0xf] %vm1984, %v1921
  %1995 = vst.msk [vmem:[%s4 + $0x28] sm:$0xf] %vm1984, %v1922
  %1996 = vst.msk [vmem:[%s4 + $0x2c] sm:$0xf] %vm1984, %v1923
  %1997 = vst.msk [vmem:[%s4 + $0x30] sm:$0xf] %vm1984, %v1924
  %1998 = vst.msk [vmem:[%s4 + $0x34] sm:$0xf] %vm1984, %v1925
  %1999 = vst.msk [vmem:[%s4 + $0x38] sm:$0xf] %vm1984, %v1926
  %2000 = vst.msk [vmem:[%s4 + $0x3c] sm:$0xf] %vm1984, %v1927
  %2001 = vst.msk [vmem:[%s4 + $0x40] sm:$0xf] %vm1984, %v1928
  %2002 = vst.msk [vmem:[%s4 + $0x44] sm:$0xf] %vm1984, %v1929
  %2003 = vst.msk [vmem:[%s4 + $0x48] sm:$0xf] %vm1984, %v1930
  %2004 = vst.msk [vmem:[%s4 + $0x4c] sm:$0xf] %vm1984, %v1931
  %2005 = vst.msk [vmem:[%s4 + $0x50] sm:$0xf] %vm1984, %v1932
  %2006 = vst.msk [vmem:[%s4 + $0x54] sm:$0xf] %vm1984, %v1933
  %2007 = vst.msk [vmem:[%s4 + $0x58] sm:$0xf] %vm1984, %v1934
  %2008 = vst.msk [vmem:[%s4 + $0x5c] sm:$0xf] %vm1984, %v1935
  %2009 = vst.msk [vmem:[%s4 + $0x60] sm:$0xf] %vm1984, %v1936
  %2010 = vst.msk [vmem:[%s4 + $0x64] sm:$0xf] %vm1984, %v1937
  %2011 = vst.msk [vmem:[%s4 + $0x68] sm:$0xf] %vm1984, %v1938
  %2012 = vst.msk [vmem:[%s4 + $0x6c] sm:$0xf] %vm1984, %v1939
  %2013 = vst.msk [vmem:[%s4 + $0x70] sm:$0xf] %vm1984, %v1940
  %2014 = vst.msk [vmem:[%s4 + $0x74] sm:$0xf] %vm1984, %v1941
  %2015 = vst.msk [vmem:[%s4 + $0x78] sm:$0xf] %vm1984, %v1942
  %2016 = vst.msk [vmem:[%s4 + $0x7c] sm:$0xf] %vm1984, %v1943
  %2017 = vst.msk [vmem:[%s4 + $0x80] sm:$0xf] %vm1984, %v1944
  %2018 = vst.msk [vmem:[%s4 + $0x84] sm:$0xf] %vm1984, %v1945
  %2019 = vst.msk [vmem:[%s4 + $0x88] sm:$0xf] %vm1984, %v1946
  %2020 = vst.msk [vmem:[%s4 + $0x8c] sm:$0xf] %vm1984, %v1947
  // Predicated region
  $region18: #{cnn_model2_forward.2} parent=0 // pred_check
    _
  $region19: #{cnn_model2_forward.2} parent=0 // pred_check_branch
    %2022 = sbr.rel (0) target = $region21
  $region20: #{cnn_model2_forward.2} parent=0 // pred_region
    _
  $region21: #{cnn_model2_forward.2} parent=0 // pred_fallthru
    _
  // Predicated region
  $region22: #{cnn_model2_forward.2} parent=0 // pred_check
    _
  $region23: #{cnn_model2_forward.2} parent=0 // pred_check_branch
    %2024 = sbr.rel (0) target = $region25
  $region24: #{cnn_model2_forward.2} parent=0 // pred_region
    _
  $region25: #{cnn_model2_forward.2} parent=0 // pred_fallthru
    _

// kernel: cnn_model2_forward.3
$region0: #{cnn_model2_forward.3}
  #allocation0 [shape = 'u32[]', space=smem, size = 0x4, offset = 0x4, fixed_abs, tag = 'smem constant byte address 0x4 - core index']
  #allocation1 [shape = 'u32[144,128]{1,0:T(1,128)}', space=vmem, size = 0x12000, scoped, tag = 'internal scratch']
  %s0 = inlined_call_operand.vmem [shape: bf16[128,1600], index: 0, kind: input, shape index: {}]
  %s1 = inlined_call_operand.vmem [shape: bf16[1600,50], index: 1, kind: input, shape index: {}]
  %s2 = inlined_call_operand.vmem [shape: f32[1,50], index: 2, kind: input, shape index: {}]
  %s3 = inlined_call_operand.vmem [shape: f32[1,50], index: 3, kind: input, shape index: {}]
  %s4 = inlined_call_operand.vmem [shape: bf16[16,50,100], index: 4, kind: input, shape index: {}]
  %s5 = inlined_call_operand.vmem [shape: f32[1,100], index: 5, kind: input, shape index: {}]
  %s6 = inlined_call_operand.vmem [shape: f32[1,100], index: 6, kind: input, shape index: {}]
  %s7 = inlined_call_operand.vmem [shape: bf16[100,100], index: 7, kind: input, shape index: {}]
  %s8 = inlined_call_operand.vmem [shape: f32[1,100], index: 8, kind: input, shape index: {}]
  %s9 = inlined_call_operand.vmem [shape: f32[1,100], index: 9, kind: input, shape index: {}]
  %s10 = inlined_call_operand.vmem [shape: bf16[100,100], index: 10, kind: input, shape index: {}]
  %s11 = inlined_call_operand.vmem [shape: f32[1,100], index: 11, kind: input, shape index: {}]
  %s12 = inlined_call_operand.vmem [shape: f32[1,100], index: 12, kind: input, shape index: {}]
  %s13 = inlined_call_operand.vmem [shape: bf16[100,128], index: 13, kind: input, shape index: {}]
  %s14 = inlined_call_operand.vmem [shape: f32[1,128], index: 14, kind: input, shape index: {}]
  %s15 = inlined_call_operand.vmem [shape: f32[2,128], index: 15, kind: output, shape index: {}]
  %s16 = sld [smem:[#allocation0]]
  $region70: #{cnn_model2_forward.3} parent=0
    _
  %s18 = ssub.s32 1, %s16
  %s19 = scalar_select 0, %s18, %s16
  // Predicated region
  $region2: #{cnn_model2_forward.3} parent=0 // pred_check
    _
  $region3: #{cnn_model2_forward.3} parent=0 // pred_check_branch
    %21 = sbr.rel (0) target = $region5
  $region4: #{cnn_model2_forward.3} parent=0 // pred_region
    _
  $region5: #{cnn_model2_forward.3} parent=0 // pred_fallthru
    _
  // Predicated region
  $region6: #{cnn_model2_forward.3} parent=0 // pred_check
    _
  $region7: #{cnn_model2_forward.3} parent=0 // pred_check_branch
    %23 = sbr.rel (0) target = $region9
  $region8: #{cnn_model2_forward.3} parent=0 // pred_region
    _
  $region9: #{cnn_model2_forward.3} parent=0 // pred_fallthru
    _
  // Predicated region
  $region10: #{cnn_model2_forward.3} parent=0 // pred_check
    _
  $region11: #{cnn_model2_forward.3} parent=0 // pred_check_branch
    %25 = sbr.rel (0) target = $region13
  $region12: #{cnn_model2_forward.3} parent=0 // pred_region
    _
  $region13: #{cnn_model2_forward.3} parent=0 // pred_fallthru
    _
  // Predicated region
  $region14: #{cnn_model2_forward.3} parent=0 // pred_check
    _
  $region15: #{cnn_model2_forward.3} parent=0 // pred_check_branch
    %27 = sbr.rel (0) target = $region17
  $region16: #{cnn_model2_forward.3} parent=0 // pred_region
    _
  $region17: #{cnn_model2_forward.3} parent=0 // pred_fallthru
    _
  // Predicated region
  $region18: #{cnn_model2_forward.3} parent=0 // pred_check
    _
  $region19: #{cnn_model2_forward.3} parent=0 // pred_check_branch
    %29 = sbr.rel (0) target = $region21
  $region20: #{cnn_model2_forward.3} parent=0 // pred_region
    _
  $region21: #{cnn_model2_forward.3} parent=0 // pred_fallthru
    _
  // Predicated region
  $region22: #{cnn_model2_forward.3} parent=0 // pred_check
    _
  $region23: #{cnn_model2_forward.3} parent=0 // pred_check_branch
    %31 = sbr.rel (0) target = $region25
  $region24: #{cnn_model2_forward.3} parent=0 // pred_region
    _
  $region25: #{cnn_model2_forward.3} parent=0 // pred_fallthru
    _
  // Predicated region
  $region26: #{cnn_model2_forward.3} parent=0 // pred_check
    _
  $region27: #{cnn_model2_forward.3} parent=0 // pred_check_branch
    %33 = sbr.rel (0) target = $region29
  $region28: #{cnn_model2_forward.3} parent=0 // pred_region
    _
  $region29: #{cnn_model2_forward.3} parent=0 // pred_fallthru
    _
  // Predicated region
  $region30: #{cnn_model2_forward.3} parent=0 // pred_check
    _
  $region31: #{cnn_model2_forward.3} parent=0 // pred_check_branch
    %35 = sbr.rel (0) target = $region33
  $region32: #{cnn_model2_forward.3} parent=0 // pred_region
    _
  $region33: #{cnn_model2_forward.3} parent=0 // pred_fallthru
    _
  // Predicated region
  $region34: #{cnn_model2_forward.3} parent=0 // pred_check
    _
  $region35: #{cnn_model2_forward.3} parent=0 // pred_check_branch
    %37 = sbr.rel (0) target = $region37
  $region36: #{cnn_model2_forward.3} parent=0 // pred_region
    _
  $region37: #{cnn_model2_forward.3} parent=0 // pred_fallthru
    _
  // Predicated region
  $region38: #{cnn_model2_forward.3} parent=0 // pred_check
    _
  $region39: #{cnn_model2_forward.3} parent=0 // pred_check_branch
    %39 = sbr.rel (0) target = $region41
  $region40: #{cnn_model2_forward.3} parent=0 // pred_region
    _
  $region41: #{cnn_model2_forward.3} parent=0 // pred_fallthru
    _
  // Predicated region
  $region42: #{cnn_model2_forward.3} parent=0 // pred_check
    _
  $region43: #{cnn_model2_forward.3} parent=0 // pred_check_branch
    %41 = sbr.rel (0) target = $region45
  $region44: #{cnn_model2_forward.3} parent=0 // pred_region
    _
  $region45: #{cnn_model2_forward.3} parent=0 // pred_fallthru
    _
  // Predicated region
  $region46: #{cnn_model2_forward.3} parent=0 // pred_check
    _
  $region47: #{cnn_model2_forward.3} parent=0 // pred_check_branch
    %43 = sbr.rel (0) target = $region49
  $region48: #{cnn_model2_forward.3} parent=0 // pred_region
    _
  $region49: #{cnn_model2_forward.3} parent=0 // pred_fallthru
    _
  // Predicated region
  $region50: #{cnn_model2_forward.3} parent=0 // pred_check
    _
  $region51: #{cnn_model2_forward.3} parent=0 // pred_check_branch
    %45 = sbr.rel (0) target = $region53
  $region52: #{cnn_model2_forward.3} parent=0 // pred_region
    _
  $region53: #{cnn_model2_forward.3} parent=0 // pred_fallthru
    _
  // Predicated region
  $region54: #{cnn_model2_forward.3} parent=0 // pred_check
    _
  $region55: #{cnn_model2_forward.3} parent=0 // pred_check_branch
    %47 = sbr.rel (0) target = $region57
  $region56: #{cnn_model2_forward.3} parent=0 // pred_region
    _
  $region57: #{cnn_model2_forward.3} parent=0 // pred_fallthru
    _
  // Predicated region
  $region58: #{cnn_model2_forward.3} parent=0 // pred_check
    _
  $region59: #{cnn_model2_forward.3} parent=0 // pred_check_branch
    %49 = sbr.rel (0) target = $region61
  $region60: #{cnn_model2_forward.3} parent=0 // pred_region
    _
  $region61: #{cnn_model2_forward.3} parent=0 // pred_fallthru
    _
  %v51 = vld [vmem:[%s0] sm:$0xff]
  %v52 = vld [vmem:[%s0 + $0x8] sm:$0xff]
  %v53 = vld [vmem:[%s0 + $0x10] sm:$0xff]
  %v54 = vld [vmem:[%s0 + $0x18] sm:$0xff]
  %v55 = vld [vmem:[%s0 + $0x20] sm:$0xff]
  %v56 = vld [vmem:[%s0 + $0x28] sm:$0xff]
  %v57 = vld [vmem:[%s0 + $0x30] sm:$0xf]
  %v58 = vld [vmem:[%s0 + $0x34] sm:$0xff]
  %v59 = vld [vmem:[%s0 + $0x3c] sm:$0xff]
  %v60 = vld [vmem:[%s0 + $0x44] sm:$0xff]
  %v61 = vld [vmem:[%s0 + $0x4c] sm:$0xff]
  %v62 = vld [vmem:[%s0 + $0x54] sm:$0xff]
  %v63 = vld [vmem:[%s0 + $0x5c] sm:$0xff]
  %v64 = vld [vmem:[%s0 + $0x64] sm:$0xf]
  %v65 = vld [vmem:[%s0 + $0x68] sm:$0xff]
  %v66 = vld [vmem:[%s0 + $0x70] sm:$0xff]
  %v67 = vld [vmem:[%s0 + $0x78] sm:$0xff]
  %v68 = vld [vmem:[%s0 + $0x80] sm:$0xff]
  %v69 = vld [vmem:[%s0 + $0x88] sm:$0xff]
  %v70 = vld [vmem:[%s0 + $0x90] sm:$0xff]
  %v71 = vld [vmem:[%s0 + $0x98] sm:$0xf]
  %v72 = vld [vmem:[%s0 + $0x9c] sm:$0xff]
  %v73 = vld [vmem:[%s0 + $0xa4] sm:$0xff]
  %v74 = vld [vmem:[%s0 + $0xac] sm:$0xff]
  %v75 = vld [vmem:[%s0 + $0xb4] sm:$0xff]
  %v76 = vld [vmem:[%s0 + $0xbc] sm:$0xff]
  %v77 = vld [vmem:[%s0 + $0xc4] sm:$0xff]
  %v78 = vld [vmem:[%s0 + $0xcc] sm:$0xf]
  %v79 = vld [vmem:[%s0 + $0xd0] sm:$0xff]
  %v80 = vld [vmem:[%s0 + $0xd8] sm:$0xff]
  %v81 = vld [vmem:[%s0 + $0xe0] sm:$0xff]
  %v82 = vld [vmem:[%s0 + $0xe8] sm:$0xff]
  %v83 = vld [vmem:[%s0 + $0xf0] sm:$0xff]
  %v84 = vld [vmem:[%s0 + $0xf8] sm:$0xff]
  %v85 = vld [vmem:[%s0 + $0x100] sm:$0xf]
  %v86 = vld [vmem:[%s0 + $0x104] sm:$0xff]
  %v87 = vld [vmem:[%s0 + $0x10c] sm:$0xff]
  %v88 = vld [vmem:[%s0 + $0x114] sm:$0xff]
  %v89 = vld [vmem:[%s0 + $0x11c] sm:$0xff]
  %v90 = vld [vmem:[%s0 + $0x124] sm:$0xff]
  %v91 = vld [vmem:[%s0 + $0x12c] sm:$0xff]
  %v92 = vld [vmem:[%s0 + $0x134] sm:$0xf]
  %v93 = vld [vmem:[%s0 + $0x138] sm:$0xff]
  %v94 = vld [vmem:[%s0 + $0x140] sm:$0xff]
  %v95 = vld [vmem:[%s0 + $0x148] sm:$0xff]
  %v96 = vld [vmem:[%s0 + $0x150] sm:$0xff]
  %v97 = vld [vmem:[%s0 + $0x158] sm:$0xff]
  %v98 = vld [vmem:[%s0 + $0x160] sm:$0xff]
  %v99 = vld [vmem:[%s0 + $0x168] sm:$0xf]
  %v100 = vld [vmem:[%s0 + $0x16c] sm:$0xff]
  %v101 = vld [vmem:[%s0 + $0x174] sm:$0xff]
  %v102 = vld [vmem:[%s0 + $0x17c] sm:$0xff]
  %v103 = vld [vmem:[%s0 + $0x184] sm:$0xff]
  %v104 = vld [vmem:[%s0 + $0x18c] sm:$0xff]
  %v105 = vld [vmem:[%s0 + $0x194] sm:$0xff]
  %v106 = vld [vmem:[%s0 + $0x19c] sm:$0xf]
  %v107 = vld [vmem:[%s0 + $0x1a0] sm:$0xff]
  %v108 = vld [vmem:[%s0 + $0x1a8] sm:$0xff]
  %v109 = vld [vmem:[%s0 + $0x1b0] sm:$0xff]
  %v110 = vld [vmem:[%s0 + $0x1b8] sm:$0xff]
  %v111 = vld [vmem:[%s0 + $0x1c0] sm:$0xff]
  %v112 = vld [vmem:[%s0 + $0x1c8] sm:$0xff]
  %v113 = vld [vmem:[%s0 + $0x1d0] sm:$0xf]
  %v114 = vld [vmem:[%s0 + $0x1d4] sm:$0xff]
  %v115 = vld [vmem:[%s0 + $0x1dc] sm:$0xff]
  %v116 = vld [vmem:[%s0 + $0x1e4] sm:$0xff]
  %v117 = vld [vmem:[%s0 + $0x1ec] sm:$0xff]
  %v118 = vld [vmem:[%s0 + $0x1f4] sm:$0xff]
  %v119 = vld [vmem:[%s0 + $0x1fc] sm:$0xff]
  %v120 = vld [vmem:[%s0 + $0x204] sm:$0xf]
  %v121 = vld [vmem:[%s0 + $0x208] sm:$0xff]
  %v122 = vld [vmem:[%s0 + $0x210] sm:$0xff]
  %v123 = vld [vmem:[%s0 + $0x218] sm:$0xff]
  %v124 = vld [vmem:[%s0 + $0x220] sm:$0xff]
  %v125 = vld [vmem:[%s0 + $0x228] sm:$0xff]
  %v126 = vld [vmem:[%s0 + $0x230] sm:$0xff]
  %v127 = vld [vmem:[%s0 + $0x238] sm:$0xf]
  %v128 = vld [vmem:[%s0 + $0x23c] sm:$0xff]
  %v129 = vld [vmem:[%s0 + $0x244] sm:$0xff]
  %v130 = vld [vmem:[%s0 + $0x24c] sm:$0xff]
  %v131 = vld [vmem:[%s0 + $0x254] sm:$0xff]
  %v132 = vld [vmem:[%s0 + $0x25c] sm:$0xff]
  %v133 = vld [vmem:[%s0 + $0x264] sm:$0xff]
  %v134 = vld [vmem:[%s0 + $0x26c] sm:$0xf]
  %v135 = vld [vmem:[%s0 + $0x270] sm:$0xff]
  %v136 = vld [vmem:[%s0 + $0x278] sm:$0xff]
  %v137 = vld [vmem:[%s0 + $0x280] sm:$0xff]
  %v138 = vld [vmem:[%s0 + $0x288] sm:$0xff]
  %v139 = vld [vmem:[%s0 + $0x290] sm:$0xff]
  %v140 = vld [vmem:[%s0 + $0x298] sm:$0xff]
  %v141 = vld [vmem:[%s0 + $0x2a0] sm:$0xf]
  %v142 = vld [vmem:[%s0 + $0x2a4] sm:$0xff]
  %v143 = vld [vmem:[%s0 + $0x2ac] sm:$0xff]
  %v144 = vld [vmem:[%s0 + $0x2b4] sm:$0xff]
  %v145 = vld [vmem:[%s0 + $0x2bc] sm:$0xff]
  %v146 = vld [vmem:[%s0 + $0x2c4] sm:$0xff]
  %v147 = vld [vmem:[%s0 + $0x2cc] sm:$0xff]
  %v148 = vld [vmem:[%s0 + $0x2d4] sm:$0xf]
  %v149 = vld [vmem:[%s0 + $0x2d8] sm:$0xff]
  %v150 = vld [vmem:[%s0 + $0x2e0] sm:$0xff]
  %v151 = vld [vmem:[%s0 + $0x2e8] sm:$0xff]
  %v152 = vld [vmem:[%s0 + $0x2f0] sm:$0xff]
  %v153 = vld [vmem:[%s0 + $0x2f8] sm:$0xff]
  %v154 = vld [vmem:[%s0 + $0x300] sm:$0xff]
  %v155 = vld [vmem:[%s0 + $0x308] sm:$0xf]
  %v156 = vld [vmem:[%s0 + $0x30c] sm:$0xff]
  %v157 = vld [vmem:[%s0 + $0x314] sm:$0xff]
  %v158 = vld [vmem:[%s0 + $0x31c] sm:$0xff]
  %v159 = vld [vmem:[%s0 + $0x324] sm:$0xff]
  %v160 = vld [vmem:[%s0 + $0x32c] sm:$0xff]
  %v161 = vld [vmem:[%s0 + $0x334] sm:$0xff]
  %v162 = vld [vmem:[%s0 + $0x33c] sm:$0xf]
  %v163 = vld [vmem:[%s1] sm:$0xf]
  %v164 = vld [vmem:[%s1 + $0x4] sm:$0xf]
  %v165 = vld [vmem:[%s1 + $0x8] sm:$0xf]
  %v166 = vld [vmem:[%s1 + $0xc] sm:$0xf]
  %v167 = vld [vmem:[%s1 + $0x10] sm:$0xf]
  %v168 = vld [vmem:[%s1 + $0x14] sm:$0xf]
  %v169 = vld [vmem:[%s1 + $0x18] sm:$0xf]
  %v170 = vld [vmem:[%s1 + $0x1c] sm:$0xf]
  %v171 = vld [vmem:[%s1 + $0x20] sm:$0xf]
  %v172 = vld [vmem:[%s1 + $0x24] sm:$0xf]
  %v173 = vld [vmem:[%s1 + $0x28] sm:$0xf]
  %v174 = vld [vmem:[%s1 + $0x2c] sm:$0xf]
  %v175 = vld [vmem:[%s1 + $0x30] sm:$0xf]
  %v176 = vld [vmem:[%s1 + $0x34] sm:$0xf]
  %v177 = vld [vmem:[%s1 + $0x38] sm:$0xf]
  %v178 = vld [vmem:[%s1 + $0x3c] sm:$0xf]
  %v179 = vld [vmem:[%s1 + $0x40] sm:$0xf]
  %v180 = vld [vmem:[%s1 + $0x44] sm:$0xf]
  %v181 = vld [vmem:[%s1 + $0x48] sm:$0xf]
  %v182 = vld [vmem:[%s1 + $0x4c] sm:$0xf]
  %v183 = vld [vmem:[%s1 + $0x50] sm:$0xf]
  %v184 = vld [vmem:[%s1 + $0x54] sm:$0xf]
  %v185 = vld [vmem:[%s1 + $0x58] sm:$0xf]
  %v186 = vld [vmem:[%s1 + $0x5c] sm:$0xf]
  %v187 = vld [vmem:[%s1 + $0x60] sm:$0xf]
  %v188 = vld [vmem:[%s1 + $0x64] sm:$0xf]
  %v189 = vld [vmem:[%s1 + $0x68] sm:$0xf]
  %v190 = vld [vmem:[%s1 + $0x6c] sm:$0xf]
  %v191 = vld [vmem:[%s1 + $0x70] sm:$0xf]
  %v192 = vld [vmem:[%s1 + $0x74] sm:$0xf]
  %v193 = vld [vmem:[%s1 + $0x78] sm:$0xf]
  %v194 = vld [vmem:[%s1 + $0x7c] sm:$0xf]
  %v195 = vld [vmem:[%s1 + $0x80] sm:$0xf]
  %v196 = vld [vmem:[%s1 + $0x84] sm:$0xf]
  %v197 = vld [vmem:[%s1 + $0x88] sm:$0xf]
  %v198 = vld [vmem:[%s1 + $0x8c] sm:$0xf]
  %v199 = vld [vmem:[%s1 + $0x90] sm:$0xf]
  %v200 = vld [vmem:[%s1 + $0x94] sm:$0xf]
  %v201 = vld [vmem:[%s1 + $0x98] sm:$0xf]
  %v202 = vld [vmem:[%s1 + $0x9c] sm:$0xf]
  %v203 = vld [vmem:[%s1 + $0xa0] sm:$0xf]
  %v204 = vld [vmem:[%s1 + $0xa4] sm:$0xf]
  %v205 = vld [vmem:[%s1 + $0xa8] sm:$0xf]
  %v206 = vld [vmem:[%s1 + $0xac] sm:$0xf]
  %v207 = vld [vmem:[%s1 + $0xb0] sm:$0xf]
  %v208 = vld [vmem:[%s1 + $0xb4] sm:$0xf]
  %v209 = vld [vmem:[%s1 + $0xb8] sm:$0xf]
  %v210 = vld [vmem:[%s1 + $0xbc] sm:$0xf]
  %v211 = vld [vmem:[%s1 + $0xc0] sm:$0xf]
  %v212 = vld [vmem:[%s1 + $0xc4] sm:$0xf]
  %v213 = vld [vmem:[%s1 + $0xc8] sm:$0xf]
  %v214 = vld [vmem:[%s1 + $0xcc] sm:$0xf]
  %v215 = vld [vmem:[%s1 + $0xd0] sm:$0xf]
  %v216 = vld [vmem:[%s1 + $0xd4] sm:$0xf]
  %v217 = vld [vmem:[%s1 + $0xd8] sm:$0xf]
  %v218 = vld [vmem:[%s1 + $0xdc] sm:$0xf]
  %v219 = vld [vmem:[%s1 + $0xe0] sm:$0xf]
  %v220 = vld [vmem:[%s1 + $0xe4] sm:$0xf]
  %v221 = vld [vmem:[%s1 + $0xe8] sm:$0xf]
  %v222 = vld [vmem:[%s1 + $0xec] sm:$0xf]
  %v223 = vld [vmem:[%s1 + $0xf0] sm:$0xf]
  %v224 = vld [vmem:[%s1 + $0xf4] sm:$0xf]
  %v225 = vld [vmem:[%s1 + $0xf8] sm:$0xf]
  %v226 = vld [vmem:[%s1 + $0xfc] sm:$0xf]
  %v227 = vld [vmem:[%s1 + $0x100] sm:$0xf]
  %v228 = vld [vmem:[%s1 + $0x104] sm:$0xf]
  %v229 = vld [vmem:[%s1 + $0x108] sm:$0xf]
  %v230 = vld [vmem:[%s1 + $0x10c] sm:$0xf]
  %v231 = vld [vmem:[%s1 + $0x110] sm:$0xf]
  %v232 = vld [vmem:[%s1 + $0x114] sm:$0xf]
  %v233 = vld [vmem:[%s1 + $0x118] sm:$0xf]
  %v234 = vld [vmem:[%s1 + $0x11c] sm:$0xf]
  %v235 = vld [vmem:[%s1 + $0x120] sm:$0xf]
  %v236 = vld [vmem:[%s1 + $0x124] sm:$0xf]
  %v237 = vld [vmem:[%s1 + $0x128] sm:$0xf]
  %v238 = vld [vmem:[%s1 + $0x12c] sm:$0xf]
  %v239 = vld [vmem:[%s1 + $0x130] sm:$0xf]
  %v240 = vld [vmem:[%s1 + $0x134] sm:$0xf]
  %v241 = vld [vmem:[%s1 + $0x138] sm:$0xf]
  %v242 = vld [vmem:[%s1 + $0x13c] sm:$0xf]
  %v243 = vld [vmem:[%s1 + $0x140] sm:$0xf]
  %v244 = vld [vmem:[%s1 + $0x144] sm:$0xf]
  %v245 = vld [vmem:[%s1 + $0x148] sm:$0xf]
  %v246 = vld [vmem:[%s1 + $0x14c] sm:$0xf]
  %v247 = vld [vmem:[%s1 + $0x150] sm:$0xf]
  %v248 = vld [vmem:[%s1 + $0x154] sm:$0xf]
  %v249 = vld [vmem:[%s1 + $0x158] sm:$0xf]
  %v250 = vld [vmem:[%s1 + $0x15c] sm:$0xf]
  %v251 = vld [vmem:[%s1 + $0x160] sm:$0xf]
  %v252 = vld [vmem:[%s1 + $0x164] sm:$0xf]
  %v253 = vld [vmem:[%s1 + $0x168] sm:$0xf]
  %v254 = vld [vmem:[%s1 + $0x16c] sm:$0xf]
  %v255 = vld [vmem:[%s1 + $0x170] sm:$0xf]
  %v256 = vld [vmem:[%s1 + $0x174] sm:$0xf]
  %v257 = vld [vmem:[%s1 + $0x178] sm:$0xf]
  %v258 = vld [vmem:[%s1 + $0x17c] sm:$0xf]
  %v259 = vld [vmem:[%s1 + $0x180] sm:$0xf]
  %v260 = vld [vmem:[%s1 + $0x184] sm:$0xf]
  %v261 = vld [vmem:[%s1 + $0x188] sm:$0xf]
  %v262 = vld [vmem:[%s1 + $0x18c] sm:$0xf]
  %v263 = vld [vmem:[%s1 + $0x190] sm:$0xf]
  %v264 = vld [vmem:[%s1 + $0x194] sm:$0xf]
  %v265 = vld [vmem:[%s1 + $0x198] sm:$0xf]
  %v266 = vld [vmem:[%s1 + $0x19c] sm:$0xf]
  %v267 = vld [vmem:[%s1 + $0x1a0] sm:$0xf]
  %v268 = vld [vmem:[%s1 + $0x1a4] sm:$0xf]
  %v269 = vld [vmem:[%s1 + $0x1a8] sm:$0xf]
  %v270 = vld [vmem:[%s1 + $0x1ac] sm:$0xf]
  %v271 = vld [vmem:[%s1 + $0x1b0] sm:$0xf]
  %v272 = vld [vmem:[%s1 + $0x1b4] sm:$0xf]
  %v273 = vld [vmem:[%s1 + $0x1b8] sm:$0xf]
  %v274 = vld [vmem:[%s1 + $0x1bc] sm:$0xf]
  %v275 = vld [vmem:[%s1 + $0x1c0] sm:$0xf]
  %v276 = vld [vmem:[%s1 + $0x1c4] sm:$0xf]
  %v277 = vld [vmem:[%s1 + $0x1c8] sm:$0xf]
  %v278 = vld [vmem:[%s1 + $0x1cc] sm:$0xf]
  %v279 = vld [vmem:[%s1 + $0x1d0] sm:$0xf]
  %v280 = vld [vmem:[%s1 + $0x1d4] sm:$0xf]
  %v281 = vld [vmem:[%s1 + $0x1d8] sm:$0xf]
  %v282 = vld [vmem:[%s1 + $0x1dc] sm:$0xf]
  %v283 = vld [vmem:[%s1 + $0x1e0] sm:$0xf]
  %v284 = vld [vmem:[%s1 + $0x1e4] sm:$0xf]
  %v285 = vld [vmem:[%s1 + $0x1e8] sm:$0xf]
  %v286 = vld [vmem:[%s1 + $0x1ec] sm:$0xf]
  %v287 = vld [vmem:[%s1 + $0x1f0] sm:$0xf]
  %v288 = vld [vmem:[%s1 + $0x1f4] sm:$0xf]
  %v289 = vld [vmem:[%s1 + $0x1f8] sm:$0xf]
  %v290 = vld [vmem:[%s1 + $0x1fc] sm:$0xf]
  %v291 = vld [vmem:[%s1 + $0x200] sm:$0xf]
  %v292 = vld [vmem:[%s1 + $0x204] sm:$0xf]
  %v293 = vld [vmem:[%s1 + $0x208] sm:$0xf]
  %v294 = vld [vmem:[%s1 + $0x20c] sm:$0xf]
  %v295 = vld [vmem:[%s1 + $0x210] sm:$0xf]
  %v296 = vld [vmem:[%s1 + $0x214] sm:$0xf]
  %v297 = vld [vmem:[%s1 + $0x218] sm:$0xf]
  %v298 = vld [vmem:[%s1 + $0x21c] sm:$0xf]
  %v299 = vld [vmem:[%s1 + $0x220] sm:$0xf]
  %v300 = vld [vmem:[%s1 + $0x224] sm:$0xf]
  %v301 = vld [vmem:[%s1 + $0x228] sm:$0xf]
  %v302 = vld [vmem:[%s1 + $0x22c] sm:$0xf]
  %v303 = vld [vmem:[%s1 + $0x230] sm:$0xf]
  %v304 = vld [vmem:[%s1 + $0x234] sm:$0xf]
  %v305 = vld [vmem:[%s1 + $0x238] sm:$0xf]
  %v306 = vld [vmem:[%s1 + $0x23c] sm:$0xf]
  %v307 = vld [vmem:[%s1 + $0x240] sm:$0xf]
  %v308 = vld [vmem:[%s1 + $0x244] sm:$0xf]
  %v309 = vld [vmem:[%s1 + $0x248] sm:$0xf]
  %v310 = vld [vmem:[%s1 + $0x24c] sm:$0xf]
  %v311 = vld [vmem:[%s1 + $0x250] sm:$0xf]
  %v312 = vld [vmem:[%s1 + $0x254] sm:$0xf]
  %v313 = vld [vmem:[%s1 + $0x258] sm:$0xf]
  %v314 = vld [vmem:[%s1 + $0x25c] sm:$0xf]
  %v315 = vld [vmem:[%s1 + $0x260] sm:$0xf]
  %v316 = vld [vmem:[%s1 + $0x264] sm:$0xf]
  %v317 = vld [vmem:[%s1 + $0x268] sm:$0xf]
  %v318 = vld [vmem:[%s1 + $0x26c] sm:$0xf]
  %v319 = vld [vmem:[%s1 + $0x270] sm:$0xf]
  %v320 = vld [vmem:[%s1 + $0x274] sm:$0xf]
  %v321 = vld [vmem:[%s1 + $0x278] sm:$0xf]
  %v322 = vld [vmem:[%s1 + $0x27c] sm:$0xf]
  %v323 = vld [vmem:[%s1 + $0x280] sm:$0xf]
  %v324 = vld [vmem:[%s1 + $0x284] sm:$0xf]
  %v325 = vld [vmem:[%s1 + $0x288] sm:$0xf]
  %v326 = vld [vmem:[%s1 + $0x28c] sm:$0xf]
  %v327 = vld [vmem:[%s1 + $0x290] sm:$0xf]
  %v328 = vld [vmem:[%s1 + $0x294] sm:$0xf]
  %v329 = vld [vmem:[%s1 + $0x298] sm:$0xf]
  %v330 = vld [vmem:[%s1 + $0x29c] sm:$0xf]
  %v331 = vld [vmem:[%s1 + $0x2a0] sm:$0xf]
  %v332 = vld [vmem:[%s1 + $0x2a4] sm:$0xf]
  %v333 = vld [vmem:[%s1 + $0x2a8] sm:$0xf]
  %v334 = vld [vmem:[%s1 + $0x2ac] sm:$0xf]
  %v335 = vld [vmem:[%s1 + $0x2b0] sm:$0xf]
  %v336 = vld [vmem:[%s1 + $0x2b4] sm:$0xf]
  %v337 = vld [vmem:[%s1 + $0x2b8] sm:$0xf]
  %v338 = vld [vmem:[%s1 + $0x2bc] sm:$0xf]
  %v339 = vld [vmem:[%s1 + $0x2c0] sm:$0xf]
  %v340 = vld [vmem:[%s1 + $0x2c4] sm:$0xf]
  %v341 = vld [vmem:[%s1 + $0x2c8] sm:$0xf]
  %v342 = vld [vmem:[%s1 + $0x2cc] sm:$0xf]
  %v343 = vld [vmem:[%s1 + $0x2d0] sm:$0xf]
  %v344 = vld [vmem:[%s1 + $0x2d4] sm:$0xf]
  %v345 = vld [vmem:[%s1 + $0x2d8] sm:$0xf]
  %v346 = vld [vmem:[%s1 + $0x2dc] sm:$0xf]
  %v347 = vld [vmem:[%s1 + $0x2e0] sm:$0xf]
  %v348 = vld [vmem:[%s1 + $0x2e4] sm:$0xf]
  %v349 = vld [vmem:[%s1 + $0x2e8] sm:$0xf]
  %v350 = vld [vmem:[%s1 + $0x2ec] sm:$0xf]
  %v351 = vld [vmem:[%s1 + $0x2f0] sm:$0xf]
  %v352 = vld [vmem:[%s1 + $0x2f4] sm:$0xf]
  %v353 = vld [vmem:[%s1 + $0x2f8] sm:$0xf]
  %v354 = vld [vmem:[%s1 + $0x2fc] sm:$0xf]
  %v355 = vld [vmem:[%s1 + $0x300] sm:$0xf]
  %v356 = vld [vmem:[%s1 + $0x304] sm:$0xf]
  %v357 = vld [vmem:[%s1 + $0x308] sm:$0xf]
  %v358 = vld [vmem:[%s1 + $0x30c] sm:$0xf]
  %v359 = vld [vmem:[%s1 + $0x310] sm:$0xf]
  %v360 = vld [vmem:[%s1 + $0x314] sm:$0xf]
  %v361 = vld [vmem:[%s1 + $0x318] sm:$0xf]
  %v362 = vld [vmem:[%s1 + $0x31c] sm:$0xf]
  %v475 = vunpack.c.l.b16 %v51
  %v476 = vunpack.c.h.b16 %v51
  %v477 = vunpack.c.l.b16 %v52
  %v478 = vunpack.c.h.b16 %v52
  %v479 = vunpack.c.l.b16 %v53
  %v480 = vunpack.c.h.b16 %v53
  %v481 = vunpack.c.l.b16 %v54
  %v482 = vunpack.c.h.b16 %v54
  %v483 = vunpack.c.l.b16 %v55
  %v484 = vunpack.c.h.b16 %v55
  %v485 = vunpack.c.l.b16 %v56
  %v486 = vunpack.c.h.b16 %v56
  %v487 = vunpack.c.l.b16 %v57
  %v488 = vunpack.c.l.b16 %v58
  %v489 = vunpack.c.h.b16 %v58
  %v490 = vunpack.c.l.b16 %v59
  %v491 = vunpack.c.h.b16 %v59
  %v492 = vunpack.c.l.b16 %v60
  %v493 = vunpack.c.h.b16 %v60
  %v494 = vunpack.c.l.b16 %v61
  %v495 = vunpack.c.h.b16 %v61
  %v496 = vunpack.c.l.b16 %v62
  %v497 = vunpack.c.h.b16 %v62
  %v498 = vunpack.c.l.b16 %v63
  %v499 = vunpack.c.h.b16 %v63
  %v500 = vunpack.c.l.b16 %v64
  %v501 = vunpack.c.l.b16 %v65
  %v502 = vunpack.c.h.b16 %v65
  %v503 = vunpack.c.l.b16 %v66
  %v504 = vunpack.c.h.b16 %v66
  %v505 = vunpack.c.l.b16 %v67
  %v506 = vunpack.c.h.b16 %v67
  %v507 = vunpack.c.l.b16 %v68
  %v508 = vunpack.c.h.b16 %v68
  %v509 = vunpack.c.l.b16 %v69
  %v510 = vunpack.c.h.b16 %v69
  %v511 = vunpack.c.l.b16 %v70
  %v512 = vunpack.c.h.b16 %v70
  %v513 = vunpack.c.l.b16 %v71
  %v514 = vunpack.c.l.b16 %v72
  %v515 = vunpack.c.h.b16 %v72
  %v516 = vunpack.c.l.b16 %v73
  %v517 = vunpack.c.h.b16 %v73
  %v518 = vunpack.c.l.b16 %v74
  %v519 = vunpack.c.h.b16 %v74
  %v520 = vunpack.c.l.b16 %v75
  %v521 = vunpack.c.h.b16 %v75
  %v522 = vunpack.c.l.b16 %v76
  %v523 = vunpack.c.h.b16 %v76
  %v524 = vunpack.c.l.b16 %v77
  %v525 = vunpack.c.h.b16 %v77
  %v526 = vunpack.c.l.b16 %v78
  %v527 = vunpack.c.l.b16 %v79
  %v528 = vunpack.c.h.b16 %v79
  %v529 = vunpack.c.l.b16 %v80
  %v530 = vunpack.c.h.b16 %v80
  %v531 = vunpack.c.l.b16 %v81
  %v532 = vunpack.c.h.b16 %v81
  %v533 = vunpack.c.l.b16 %v82
  %v534 = vunpack.c.h.b16 %v82
  %v535 = vunpack.c.l.b16 %v83
  %v536 = vunpack.c.h.b16 %v83
  %v537 = vunpack.c.l.b16 %v84
  %v538 = vunpack.c.h.b16 %v84
  %v539 = vunpack.c.l.b16 %v85
  %v540 = vunpack.c.l.b16 %v86
  %v541 = vunpack.c.h.b16 %v86
  %v542 = vunpack.c.l.b16 %v87
  %v543 = vunpack.c.h.b16 %v87
  %v544 = vunpack.c.l.b16 %v88
  %v545 = vunpack.c.h.b16 %v88
  %v546 = vunpack.c.l.b16 %v89
  %v547 = vunpack.c.h.b16 %v89
  %v548 = vunpack.c.l.b16 %v90
  %v549 = vunpack.c.h.b16 %v90
  %v550 = vunpack.c.l.b16 %v91
  %v551 = vunpack.c.h.b16 %v91
  %v552 = vunpack.c.l.b16 %v92
  %v553 = vunpack.c.l.b16 %v93
  %v554 = vunpack.c.h.b16 %v93
  %v555 = vunpack.c.l.b16 %v94
  %v556 = vunpack.c.h.b16 %v94
  %v557 = vunpack.c.l.b16 %v95
  %v558 = vunpack.c.h.b16 %v95
  %v559 = vunpack.c.l.b16 %v96
  %v560 = vunpack.c.h.b16 %v96
  %v561 = vunpack.c.l.b16 %v97
  %v562 = vunpack.c.h.b16 %v97
  %v563 = vunpack.c.l.b16 %v98
  %v564 = vunpack.c.h.b16 %v98
  %v565 = vunpack.c.l.b16 %v99
  %v566 = vunpack.c.l.b16 %v100
  %v567 = vunpack.c.h.b16 %v100
  %v568 = vunpack.c.l.b16 %v101
  %v569 = vunpack.c.h.b16 %v101
  %v570 = vunpack.c.l.b16 %v102
  %v571 = vunpack.c.h.b16 %v102
  %v572 = vunpack.c.l.b16 %v103
  %v573 = vunpack.c.h.b16 %v103
  %v574 = vunpack.c.l.b16 %v104
  %v575 = vunpack.c.h.b16 %v104
  %v576 = vunpack.c.l.b16 %v105
  %v577 = vunpack.c.h.b16 %v105
  %v578 = vunpack.c.l.b16 %v106
  %v579 = vunpack.c.l.b16 %v107
  %v580 = vunpack.c.h.b16 %v107
  %v581 = vunpack.c.l.b16 %v108
  %v582 = vunpack.c.h.b16 %v108
  %v583 = vunpack.c.l.b16 %v109
  %v584 = vunpack.c.h.b16 %v109
  %v585 = vunpack.c.l.b16 %v110
  %v586 = vunpack.c.h.b16 %v110
  %v587 = vunpack.c.l.b16 %v111
  %v588 = vunpack.c.h.b16 %v111
  %v589 = vunpack.c.l.b16 %v112
  %v590 = vunpack.c.h.b16 %v112
  %v591 = vunpack.c.l.b16 %v113
  %v592 = vunpack.c.l.b16 %v114
  %v593 = vunpack.c.h.b16 %v114
  %v594 = vunpack.c.l.b16 %v115
  %v595 = vunpack.c.h.b16 %v115
  %v596 = vunpack.c.l.b16 %v116
  %v597 = vunpack.c.h.b16 %v116
  %v598 = vunpack.c.l.b16 %v117
  %v599 = vunpack.c.h.b16 %v117
  %v600 = vunpack.c.l.b16 %v118
  %v601 = vunpack.c.h.b16 %v118
  %v602 = vunpack.c.l.b16 %v119
  %v603 = vunpack.c.h.b16 %v119
  %v604 = vunpack.c.l.b16 %v120
  %v605 = vunpack.c.l.b16 %v121
  %v606 = vunpack.c.h.b16 %v121
  %v607 = vunpack.c.l.b16 %v122
  %v608 = vunpack.c.h.b16 %v122
  %v609 = vunpack.c.l.b16 %v123
  %v610 = vunpack.c.h.b16 %v123
  %v611 = vunpack.c.l.b16 %v124
  %v612 = vunpack.c.h.b16 %v124
  %v613 = vunpack.c.l.b16 %v125
  %v614 = vunpack.c.h.b16 %v125
  %v615 = vunpack.c.l.b16 %v126
  %v616 = vunpack.c.h.b16 %v126
  %v617 = vunpack.c.l.b16 %v127
  %v618 = vunpack.c.l.b16 %v128
  %v619 = vunpack.c.h.b16 %v128
  %v620 = vunpack.c.l.b16 %v129
  %v621 = vunpack.c.h.b16 %v129
  %v622 = vunpack.c.l.b16 %v130
  %v623 = vunpack.c.h.b16 %v130
  %v624 = vunpack.c.l.b16 %v131
  %v625 = vunpack.c.h.b16 %v131
  %v626 = vunpack.c.l.b16 %v132
  %v627 = vunpack.c.h.b16 %v132
  %v628 = vunpack.c.l.b16 %v133
  %v629 = vunpack.c.h.b16 %v133
  %v630 = vunpack.c.l.b16 %v134
  %v631 = vunpack.c.l.b16 %v135
  %v632 = vunpack.c.h.b16 %v135
  %v633 = vunpack.c.l.b16 %v136
  %v634 = vunpack.c.h.b16 %v136
  %v635 = vunpack.c.l.b16 %v137
  %v636 = vunpack.c.h.b16 %v137
  %v637 = vunpack.c.l.b16 %v138
  %v638 = vunpack.c.h.b16 %v138
  %v639 = vunpack.c.l.b16 %v139
  %v640 = vunpack.c.h.b16 %v139
  %v641 = vunpack.c.l.b16 %v140
  %v642 = vunpack.c.h.b16 %v140
  %v643 = vunpack.c.l.b16 %v141
  %v644 = vunpack.c.l.b16 %v142
  %v645 = vunpack.c.h.b16 %v142
  %v646 = vunpack.c.l.b16 %v143
  %v647 = vunpack.c.h.b16 %v143
  %v648 = vunpack.c.l.b16 %v144
  %v649 = vunpack.c.h.b16 %v144
  %v650 = vunpack.c.l.b16 %v145
  %v651 = vunpack.c.h.b16 %v145
  %v652 = vunpack.c.l.b16 %v146
  %v653 = vunpack.c.h.b16 %v146
  %v654 = vunpack.c.l.b16 %v147
  %v655 = vunpack.c.h.b16 %v147
  %v656 = vunpack.c.l.b16 %v148
  %v657 = vunpack.c.l.b16 %v149
  %v658 = vunpack.c.h.b16 %v149
  %v659 = vunpack.c.l.b16 %v150
  %v660 = vunpack.c.h.b16 %v150
  %v661 = vunpack.c.l.b16 %v151
  %v662 = vunpack.c.h.b16 %v151
  %v663 = vunpack.c.l.b16 %v152
  %v664 = vunpack.c.h.b16 %v152
  %v665 = vunpack.c.l.b16 %v153
  %v666 = vunpack.c.h.b16 %v153
  %v667 = vunpack.c.l.b16 %v154
  %v668 = vunpack.c.h.b16 %v154
  %v669 = vunpack.c.l.b16 %v155
  %v670 = vunpack.c.l.b16 %v156
  %v671 = vunpack.c.h.b16 %v156
  %v672 = vunpack.c.l.b16 %v157
  %v673 = vunpack.c.h.b16 %v157
  %v674 = vunpack.c.l.b16 %v158
  %v675 = vunpack.c.h.b16 %v158
  %v676 = vunpack.c.l.b16 %v159
  %v677 = vunpack.c.h.b16 %v159
  %v678 = vunpack.c.l.b16 %v160
  %v679 = vunpack.c.h.b16 %v160
  %v680 = vunpack.c.l.b16 %v161
  %v681 = vunpack.c.h.b16 %v161
  %v682 = vunpack.c.l.b16 %v162
  %v683 = vpack.c.b16 %v488, %v475
  %v684 = vpack.c.b16 %v489, %v476
  %v685 = vpack.c.b16 %v490, %v477
  %v686 = vpack.c.b16 %v491, %v478
  %v687 = vpack.c.b16 %v492, %v479
  %v688 = vpack.c.b16 %v493, %v480
  %v689 = vpack.c.b16 %v494, %v481
  %v690 = vpack.c.b16 %v495, %v482
  %v691 = vpack.c.b16 %v496, %v483
  %v692 = vpack.c.b16 %v497, %v484
  %v693 = vpack.c.b16 %v498, %v485
  %v694 = vpack.c.b16 %v499, %v486
  %v695 = vpack.c.b16 %v500, %v487
  %v696 = vpack.c.b16 %v514, %v501
  %v697 = vpack.c.b16 %v515, %v502
  %v698 = vpack.c.b16 %v516, %v503
  %v699 = vpack.c.b16 %v517, %v504
  %v700 = vpack.c.b16 %v518, %v505
  %v701 = vpack.c.b16 %v519, %v506
  %v702 = vpack.c.b16 %v520, %v507
  %v703 = vpack.c.b16 %v521, %v508
  %v704 = vpack.c.b16 %v522, %v509
  %v705 = vpack.c.b16 %v523, %v510
  %v706 = vpack.c.b16 %v524, %v511
  %v707 = vpack.c.b16 %v525, %v512
  %v708 = vpack.c.b16 %v526, %v513
  %v709 = vpack.c.b16 %v540, %v527
  %v710 = vpack.c.b16 %v541, %v528
  %v711 = vpack.c.b16 %v542, %v529
  %v712 = vpack.c.b16 %v543, %v530
  %v713 = vpack.c.b16 %v544, %v531
  %v714 = vpack.c.b16 %v545, %v532
  %v715 = vpack.c.b16 %v546, %v533
  %v716 = vpack.c.b16 %v547, %v534
  %v717 = vpack.c.b16 %v548, %v535
  %v718 = vpack.c.b16 %v549, %v536
  %v719 = vpack.c.b16 %v550, %v537
  %v720 = vpack.c.b16 %v551, %v538
  %v721 = vpack.c.b16 %v552, %v539
  %v722 = vpack.c.b16 %v566, %v553
  %v723 = vpack.c.b16 %v567, %v554
  %v724 = vpack.c.b16 %v568, %v555
  %v725 = vpack.c.b16 %v569, %v556
  %v726 = vpack.c.b16 %v570, %v557
  %v727 = vpack.c.b16 %v571, %v558
  %v728 = vpack.c.b16 %v572, %v559
  %v729 = vpack.c.b16 %v573, %v560
  %v730 = vpack.c.b16 %v574, %v561
  %v731 = vpack.c.b16 %v575, %v562
  %v732 = vpack.c.b16 %v576, %v563
  %v733 = vpack.c.b16 %v577, %v564
  %v734 = vpack.c.b16 %v578, %v565
  %v735 = vpack.c.b16 %v592, %v579
  %v736 = vpack.c.b16 %v593, %v580
  %v737 = vpack.c.b16 %v594, %v581
  %v738 = vpack.c.b16 %v595, %v582
  %v739 = vpack.c.b16 %v596, %v583
  %v740 = vpack.c.b16 %v597, %v584
  %v741 = vpack.c.b16 %v598, %v585
  %v742 = vpack.c.b16 %v599, %v586
  %v743 = vpack.c.b16 %v600, %v587
  %v744 = vpack.c.b16 %v601, %v588
  %v745 = vpack.c.b16 %v602, %v589
  %v746 = vpack.c.b16 %v603, %v590
  %v747 = vpack.c.b16 %v604, %v591
  %v748 = vpack.c.b16 %v618, %v605
  %v749 = vpack.c.b16 %v619, %v606
  %v750 = vpack.c.b16 %v620, %v607
  %v751 = vpack.c.b16 %v621, %v608
  %v752 = vpack.c.b16 %v622, %v609
  %v753 = vpack.c.b16 %v623, %v610
  %v754 = vpack.c.b16 %v624, %v611
  %v755 = vpack.c.b16 %v625, %v612
  %v756 = vpack.c.b16 %v626, %v613
  %v757 = vpack.c.b16 %v627, %v614
  %v758 = vpack.c.b16 %v628, %v615
  %v759 = vpack.c.b16 %v629, %v616
  %v760 = vpack.c.b16 %v630, %v617
  %v761 = vpack.c.b16 %v644, %v631
  %v762 = vpack.c.b16 %v645, %v632
  %v763 = vpack.c.b16 %v646, %v633
  %v764 = vpack.c.b16 %v647, %v634
  %v765 = vpack.c.b16 %v648, %v635
  %v766 = vpack.c.b16 %v649, %v636
  %v767 = vpack.c.b16 %v650, %v637
  %v768 = vpack.c.b16 %v651, %v638
  %v769 = vpack.c.b16 %v652, %v639
  %v770 = vpack.c.b16 %v653, %v640
  %v771 = vpack.c.b16 %v654, %v641
  %v772 = vpack.c.b16 %v655, %v642
  %v773 = vpack.c.b16 %v656, %v643
  %v774 = vpack.c.b16 %v670, %v657
  %v775 = vpack.c.b16 %v671, %v658
  %v776 = vpack.c.b16 %v672, %v659
  %v777 = vpack.c.b16 %v673, %v660
  %v778 = vpack.c.b16 %v674, %v661
  %v779 = vpack.c.b16 %v675, %v662
  %v780 = vpack.c.b16 %v676, %v663
  %v781 = vpack.c.b16 %v677, %v664
  %v782 = vpack.c.b16 %v678, %v665
  %v783 = vpack.c.b16 %v679, %v666
  %v784 = vpack.c.b16 %v680, %v667
  %v785 = vpack.c.b16 %v681, %v668
  %v786 = vpack.c.b16 %v682, %v669
  %v1083 = vunpack.c.l.b16 %v163
  %v1084 = vunpack.c.l.b16 %v164
  %v1085 = vunpack.c.l.b16 %v165
  %v1086 = vunpack.c.l.b16 %v166
  %v1087 = vunpack.c.l.b16 %v167
  %v1088 = vunpack.c.l.b16 %v168
  %v1089 = vunpack.c.l.b16 %v169
  %v1090 = vunpack.c.l.b16 %v170
  %v1091 = vunpack.c.l.b16 %v171
  %v1092 = vunpack.c.l.b16 %v172
  %v1093 = vunpack.c.l.b16 %v173
  %v1094 = vunpack.c.l.b16 %v174
  %v1095 = vunpack.c.l.b16 %v175
  %v1096 = vunpack.c.l.b16 %v176
  %v1097 = vunpack.c.l.b16 %v177
  %v1098 = vunpack.c.l.b16 %v178
  %v1099 = vunpack.c.l.b16 %v179
  %v1100 = vunpack.c.l.b16 %v180
  %v1101 = vunpack.c.l.b16 %v181
  %v1102 = vunpack.c.l.b16 %v182
  %v1103 = vunpack.c.l.b16 %v183
  %v1104 = vunpack.c.l.b16 %v184
  %v1105 = vunpack.c.l.b16 %v185
  %v1106 = vunpack.c.l.b16 %v186
  %v1107 = vunpack.c.l.b16 %v187
  %v1108 = vunpack.c.l.b16 %v188
  %v1109 = vunpack.c.l.b16 %v189
  %v1110 = vunpack.c.l.b16 %v190
  %v1111 = vunpack.c.l.b16 %v191
  %v1112 = vunpack.c.l.b16 %v192
  %v1113 = vunpack.c.l.b16 %v193
  %v1114 = vunpack.c.l.b16 %v194
  %v1115 = vunpack.c.l.b16 %v195
  %v1116 = vunpack.c.l.b16 %v196
  %v1117 = vunpack.c.l.b16 %v197
  %v1118 = vunpack.c.l.b16 %v198
  %v1119 = vunpack.c.l.b16 %v199
  %v1120 = vunpack.c.l.b16 %v200
  %v1121 = vunpack.c.l.b16 %v201
  %v1122 = vunpack.c.l.b16 %v202
  %v1123 = vunpack.c.l.b16 %v203
  %v1124 = vunpack.c.l.b16 %v204
  %v1125 = vunpack.c.l.b16 %v205
  %v1126 = vunpack.c.l.b16 %v206
  %v1127 = vunpack.c.l.b16 %v207
  %v1128 = vunpack.c.l.b16 %v208
  %v1129 = vunpack.c.l.b16 %v209
  %v1130 = vunpack.c.l.b16 %v210
  %v1131 = vunpack.c.l.b16 %v211
  %v1132 = vunpack.c.l.b16 %v212
  %v1133 = vunpack.c.l.b16 %v213
  %v1134 = vunpack.c.l.b16 %v214
  %v1135 = vunpack.c.l.b16 %v215
  %v1136 = vunpack.c.l.b16 %v216
  %v1137 = vunpack.c.l.b16 %v217
  %v1138 = vunpack.c.l.b16 %v218
  %v1139 = vunpack.c.l.b16 %v219
  %v1140 = vunpack.c.l.b16 %v220
  %v1141 = vunpack.c.l.b16 %v221
  %v1142 = vunpack.c.l.b16 %v222
  %v1143 = vunpack.c.l.b16 %v223
  %v1144 = vunpack.c.l.b16 %v224
  %v1145 = vunpack.c.l.b16 %v225
  %v1146 = vunpack.c.l.b16 %v226
  %v1147 = vunpack.c.l.b16 %v227
  %v1148 = vunpack.c.l.b16 %v228
  %v1149 = vunpack.c.l.b16 %v229
  %v1150 = vunpack.c.l.b16 %v230
  %v1151 = vunpack.c.l.b16 %v231
  %v1152 = vunpack.c.l.b16 %v232
  %v1153 = vunpack.c.l.b16 %v233
  %v1154 = vunpack.c.l.b16 %v234
  %v1155 = vunpack.c.l.b16 %v235
  %v1156 = vunpack.c.l.b16 %v236
  %v1157 = vunpack.c.l.b16 %v237
  %v1158 = vunpack.c.l.b16 %v238
  %v1159 = vunpack.c.l.b16 %v239
  %v1160 = vunpack.c.l.b16 %v240
  %v1161 = vunpack.c.l.b16 %v241
  %v1162 = vunpack.c.l.b16 %v242
  %v1163 = vunpack.c.l.b16 %v243
  %v1164 = vunpack.c.l.b16 %v244
  %v1165 = vunpack.c.l.b16 %v245
  %v1166 = vunpack.c.l.b16 %v246
  %v1167 = vunpack.c.l.b16 %v247
  %v1168 = vunpack.c.l.b16 %v248
  %v1169 = vunpack.c.l.b16 %v249
  %v1170 = vunpack.c.l.b16 %v250
  %v1171 = vunpack.c.l.b16 %v251
  %v1172 = vunpack.c.l.b16 %v252
  %v1173 = vunpack.c.l.b16 %v253
  %v1174 = vunpack.c.l.b16 %v254
  %v1175 = vunpack.c.l.b16 %v255
  %v1176 = vunpack.c.l.b16 %v256
  %v1177 = vunpack.c.l.b16 %v257
  %v1178 = vunpack.c.l.b16 %v258
  %v1179 = vunpack.c.l.b16 %v259
  %v1180 = vunpack.c.l.b16 %v260
  %v1181 = vunpack.c.l.b16 %v261
  %v1182 = vunpack.c.l.b16 %v262
  %v1183 = vunpack.c.l.b16 %v263
  %v1184 = vunpack.c.l.b16 %v264
  %v1185 = vunpack.c.l.b16 %v265
  %v1186 = vunpack.c.l.b16 %v266
  %v1187 = vunpack.c.l.b16 %v267
  %v1188 = vunpack.c.l.b16 %v268
  %v1189 = vunpack.c.l.b16 %v269
  %v1190 = vunpack.c.l.b16 %v270
  %v1191 = vunpack.c.l.b16 %v271
  %v1192 = vunpack.c.l.b16 %v272
  %v1193 = vunpack.c.l.b16 %v273
  %v1194 = vunpack.c.l.b16 %v274
  %v1195 = vunpack.c.l.b16 %v275
  %v1196 = vunpack.c.l.b16 %v276
  %v1197 = vunpack.c.l.b16 %v277
  %v1198 = vunpack.c.l.b16 %v278
  %v1199 = vunpack.c.l.b16 %v279
  %v1200 = vunpack.c.l.b16 %v280
  %v1201 = vunpack.c.l.b16 %v281
  %v1202 = vunpack.c.l.b16 %v282
  %v1203 = vunpack.c.l.b16 %v283
  %v1204 = vunpack.c.l.b16 %v284
  %v1205 = vunpack.c.l.b16 %v285
  %v1206 = vunpack.c.l.b16 %v286
  %v1207 = vunpack.c.l.b16 %v287
  %v1208 = vunpack.c.l.b16 %v288
  %v1209 = vunpack.c.l.b16 %v289
  %v1210 = vunpack.c.l.b16 %v290
  %v1211 = vunpack.c.l.b16 %v291
  %v1212 = vunpack.c.l.b16 %v292
  %v1213 = vunpack.c.l.b16 %v293
  %v1214 = vunpack.c.l.b16 %v294
  %v1215 = vunpack.c.l.b16 %v295
  %v1216 = vunpack.c.l.b16 %v296
  %v1217 = vunpack.c.l.b16 %v297
  %v1218 = vunpack.c.l.b16 %v298
  %v1219 = vunpack.c.l.b16 %v299
  %v1220 = vunpack.c.l.b16 %v300
  %v1221 = vunpack.c.l.b16 %v301
  %v1222 = vunpack.c.l.b16 %v302
  %v1223 = vunpack.c.l.b16 %v303
  %v1224 = vunpack.c.l.b16 %v304
  %v1225 = vunpack.c.l.b16 %v305
  %v1226 = vunpack.c.l.b16 %v306
  %v1227 = vunpack.c.l.b16 %v307
  %v1228 = vunpack.c.l.b16 %v308
  %v1229 = vunpack.c.l.b16 %v309
  %v1230 = vunpack.c.l.b16 %v310
  %v1231 = vunpack.c.l.b16 %v311
  %v1232 = vunpack.c.l.b16 %v312
  %v1233 = vunpack.c.l.b16 %v313
  %v1234 = vunpack.c.l.b16 %v314
  %v1235 = vunpack.c.l.b16 %v315
  %v1236 = vunpack.c.l.b16 %v316
  %v1237 = vunpack.c.l.b16 %v317
  %v1238 = vunpack.c.l.b16 %v318
  %v1239 = vunpack.c.l.b16 %v319
  %v1240 = vunpack.c.l.b16 %v320
  %v1241 = vunpack.c.l.b16 %v321
  %v1242 = vunpack.c.l.b16 %v322
  %v1243 = vunpack.c.l.b16 %v323
  %v1244 = vunpack.c.l.b16 %v324
  %v1245 = vunpack.c.l.b16 %v325
  %v1246 = vunpack.c.l.b16 %v326
  %v1247 = vunpack.c.l.b16 %v327
  %v1248 = vunpack.c.l.b16 %v328
  %v1249 = vunpack.c.l.b16 %v329
  %v1250 = vunpack.c.l.b16 %v330
  %v1251 = vunpack.c.l.b16 %v331
  %v1252 = vunpack.c.l.b16 %v332
  %v1253 = vunpack.c.l.b16 %v333
  %v1254 = vunpack.c.l.b16 %v334
  %v1255 = vunpack.c.l.b16 %v335
  %v1256 = vunpack.c.l.b16 %v336
  %v1257 = vunpack.c.l.b16 %v337
  %v1258 = vunpack.c.l.b16 %v338
  %v1259 = vunpack.c.l.b16 %v339
  %v1260 = vunpack.c.l.b16 %v340
  %v1261 = vunpack.c.l.b16 %v341
  %v1262 = vunpack.c.l.b16 %v342
  %v1263 = vunpack.c.l.b16 %v343
  %v1264 = vunpack.c.l.b16 %v344
  %v1265 = vunpack.c.l.b16 %v345
  %v1266 = vunpack.c.l.b16 %v346
  %v1267 = vunpack.c.l.b16 %v347
  %v1268 = vunpack.c.l.b16 %v348
  %v1269 = vunpack.c.l.b16 %v349
  %v1270 = vunpack.c.l.b16 %v350
  %v1271 = vunpack.c.l.b16 %v351
  %v1272 = vunpack.c.l.b16 %v352
  %v1273 = vunpack.c.l.b16 %v353
  %v1274 = vunpack.c.l.b16 %v354
  %v1275 = vunpack.c.l.b16 %v355
  %v1276 = vunpack.c.l.b16 %v356
  %v1277 = vunpack.c.l.b16 %v357
  %v1278 = vunpack.c.l.b16 %v358
  %v1279 = vunpack.c.l.b16 %v359
  %v1280 = vunpack.c.l.b16 %v360
  %v1281 = vunpack.c.l.b16 %v361
  %v1282 = vunpack.c.l.b16 %v362
  %v1283 = vpack.c.b16 %v1084, %v1083
  %v1284 = vpack.c.b16 %v1086, %v1085
  %v1285 = vpack.c.b16 %v1088, %v1087
  %v1286 = vpack.c.b16 %v1090, %v1089
  %v1287 = vpack.c.b16 %v1092, %v1091
  %v1288 = vpack.c.b16 %v1094, %v1093
  %v1289 = vpack.c.b16 %v1096, %v1095
  %v1290 = vpack.c.b16 %v1098, %v1097
  %v1291 = vpack.c.b16 %v1100, %v1099
  %v1292 = vpack.c.b16 %v1102, %v1101
  %v1293 = vpack.c.b16 %v1104, %v1103
  %v1294 = vpack.c.b16 %v1106, %v1105
  %v1295 = vpack.c.b16 %v1108, %v1107
  %v1296 = vpack.c.b16 %v1110, %v1109
  %v1297 = vpack.c.b16 %v1112, %v1111
  %v1298 = vpack.c.b16 %v1114, %v1113
  %v1299 = vpack.c.b16 %v1116, %v1115
  %v1300 = vpack.c.b16 %v1118, %v1117
  %v1301 = vpack.c.b16 %v1120, %v1119
  %v1302 = vpack.c.b16 %v1122, %v1121
  %v1303 = vpack.c.b16 %v1124, %v1123
  %v1304 = vpack.c.b16 %v1126, %v1125
  %v1305 = vpack.c.b16 %v1128, %v1127
  %v1306 = vpack.c.b16 %v1130, %v1129
  %v1307 = vpack.c.b16 %v1132, %v1131
  %v1308 = vpack.c.b16 %v1134, %v1133
  %v1309 = vpack.c.b16 %v1136, %v1135
  %v1310 = vpack.c.b16 %v1138, %v1137
  %v1311 = vpack.c.b16 %v1140, %v1139
  %v1312 = vpack.c.b16 %v1142, %v1141
  %v1313 = vpack.c.b16 %v1144, %v1143
  %v1314 = vpack.c.b16 %v1146, %v1145
  %v1315 = vpack.c.b16 %v1148, %v1147
  %v1316 = vpack.c.b16 %v1150, %v1149
  %v1317 = vpack.c.b16 %v1152, %v1151
  %v1318 = vpack.c.b16 %v1154, %v1153
  %v1319 = vpack.c.b16 %v1156, %v1155
  %v1320 = vpack.c.b16 %v1158, %v1157
  %v1321 = vpack.c.b16 %v1160, %v1159
  %v1322 = vpack.c.b16 %v1162, %v1161
  %v1323 = vpack.c.b16 %v1164, %v1163
  %v1324 = vpack.c.b16 %v1166, %v1165
  %v1325 = vpack.c.b16 %v1168, %v1167
  %v1326 = vpack.c.b16 %v1170, %v1169
  %v1327 = vpack.c.b16 %v1172, %v1171
  %v1328 = vpack.c.b16 %v1174, %v1173
  %v1329 = vpack.c.b16 %v1176, %v1175
  %v1330 = vpack.c.b16 %v1178, %v1177
  %v1331 = vpack.c.b16 %v1180, %v1179
  %v1332 = vpack.c.b16 %v1182, %v1181
  %v1333 = vpack.c.b16 %v1184, %v1183
  %v1334 = vpack.c.b16 %v1186, %v1185
  %v1335 = vpack.c.b16 %v1188, %v1187
  %v1336 = vpack.c.b16 %v1190, %v1189
  %v1337 = vpack.c.b16 %v1192, %v1191
  %v1338 = vpack.c.b16 %v1194, %v1193
  %v1339 = vpack.c.b16 %v1196, %v1195
  %v1340 = vpack.c.b16 %v1198, %v1197
  %v1341 = vpack.c.b16 %v1200, %v1199
  %v1342 = vpack.c.b16 %v1202, %v1201
  %v1343 = vpack.c.b16 %v1204, %v1203
  %v1344 = vpack.c.b16 %v1206, %v1205
  %v1345 = vpack.c.b16 %v1208, %v1207
  %v1346 = vpack.c.b16 %v1210, %v1209
  %v1347 = vpack.c.b16 %v1212, %v1211
  %v1348 = vpack.c.b16 %v1214, %v1213
  %v1349 = vpack.c.b16 %v1216, %v1215
  %v1350 = vpack.c.b16 %v1218, %v1217
  %v1351 = vpack.c.b16 %v1220, %v1219
  %v1352 = vpack.c.b16 %v1222, %v1221
  %v1353 = vpack.c.b16 %v1224, %v1223
  %v1354 = vpack.c.b16 %v1226, %v1225
  %v1355 = vpack.c.b16 %v1228, %v1227
  %v1356 = vpack.c.b16 %v1230, %v1229
  %v1357 = vpack.c.b16 %v1232, %v1231
  %v1358 = vpack.c.b16 %v1234, %v1233
  %v1359 = vpack.c.b16 %v1236, %v1235
  %v1360 = vpack.c.b16 %v1238, %v1237
  %v1361 = vpack.c.b16 %v1240, %v1239
  %v1362 = vpack.c.b16 %v1242, %v1241
  %v1363 = vpack.c.b16 %v1244, %v1243
  %v1364 = vpack.c.b16 %v1246, %v1245
  %v1365 = vpack.c.b16 %v1248, %v1247
  %v1366 = vpack.c.b16 %v1250, %v1249
  %v1367 = vpack.c.b16 %v1252, %v1251
  %v1368 = vpack.c.b16 %v1254, %v1253
  %v1369 = vpack.c.b16 %v1256, %v1255
  %v1370 = vpack.c.b16 %v1258, %v1257
  %v1371 = vpack.c.b16 %v1260, %v1259
  %v1372 = vpack.c.b16 %v1262, %v1261
  %v1373 = vpack.c.b16 %v1264, %v1263
  %v1374 = vpack.c.b16 %v1266, %v1265
  %v1375 = vpack.c.b16 %v1268, %v1267
  %v1376 = vpack.c.b16 %v1270, %v1269
  %v1377 = vpack.c.b16 %v1272, %v1271
  %v1378 = vpack.c.b16 %v1274, %v1273
  %v1379 = vpack.c.b16 %v1276, %v1275
  %v1380 = vpack.c.b16 %v1278, %v1277
  %v1381 = vpack.c.b16 %v1280, %v1279
  %v1382 = vpack.c.b16 %v1282, %v1281
  %vm1483 = vcmask 523264
  %v1485 = vsel %vm1483, %v695, 0
  %v1488 = vsel %vm1483, %v708, 0
  %v1491 = vsel %vm1483, %v721, 0
  %v1494 = vsel %vm1483, %v734, 0
  %v1497 = vsel %vm1483, %v747, 0
  %v1500 = vsel %vm1483, %v760, 0
  %v1503 = vsel %vm1483, %v773, 0
  %v1506 = vsel %vm1483, %v786, 0
  %1508 = vmatprep.subr.bf16.mxu0 0
  %1509 = vmatpush1.bf16.msra.mxu0 %v1283
  %1510 = vmatprep.subr.bf16.mxu0 0
  %1511 = vmatpush1.bf16.msra.mxu0 %v1284
  %1512 = vmatprep.subr.bf16.mxu0 0
  %1513 = vmatpush1.bf16.msra.mxu0 %v1285
  %1514 = vmatprep.subr.bf16.mxu0 0
  %1515 = vmatpush1.bf16.msra.mxu0 %v1286
  %1516 = vmatprep.subr.bf16.mxu0 0
  %1517 = vmatpush1.bf16.msra.mxu0 %v1287
  %1518 = vmatprep.subr.bf16.mxu0 0
  %1519 = vmatpush1.bf16.msra.mxu0 %v1288
  %1520 = vmatprep.subr.bf16.mxu0 0
  %1521 = vmatpush1.bf16.msra.mxu0 %v1289
  %1522 = vmatprep.subr.bf16.mxu0 0
  %1523 = vmatpush1.bf16.msra.mxu0 %v1290
  %1524 = vmatprep.subr.bf16.mxu0 0
  %1525 = vmatpush1.bf16.msra.mxu0 %v1291
  %1526 = vmatprep.subr.bf16.mxu0 0
  %1527 = vmatpush1.bf16.msra.mxu0 %v1292
  %1528 = vmatprep.subr.bf16.mxu0 0
  %1529 = vmatpush1.bf16.msra.mxu0 %v1293
  %1530 = vmatprep.subr.bf16.mxu0 0
  %1531 = vmatpush1.bf16.msra.mxu0 %v1294
  %1532 = vmatprep.subr.bf16.mxu0 0
  %1533 = vmatpush1.bf16.msra.mxu0 %v1295
  %1534 = vmatprep.subr.bf16.mxu0 0
  %1535 = vmatpush1.bf16.msra.mxu0 %v1296
  %1536 = vmatprep.subr.bf16.mxu0 0
  %1537 = vmatpush1.bf16.msra.mxu0 %v1297
  %1538 = vmatprep.subr.bf16.mxu0 0
  %1539 = vmatpush1.bf16.msra.mxu0 %v1298
  %1540 = vmatprep.mubr.bf16.mxu0 %v684
  %1541 = vmatmul.mubr.bf16.gmra.mrb[0].mxu0 %v683
  %v1542 = vpop.f32.mrb[0].mxu0
  %v1543 = vadd.f32 0.0, %v1542
  %v1544 = vpop.f32.mrb[0].mxu0
  %v1545 = vpop.f32.mrb[0].mxu0
  %v1546 = vadd.f32 0.0, %v1545
  %v1547 = vpop.f32.mrb[0].mxu0
  %1548 = vmatprep.mubr.bf16.mxu0 %v697
  %1549 = vmatmul.mubr.bf16.gmra.mrb[0].mxu0 %v696
  %v1550 = vpop.f32.mrb[0].mxu0
  %v1551 = vadd.f32 0.0, %v1550
  %v1552 = vpop.f32.mrb[0].mxu0
  %v1553 = vpop.f32.mrb[0].mxu0
  %v1554 = vadd.f32 0.0, %v1553
  %v1555 = vpop.f32.mrb[0].mxu0
  %1556 = vmatprep.mubr.bf16.mxu0 %v710
  %1557 = vmatmul.mubr.bf16.gmra.mrb[0].mxu0 %v709
  %v1558 = vpop.f32.mrb[0].mxu0
  %v1559 = vadd.f32 0.0, %v1558
  %v1560 = vpop.f32.mrb[0].mxu0
  %v1561 = vpop.f32.mrb[0].mxu0
  %v1562 = vadd.f32 0.0, %v1561
  %v1563 = vpop.f32.mrb[0].mxu0
  %1564 = vmatprep.mubr.bf16.mxu0 %v723
  %1565 = vmatmul.mubr.bf16.gmra.mrb[0].mxu0 %v722
  %v1566 = vpop.f32.mrb[0].mxu0
  %v1567 = vadd.f32 0.0, %v1566
  %v1568 = vpop.f32.mrb[0].mxu0
  %v1569 = vpop.f32.mrb[0].mxu0
  %v1570 = vadd.f32 0.0, %v1569
  %v1571 = vpop.f32.mrb[0].mxu0
  %1572 = vmatprep.mubr.bf16.mxu0 %v736
  %1573 = vmatmul.mubr.bf16.gmra.mrb[0].mxu0 %v735
  %v1574 = vpop.f32.mrb[0].mxu0
  %v1575 = vadd.f32 0.0, %v1574
  %v1576 = vpop.f32.mrb[0].mxu0
  %v1577 = vpop.f32.mrb[0].mxu0
  %v1578 = vadd.f32 0.0, %v1577
  %v1579 = vpop.f32.mrb[0].mxu0
  %1580 = vmatprep.mubr.bf16.mxu0 %v749
  %1581 = vmatmul.mubr.bf16.gmra.mrb[0].mxu0 %v748
  %v1582 = vpop.f32.mrb[0].mxu0
  %v1583 = vadd.f32 0.0, %v1582
  %v1584 = vpop.f32.mrb[0].mxu0
  %v1585 = vpop.f32.mrb[0].mxu0
  %v1586 = vadd.f32 0.0, %v1585
  %v1587 = vpop.f32.mrb[0].mxu0
  %1588 = vmatprep.mubr.bf16.mxu0 %v762
  %1589 = vmatmul.mubr.bf16.gmra.mrb[0].mxu0 %v761
  %v1590 = vpop.f32.mrb[0].mxu0
  %v1591 = vadd.f32 0.0, %v1590
  %v1592 = vpop.f32.mrb[0].mxu0
  %v1593 = vpop.f32.mrb[0].mxu0
  %v1594 = vadd.f32 0.0, %v1593
  %v1595 = vpop.f32.mrb[0].mxu0
  %1596 = vmatprep.mubr.bf16.mxu0 %v775
  %1597 = vmatmul.mubr.bf16.gmra.mrb[0].mxu0 %v774
  %v1598 = vpop.f32.mrb[0].mxu0
  %v1599 = vadd.f32 0.0, %v1598
  %v1600 = vpop.f32.mrb[0].mxu0
  %v1601 = vpop.f32.mrb[0].mxu0
  %v1602 = vadd.f32 0.0, %v1601
  %v1603 = vpop.f32.mrb[0].mxu0
  %1604 = vdwg.mxu0
  %1605 = vmatprep.subr.bf16.mxu0 0
  %1606 = vmatpush1.bf16.msra.mxu0 %v1299
  %1607 = vmatprep.subr.bf16.mxu0 0
  %1608 = vmatpush1.bf16.msra.mxu0 %v1300
  %1609 = vmatprep.subr.bf16.mxu0 0
  %1610 = vmatpush1.bf16.msra.mxu0 %v1301
  %1611 = vmatprep.subr.bf16.mxu0 0
  %1612 = vmatpush1.bf16.msra.mxu0 %v1302
  %1613 = vmatprep.subr.bf16.mxu0 0
  %1614 = vmatpush1.bf16.msra.mxu0 %v1303
  %1615 = vmatprep.subr.bf16.mxu0 0
  %1616 = vmatpush1.bf16.msra.mxu0 %v1304
  %1617 = vmatprep.subr.bf16.mxu0 0
  %1618 = vmatpush1.bf16.msra.mxu0 %v1305
  %1619 = vmatprep.subr.bf16.mxu0 0
  %1620 = vmatpush1.bf16.msra.mxu0 %v1306
  %1621 = vmatprep.subr.bf16.mxu0 0
  %1622 = vmatpush1.bf16.msra.mxu0 %v1307
  %1623 = vmatprep.subr.bf16.mxu0 0
  %1624 = vmatpush1.bf16.msra.mxu0 %v1308
  %1625 = vmatprep.subr.bf16.mxu0 0
  %1626 = vmatpush1.bf16.msra.mxu0 %v1309
  %1627 = vmatprep.subr.bf16.mxu0 0
  %1628 = vmatpush1.bf16.msra.mxu0 %v1310
  %1629 = vmatprep.subr.bf16.mxu0 0
  %1630 = vmatpush1.bf16.msra.mxu0 %v1311
  %1631 = vmatprep.subr.bf16.mxu0 0
  %1632 = vmatpush1.bf16.msra.mxu0 %v1312
  %1633 = vmatprep.subr.bf16.mxu0 0
  %1634 = vmatpush1.bf16.msra.mxu0 %v1313
  %1635 = vmatprep.subr.bf16.mxu0 0
  %1636 = vmatpush1.bf16.msra.mxu0 %v1314
  %1637 = vmatprep.mubr.bf16.mxu0 %v686
  %1638 = vmatmul.mubr.bf16.gmra.mrb[0].mxu0 %v685
  %v1639 = vpop.f32.mrb[0].mxu0
  %v1640 = vadd.f32 %v1543, %v1639
  %v1641 = vpop.f32.mrb[0].mxu0
  %v1642 = vpop.f32.mrb[0].mxu0
  %v1643 = vadd.f32 %v1546, %v1642
  %v1644 = vpop.f32.mrb[0].mxu0
  %1645 = vmatprep.mubr.bf16.mxu0 %v699
  %1646 = vmatmul.mubr.bf16.gmra.mrb[0].mxu0 %v698
  %v1647 = vpop.f32.mrb[0].mxu0
  %v1648 = vadd.f32 %v1551, %v1647
  %v1649 = vpop.f32.mrb[0].mxu0
  %v1650 = vpop.f32.mrb[0].mxu0
  %v1651 = vadd.f32 %v1554, %v1650
  %v1652 = vpop.f32.mrb[0].mxu0
  %1653 = vmatprep.mubr.bf16.mxu0 %v712
  %1654 = vmatmul.mubr.bf16.gmra.mrb[0].mxu0 %v711
  %v1655 = vpop.f32.mrb[0].mxu0
  %v1656 = vadd.f32 %v1559, %v1655
  %v1657 = vpop.f32.mrb[0].mxu0
  %v1658 = vpop.f32.mrb[0].mxu0
  %v1659 = vadd.f32 %v1562, %v1658
  %v1660 = vpop.f32.mrb[0].mxu0
  %1661 = vmatprep.mubr.bf16.mxu0 %v725
  %1662 = vmatmul.mubr.bf16.gmra.mrb[0].mxu0 %v724
  %v1663 = vpop.f32.mrb[0].mxu0
  %v1664 = vadd.f32 %v1567, %v1663
  %v1665 = vpop.f32.mrb[0].mxu0
  %v1666 = vpop.f32.mrb[0].mxu0
  %v1667 = vadd.f32 %v1570, %v1666
  %v1668 = vpop.f32.mrb[0].mxu0
  %1669 = vmatprep.mubr.bf16.mxu0 %v738
  %1670 = vmatmul.mubr.bf16.gmra.mrb[0].mxu0 %v737
  %v1671 = vpop.f32.mrb[0].mxu0
  %v1672 = vadd.f32 %v1575, %v1671
  %v1673 = vpop.f32.mrb[0].mxu0
  %v1674 = vpop.f32.mrb[0].mxu0
  %v1675 = vadd.f32 %v1578, %v1674
  %v1676 = vpop.f32.mrb[0].mxu0
  %1677 = vmatprep.mubr.bf16.mxu0 %v751
  %1678 = vmatmul.mubr.bf16.gmra.mrb[0].mxu0 %v750
  %v1679 = vpop.f32.mrb[0].mxu0
  %v1680 = vadd.f32 %v1583, %v1679
  %v1681 = vpop.f32.mrb[0].mxu0
  %v1682 = vpop.f32.mrb[0].mxu0
  %v1683 = vadd.f32 %v1586, %v1682
  %v1684 = vpop.f32.mrb[0].mxu0
  %1685 = vmatprep.mubr.bf16.mxu0 %v764
  %1686 = vmatmul.mubr.bf16.gmra.mrb[0].mxu0 %v763
  %v1687 = vpop.f32.mrb[0].mxu0
  %v1688 = vadd.f32 %v1591, %v1687
  %v1689 = vpop.f32.mrb[0].mxu0
  %v1690 = vpop.f32.mrb[0].mxu0
  %v1691 = vadd.f32 %v1594, %v1690
  %v1692 = vpop.f32.mrb[0].mxu0
  %1693 = vmatprep.mubr.bf16.mxu0 %v777
  %1694 = vmatmul.mubr.bf16.gmra.mrb[0].mxu0 %v776
  %v1695 = vpop.f32.mrb[0].mxu0
  %v1696 = vadd.f32 %v1599, %v1695
  %v1697 = vpop.f32.mrb[0].mxu0
  %v1698 = vpop.f32.mrb[0].mxu0
  %v1699 = vadd.f32 %v1602, %v1698
  %v1700 = vpop.f32.mrb[0].mxu0
  %1701 = vdwg.mxu0
  %1702 = vmatprep.subr.bf16.mxu0 0
  %1703 = vmatpush1.bf16.msra.mxu0 %v1315
  %1704 = vmatprep.subr.bf16.mxu0 0
  %1705 = vmatpush1.bf16.msra.mxu0 %v1316
  %1706 = vmatprep.subr.bf16.mxu0 0
  %1707 = vmatpush1.bf16.msra.mxu0 %v1317
  %1708 = vmatprep.subr.bf16.mxu0 0
  %1709 = vmatpush1.bf16.msra.mxu0 %v1318
  %1710 = vmatprep.subr.bf16.mxu0 0
  %1711 = vmatpush1.bf16.msra.mxu0 %v1319
  %1712 = vmatprep.subr.bf16.mxu0 0
  %1713 = vmatpush1.bf16.msra.mxu0 %v1320
  %1714 = vmatprep.subr.bf16.mxu0 0
  %1715 = vmatpush1.bf16.msra.mxu0 %v1321
  %1716 = vmatprep.subr.bf16.mxu0 0
  %1717 = vmatpush1.bf16.msra.mxu0 %v1322
  %1718 = vmatprep.subr.bf16.mxu0 0
  %1719 = vmatpush1.bf16.msra.mxu0 %v1323
  %1720 = vmatprep.subr.bf16.mxu0 0
  %1721 = vmatpush1.bf16.msra.mxu0 %v1324
  %1722 = vmatprep.subr.bf16.mxu0 0
  %1723 = vmatpush1.bf16.msra.mxu0 %v1325
  %1724 = vmatprep.subr.bf16.mxu0 0
  %1725 = vmatpush1.bf16.msra.mxu0 %v1326
  %1726 = vmatprep.subr.bf16.mxu0 0
  %1727 = vmatpush1.bf16.msra.mxu0 %v1327
  %1728 = vmatprep.subr.bf16.mxu0 0
  %1729 = vmatpush1.bf16.msra.mxu0 %v1328
  %1730 = vmatprep.subr.bf16.mxu0 0
  %1731 = vmatpush1.bf16.msra.mxu0 %v1329
  %1732 = vmatprep.subr.bf16.mxu0 0
  %1733 = vmatpush1.bf16.msra.mxu0 %v1330
  %1734 = vmatprep.mubr.bf16.mxu0 %v688
  %1735 = vmatmul.mubr.bf16.gmra.mrb[0].mxu0 %v687
  %v1736 = vpop.f32.mrb[0].mxu0
  %v1737 = vadd.f32 %v1640, %v1736
  %v1738 = vpop.f32.mrb[0].mxu0
  %v1739 = vpop.f32.mrb[0].mxu0
  %v1740 = vadd.f32 %v1643, %v1739
  %v1741 = vpop.f32.mrb[0].mxu0
  %1742 = vmatprep.mubr.bf16.mxu0 %v701
  %1743 = vmatmul.mubr.bf16.gmra.mrb[0].mxu0 %v700
  %v1744 = vpop.f32.mrb[0].mxu0
  %v1745 = vadd.f32 %v1648, %v1744
  %v1746 = vpop.f32.mrb[0].mxu0
  %v1747 = vpop.f32.mrb[0].mxu0
  %v1748 = vadd.f32 %v1651, %v1747
  %v1749 = vpop.f32.mrb[0].mxu0
  %1750 = vmatprep.mubr.bf16.mxu0 %v714
  %1751 = vmatmul.mubr.bf16.gmra.mrb[0].mxu0 %v713
  %v1752 = vpop.f32.mrb[0].mxu0
  %v1753 = vadd.f32 %v1656, %v1752
  %v1754 = vpop.f32.mrb[0].mxu0
  %v1755 = vpop.f32.mrb[0].mxu0
  %v1756 = vadd.f32 %v1659, %v1755
  %v1757 = vpop.f32.mrb[0].mxu0
  %1758 = vmatprep.mubr.bf16.mxu0 %v727
  %1759 = vmatmul.mubr.bf16.gmra.mrb[0].mxu0 %v726
  %v1760 = vpop.f32.mrb[0].mxu0
  %v1761 = vadd.f32 %v1664, %v1760
  %v1762 = vpop.f32.mrb[0].mxu0
  %v1763 = vpop.f32.mrb[0].mxu0
  %v1764 = vadd.f32 %v1667, %v1763
  %v1765 = vpop.f32.mrb[0].mxu0
  %1766 = vmatprep.mubr.bf16.mxu0 %v740
  %1767 = vmatmul.mubr.bf16.gmra.mrb[0].mxu0 %v739
  %v1768 = vpop.f32.mrb[0].mxu0
  %v1769 = vadd.f32 %v1672, %v1768
  %v1770 = vpop.f32.mrb[0].mxu0
  %v1771 = vpop.f32.mrb[0].mxu0
  %v1772 = vadd.f32 %v1675, %v1771
  %v1773 = vpop.f32.mrb[0].mxu0
  %1774 = vmatprep.mubr.bf16.mxu0 %v753
  %1775 = vmatmul.mubr.bf16.gmra.mrb[0].mxu0 %v752
  %v1776 = vpop.f32.mrb[0].mxu0
  %v1777 = vadd.f32 %v1680, %v1776
  %v1778 = vpop.f32.mrb[0].mxu0
  %v1779 = vpop.f32.mrb[0].mxu0
  %v1780 = vadd.f32 %v1683, %v1779
  %v1781 = vpop.f32.mrb[0].mxu0
  %1782 = vmatprep.mubr.bf16.mxu0 %v766
  %1783 = vmatmul.mubr.bf16.gmra.mrb[0].mxu0 %v765
  %v1784 = vpop.f32.mrb[0].mxu0
  %v1785 = vadd.f32 %v1688, %v1784
  %v1786 = vpop.f32.mrb[0].mxu0
  %v1787 = vpop.f32.mrb[0].mxu0
  %v1788 = vadd.f32 %v1691, %v1787
  %v1789 = vpop.f32.mrb[0].mxu0
  %1790 = vmatprep.mubr.bf16.mxu0 %v779
  %1791 = vmatmul.mubr.bf16.gmra.mrb[0].mxu0 %v778
  %v1792 = vpop.f32.mrb[0].mxu0
  %v1793 = vadd.f32 %v1696, %v1792
  %v1794 = vpop.f32.mrb[0].mxu0
  %v1795 = vpop.f32.mrb[0].mxu0
  %v1796 = vadd.f32 %v1699, %v1795
  %v1797 = vpop.f32.mrb[0].mxu0
  %1798 = vdwg.mxu0
  %1799 = vmatprep.subr.bf16.mxu0 0
  %1800 = vmatpush1.bf16.msra.mxu0 %v1331
  %1801 = vmatprep.subr.bf16.mxu0 0
  %1802 = vmatpush1.bf16.msra.mxu0 %v1332
  %1803 = vmatprep.subr.bf16.mxu0 0
  %1804 = vmatpush1.bf16.msra.mxu0 %v1333
  %1805 = vmatprep.subr.bf16.mxu0 0
  %1806 = vmatpush1.bf16.msra.mxu0 %v1334
  %1807 = vmatprep.subr.bf16.mxu0 0
  %1808 = vmatpush1.bf16.msra.mxu0 %v1335
  %1809 = vmatprep.subr.bf16.mxu0 0
  %1810 = vmatpush1.bf16.msra.mxu0 %v1336
  %1811 = vmatprep.subr.bf16.mxu0 0
  %1812 = vmatpush1.bf16.msra.mxu0 %v1337
  %1813 = vmatprep.subr.bf16.mxu0 0
  %1814 = vmatpush1.bf16.msra.mxu0 %v1338
  %1815 = vmatprep.subr.bf16.mxu0 0
  %1816 = vmatpush1.bf16.msra.mxu0 %v1339
  %1817 = vmatprep.subr.bf16.mxu0 0
  %1818 = vmatpush1.bf16.msra.mxu0 %v1340
  %1819 = vmatprep.subr.bf16.mxu0 0
  %1820 = vmatpush1.bf16.msra.mxu0 %v1341
  %1821 = vmatprep.subr.bf16.mxu0 0
  %1822 = vmatpush1.bf16.msra.mxu0 %v1342
  %1823 = vmatprep.subr.bf16.mxu0 0
  %1824 = vmatpush1.bf16.msra.mxu0 %v1343
  %1825 = vmatprep.subr.bf16.mxu0 0
  %1826 = vmatpush1.bf16.msra.mxu0 %v1344
  %1827 = vmatprep.subr.bf16.mxu0 0
  %1828 = vmatpush1.bf16.msra.mxu0 %v1345
  %1829 = vmatprep.subr.bf16.mxu0 0
  %1830 = vmatpush1.bf16.msra.mxu0 %v1346
  %1831 = vmatprep.mubr.bf16.mxu0 %v690
  %1832 = vmatmul.mubr.bf16.gmra.mrb[0].mxu0 %v689
  %v1833 = vpop.f32.mrb[0].mxu0
  %v1834 = vadd.f32 %v1737, %v1833
  %v1835 = vpop.f32.mrb[0].mxu0
  %v1836 = vpop.f32.mrb[0].mxu0
  %v1837 = vadd.f32 %v1740, %v1836
  %v1838 = vpop.f32.mrb[0].mxu0
  %1839 = vmatprep.mubr.bf16.mxu0 %v703
  %1840 = vmatmul.mubr.bf16.gmra.mrb[0].mxu0 %v702
  %v1841 = vpop.f32.mrb[0].mxu0
  %v1842 = vadd.f32 %v1745, %v1841
  %v1843 = vpop.f32.mrb[0].mxu0
  %v1844 = vpop.f32.mrb[0].mxu0
  %v1845 = vadd.f32 %v1748, %v1844
  %v1846 = vpop.f32.mrb[0].mxu0
  %1847 = vmatprep.mubr.bf16.mxu0 %v716
  %1848 = vmatmul.mubr.bf16.gmra.mrb[0].mxu0 %v715
  %v1849 = vpop.f32.mrb[0].mxu0
  %v1850 = vadd.f32 %v1753, %v1849
  %v1851 = vpop.f32.mrb[0].mxu0
  %v1852 = vpop.f32.mrb[0].mxu0
  %v1853 = vadd.f32 %v1756, %v1852
  %v1854 = vpop.f32.mrb[0].mxu0
  %1855 = vmatprep.mubr.bf16.mxu0 %v729
  %1856 = vmatmul.mubr.bf16.gmra.mrb[0].mxu0 %v728
  %v1857 = vpop.f32.mrb[0].mxu0
  %v1858 = vadd.f32 %v1761, %v1857
  %v1859 = vpop.f32.mrb[0].mxu0
  %v1860 = vpop.f32.mrb[0].mxu0
  %v1861 = vadd.f32 %v1764, %v1860
  %v1862 = vpop.f32.mrb[0].mxu0
  %1863 = vmatprep.mubr.bf16.mxu0 %v742
  %1864 = vmatmul.mubr.bf16.gmra.mrb[0].mxu0 %v741
  %v1865 = vpop.f32.mrb[0].mxu0
  %v1866 = vadd.f32 %v1769, %v1865
  %v1867 = vpop.f32.mrb[0].mxu0
  %v1868 = vpop.f32.mrb[0].mxu0
  %v1869 = vadd.f32 %v1772, %v1868
  %v1870 = vpop.f32.mrb[0].mxu0
  %1871 = vmatprep.mubr.bf16.mxu0 %v755
  %1872 = vmatmul.mubr.bf16.gmra.mrb[0].mxu0 %v754
  %v1873 = vpop.f32.mrb[0].mxu0
  %v1874 = vadd.f32 %v1777, %v1873
  %v1875 = vpop.f32.mrb[0].mxu0
  %v1876 = vpop.f32.mrb[0].mxu0
  %v1877 = vadd.f32 %v1780, %v1876
  %v1878 = vpop.f32.mrb[0].mxu0
  %1879 = vmatprep.mubr.bf16.mxu0 %v768
  %1880 = vmatmul.mubr.bf16.gmra.mrb[0].mxu0 %v767
  %v1881 = vpop.f32.mrb[0].mxu0
  %v1882 = vadd.f32 %v1785, %v1881
  %v1883 = vpop.f32.mrb[0].mxu0
  %v1884 = vpop.f32.mrb[0].mxu0
  %v1885 = vadd.f32 %v1788, %v1884
  %v1886 = vpop.f32.mrb[0].mxu0
  %1887 = vmatprep.mubr.bf16.mxu0 %v781
  %1888 = vmatmul.mubr.bf16.gmra.mrb[0].mxu0 %v780
  %v1889 = vpop.f32.mrb[0].mxu0
  %v1890 = vadd.f32 %v1793, %v1889
  %v1891 = vpop.f32.mrb[0].mxu0
  %v1892 = vpop.f32.mrb[0].mxu0
  %v1893 = vadd.f32 %v1796, %v1892
  %v1894 = vpop.f32.mrb[0].mxu0
  %1895 = vdwg.mxu0
  %1896 = vmatprep.subr.bf16.mxu0 0
  %1897 = vmatpush1.bf16.msra.mxu0 %v1347
  %1898 = vmatprep.subr.bf16.mxu0 0
  %1899 = vmatpush1.bf16.msra.mxu0 %v1348
  %1900 = vmatprep.subr.bf16.mxu0 0
  %1901 = vmatpush1.bf16.msra.mxu0 %v1349
  %1902 = vmatprep.subr.bf16.mxu0 0
  %1903 = vmatpush1.bf16.msra.mxu0 %v1350
  %1904 = vmatprep.subr.bf16.mxu0 0
  %1905 = vmatpush1.bf16.msra.mxu0 %v1351
  %1906 = vmatprep.subr.bf16.mxu0 0
  %1907 = vmatpush1.bf16.msra.mxu0 %v1352
  %1908 = vmatprep.subr.bf16.mxu0 0
  %1909 = vmatpush1.bf16.msra.mxu0 %v1353
  %1910 = vmatprep.subr.bf16.mxu0 0
  %1911 = vmatpush1.bf16.msra.mxu0 %v1354
  %1912 = vmatprep.subr.bf16.mxu0 0
  %1913 = vmatpush1.bf16.msra.mxu0 %v1355
  %1914 = vmatprep.subr.bf16.mxu0 0
  %1915 = vmatpush1.bf16.msra.mxu0 %v1356
  %1916 = vmatprep.subr.bf16.mxu0 0
  %1917 = vmatpush1.bf16.msra.mxu0 %v1357
  %1918 = vmatprep.subr.bf16.mxu0 0
  %1919 = vmatpush1.bf16.msra.mxu0 %v1358
  %1920 = vmatprep.subr.bf16.mxu0 0
  %1921 = vmatpush1.bf16.msra.mxu0 %v1359
  %1922 = vmatprep.subr.bf16.mxu0 0
  %1923 = vmatpush1.bf16.msra.mxu0 %v1360
  %1924 = vmatprep.subr.bf16.mxu0 0
  %1925 = vmatpush1.bf16.msra.mxu0 %v1361
  %1926 = vmatprep.subr.bf16.mxu0 0
  %1927 = vmatpush1.bf16.msra.mxu0 %v1362
  %1928 = vmatprep.mubr.bf16.mxu0 %v692
  %1929 = vmatmul.mubr.bf16.gmra.mrb[0].mxu0 %v691
  %v1930 = vpop.f32.mrb[0].mxu0
  %v1931 = vadd.f32 %v1834, %v1930
  %v1932 = vpop.f32.mrb[0].mxu0
  %v1933 = vpop.f32.mrb[0].mxu0
  %v1934 = vadd.f32 %v1837, %v1933
  %v1935 = vpop.f32.mrb[0].mxu0
  %1936 = vmatprep.mubr.bf16.mxu0 %v705
  %1937 = vmatmul.mubr.bf16.gmra.mrb[0].mxu0 %v704
  %v1938 = vpop.f32.mrb[0].mxu0
  %v1939 = vadd.f32 %v1842, %v1938
  %v1940 = vpop.f32.mrb[0].mxu0
  %v1941 = vpop.f32.mrb[0].mxu0
  %v1942 = vadd.f32 %v1845, %v1941
  %v1943 = vpop.f32.mrb[0].mxu0
  %1944 = vmatprep.mubr.bf16.mxu0 %v718
  %1945 = vmatmul.mubr.bf16.gmra.mrb[0].mxu0 %v717
  %v1946 = vpop.f32.mrb[0].mxu0
  %v1947 = vadd.f32 %v1850, %v1946
  %v1948 = vpop.f32.mrb[0].mxu0
  %v1949 = vpop.f32.mrb[0].mxu0
  %v1950 = vadd.f32 %v1853, %v1949
  %v1951 = vpop.f32.mrb[0].mxu0
  %1952 = vmatprep.mubr.bf16.mxu0 %v731
  %1953 = vmatmul.mubr.bf16.gmra.mrb[0].mxu0 %v730
  %v1954 = vpop.f32.mrb[0].mxu0
  %v1955 = vadd.f32 %v1858, %v1954
  %v1956 = vpop.f32.mrb[0].mxu0
  %v1957 = vpop.f32.mrb[0].mxu0
  %v1958 = vadd.f32 %v1861, %v1957
  %v1959 = vpop.f32.mrb[0].mxu0
  %1960 = vmatprep.mubr.bf16.mxu0 %v744
  %1961 = vmatmul.mubr.bf16.gmra.mrb[0].mxu0 %v743
  %v1962 = vpop.f32.mrb[0].mxu0
  %v1963 = vadd.f32 %v1866, %v1962
  %v1964 = vpop.f32.mrb[0].mxu0
  %v1965 = vpop.f32.mrb[0].mxu0
  %v1966 = vadd.f32 %v1869, %v1965
  %v1967 = vpop.f32.mrb[0].mxu0
  %1968 = vmatprep.mubr.bf16.mxu0 %v757
  %1969 = vmatmul.mubr.bf16.gmra.mrb[0].mxu0 %v756
  %v1970 = vpop.f32.mrb[0].mxu0
  %v1971 = vadd.f32 %v1874, %v1970
  %v1972 = vpop.f32.mrb[0].mxu0
  %v1973 = vpop.f32.mrb[0].mxu0
  %v1974 = vadd.f32 %v1877, %v1973
  %v1975 = vpop.f32.mrb[0].mxu0
  %1976 = vmatprep.mubr.bf16.mxu0 %v770
  %1977 = vmatmul.mubr.bf16.gmra.mrb[0].mxu0 %v769
  %v1978 = vpop.f32.mrb[0].mxu0
  %v1979 = vadd.f32 %v1882, %v1978
  %v1980 = vpop.f32.mrb[0].mxu0
  %v1981 = vpop.f32.mrb[0].mxu0
  %v1982 = vadd.f32 %v1885, %v1981
  %v1983 = vpop.f32.mrb[0].mxu0
  %1984 = vmatprep.mubr.bf16.mxu0 %v783
  %1985 = vmatmul.mubr.bf16.gmra.mrb[0].mxu0 %v782
  %v1986 = vpop.f32.mrb[0].mxu0
  %v1987 = vadd.f32 %v1890, %v1986
  %v1988 = vpop.f32.mrb[0].mxu0
  %v1989 = vpop.f32.mrb[0].mxu0
  %v1990 = vadd.f32 %v1893, %v1989
  %v1991 = vpop.f32.mrb[0].mxu0
  %1992 = vdwg.mxu0
  %1993 = vmatprep.subr.bf16.mxu0 0
  %1994 = vmatpush1.bf16.msra.mxu0 %v1363
  %1995 = vmatprep.subr.bf16.mxu0 0
  %1996 = vmatpush1.bf16.msra.mxu0 %v1364
  %1997 = vmatprep.subr.bf16.mxu0 0
  %1998 = vmatpush1.bf16.msra.mxu0 %v1365
  %1999 = vmatprep.subr.bf16.mxu0 0
  %2000 = vmatpush1.bf16.msra.mxu0 %v1366
  %2001 = vmatprep.subr.bf16.mxu0 0
  %2002 = vmatpush1.bf16.msra.mxu0 %v1367
  %2003 = vmatprep.subr.bf16.mxu0 0
  %2004 = vmatpush1.bf16.msra.mxu0 %v1368
  %2005 = vmatprep.subr.bf16.mxu0 0
  %2006 = vmatpush1.bf16.msra.mxu0 %v1369
  %2007 = vmatprep.subr.bf16.mxu0 0
  %2008 = vmatpush1.bf16.msra.mxu0 %v1370
  %2009 = vmatprep.subr.bf16.mxu0 0
  %2010 = vmatpush1.bf16.msra.mxu0 %v1371
  %2011 = vmatprep.subr.bf16.mxu0 0
  %2012 = vmatpush1.bf16.msra.mxu0 %v1372
  %2013 = vmatprep.subr.bf16.mxu0 0
  %2014 = vmatpush1.bf16.msra.mxu0 %v1373
  %2015 = vmatprep.subr.bf16.mxu0 0
  %2016 = vmatpush1.bf16.msra.mxu0 %v1374
  %2017 = vmatprep.subr.bf16.mxu0 0
  %2018 = vmatpush1.bf16.msra.mxu0 %v1375
  %2019 = vmatprep.subr.bf16.mxu0 0
  %2020 = vmatpush1.bf16.msra.mxu0 %v1376
  %2021 = vmatprep.subr.bf16.mxu0 0
  %2022 = vmatpush1.bf16.msra.mxu0 %v1377
  %2023 = vmatprep.subr.bf16.mxu0 0
  %2024 = vmatpush1.bf16.msra.mxu0 %v1378
  %2025 = vmatprep.mubr.bf16.mxu0 %v694
  %2026 = vmatmul.mubr.bf16.gmra.mrb[0].mxu0 %v693
  %v2027 = vpop.f32.mrb[0].mxu0
  %v2028 = vadd.f32 %v1931, %v2027
  %v2029 = vpop.f32.mrb[0].mxu0
  %v2030 = vpop.f32.mrb[0].mxu0
  %v2031 = vadd.f32 %v1934, %v2030
  %v2032 = vpop.f32.mrb[0].mxu0
  %2033 = vmatprep.mubr.bf16.mxu0 %v707
  %2034 = vmatmul.mubr.bf16.gmra.mrb[0].mxu0 %v706
  %v2035 = vpop.f32.mrb[0].mxu0
  %v2036 = vadd.f32 %v1939, %v2035
  %v2037 = vpop.f32.mrb[0].mxu0
  %v2038 = vpop.f32.mrb[0].mxu0
  %v2039 = vadd.f32 %v1942, %v2038
  %v2040 = vpop.f32.mrb[0].mxu0
  %2041 = vmatprep.mubr.bf16.mxu0 %v720
  %2042 = vmatmul.mubr.bf16.gmra.mrb[0].mxu0 %v719
  %v2043 = vpop.f32.mrb[0].mxu0
  %v2044 = vadd.f32 %v1947, %v2043
  %v2045 = vpop.f32.mrb[0].mxu0
  %v2046 = vpop.f32.mrb[0].mxu0
  %v2047 = vadd.f32 %v1950, %v2046
  %v2048 = vpop.f32.mrb[0].mxu0
  %2049 = vmatprep.mubr.bf16.mxu0 %v733
  %2050 = vmatmul.mubr.bf16.gmra.mrb[0].mxu0 %v732
  %v2051 = vpop.f32.mrb[0].mxu0
  %v2052 = vadd.f32 %v1955, %v2051
  %v2053 = vpop.f32.mrb[0].mxu0
  %v2054 = vpop.f32.mrb[0].mxu0
  %v2055 = vadd.f32 %v1958, %v2054
  %v2056 = vpop.f32.mrb[0].mxu0
  %2057 = vmatprep.mubr.bf16.mxu0 %v746
  %2058 = vmatmul.mubr.bf16.gmra.mrb[0].mxu0 %v745
  %v2059 = vpop.f32.mrb[0].mxu0
  %v2060 = vadd.f32 %v1963, %v2059
  %v2061 = vpop.f32.mrb[0].mxu0
  %v2062 = vpop.f32.mrb[0].mxu0
  %v2063 = vadd.f32 %v1966, %v2062
  %v2064 = vpop.f32.mrb[0].mxu0
  %2065 = vmatprep.mubr.bf16.mxu0 %v759
  %2066 = vmatmul.mubr.bf16.gmra.mrb[0].mxu0 %v758
  %v2067 = vpop.f32.mrb[0].mxu0
  %v2068 = vadd.f32 %v1971, %v2067
  %v2069 = vpop.f32.mrb[0].mxu0
  %v2070 = vpop.f32.mrb[0].mxu0
  %v2071 = vadd.f32 %v1974, %v2070
  %v2072 = vpop.f32.mrb[0].mxu0
  %2073 = vmatprep.mubr.bf16.mxu0 %v772
  %2074 = vmatmul.mubr.bf16.gmra.mrb[0].mxu0 %v771
  %v2075 = vpop.f32.mrb[0].mxu0
  %v2076 = vadd.f32 %v1979, %v2075
  %v2077 = vpop.f32.mrb[0].mxu0
  %v2078 = vpop.f32.mrb[0].mxu0
  %v2079 = vadd.f32 %v1982, %v2078
  %v2080 = vpop.f32.mrb[0].mxu0
  %2081 = vmatprep.mubr.bf16.mxu0 %v785
  %2082 = vmatmul.mubr.bf16.gmra.mrb[0].mxu0 %v784
  %v2083 = vpop.f32.mrb[0].mxu0
  %v2084 = vadd.f32 %v1987, %v2083
  %v2085 = vpop.f32.mrb[0].mxu0
  %v2086 = vpop.f32.mrb[0].mxu0
  %v2087 = vadd.f32 %v1990, %v2086
  %v2088 = vpop.f32.mrb[0].mxu0
  %2089 = vdwg.mxu0
  %2090 = vmatprep.subr.bf16.mxu0 0
  %2091 = vmatpush1.bf16.msra.mxu0 %v1379
  %2092 = vmatprep.subr.bf16.mxu0 0
  %2093 = vmatpush1.bf16.msra.mxu0 %v1380
  %2094 = vmatprep.subr.bf16.mxu0 0
  %2095 = vmatpush1.bf16.msra.mxu0 %v1381
  %2096 = vmatprep.subr.bf16.mxu0 0
  %2097 = vmatpush1.bf16.msra.mxu0 %v1382
  %2098 = vmatprep.subr.bf16.mxu0 0
  %2099 = vmatpush1.bf16.msra.mxu0 0
  %2100 = vmatprep.subr.bf16.mxu0 0
  %2101 = vmatpush1.bf16.msra.mxu0 0
  %2102 = vmatprep.subr.bf16.mxu0 0
  %2103 = vmatpush1.bf16.msra.mxu0 0
  %2104 = vmatprep.subr.bf16.mxu0 0
  %2105 = vmatpush1.bf16.msra.mxu0 0
  %2106 = vmatprep.subr.bf16.mxu0 0
  %2107 = vmatpush1.bf16.msra.mxu0 0
  %2108 = vmatprep.subr.bf16.mxu0 0
  %2109 = vmatpush1.bf16.msra.mxu0 0
  %2110 = vmatprep.subr.bf16.mxu0 0
  %2111 = vmatpush1.bf16.msra.mxu0 0
  %2112 = vmatprep.subr.bf16.mxu0 0
  %2113 = vmatpush1.bf16.msra.mxu0 0
  %2114 = vmatprep.subr.bf16.mxu0 0
  %2115 = vmatpush1.bf16.msra.mxu0 0
  %2116 = vmatprep.subr.bf16.mxu0 0
  %2117 = vmatpush1.bf16.msra.mxu0 0
  %2118 = vmatprep.subr.bf16.mxu0 0
  %2119 = vmatpush1.bf16.msra.mxu0 0
  %2120 = vmatprep.subr.bf16.mxu0 0
  %2121 = vmatpush1.bf16.msra.mxu0 0
  %2122 = vmatprep.mubr.bf16.mxu0 0
  %2123 = vmatmul.mubr.bf16.gmra.mrb[0].mxu0 %v1485
  %v2124 = vpop.f32.mrb[0].mxu0
  %v2125 = vadd.f32 %v2028, %v2124
  %v2126 = vpop.f32.mrb[0].mxu0
  %v2127 = vpop.f32.mrb[0].mxu0
  %v2128 = vadd.f32 %v2031, %v2127
  %v2129 = vpop.f32.mrb[0].mxu0
  %2130 = vmatprep.mubr.bf16.mxu0 0
  %2131 = vmatmul.mubr.bf16.gmra.mrb[0].mxu0 %v1488
  %v2132 = vpop.f32.mrb[0].mxu0
  %v2133 = vadd.f32 %v2036, %v2132
  %v2134 = vpop.f32.mrb[0].mxu0
  %v2135 = vpop.f32.mrb[0].mxu0
  %v2136 = vadd.f32 %v2039, %v2135
  %v2137 = vpop.f32.mrb[0].mxu0
  %2138 = vmatprep.mubr.bf16.mxu0 0
  %2139 = vmatmul.mubr.bf16.gmra.mrb[0].mxu0 %v1491
  %v2140 = vpop.f32.mrb[0].mxu0
  %v2141 = vadd.f32 %v2044, %v2140
  %v2142 = vpop.f32.mrb[0].mxu0
  %v2143 = vpop.f32.mrb[0].mxu0
  %v2144 = vadd.f32 %v2047, %v2143
  %v2145 = vpop.f32.mrb[0].mxu0
  %2146 = vmatprep.mubr.bf16.mxu0 0
  %2147 = vmatmul.mubr.bf16.gmra.mrb[0].mxu0 %v1494
  %v2148 = vpop.f32.mrb[0].mxu0
  %v2149 = vadd.f32 %v2052, %v2148
  %v2150 = vpop.f32.mrb[0].mxu0
  %v2151 = vpop.f32.mrb[0].mxu0
  %v2152 = vadd.f32 %v2055, %v2151
  %v2153 = vpop.f32.mrb[0].mxu0
  %2154 = vmatprep.mubr.bf16.mxu0 0
  %2155 = vmatmul.mubr.bf16.gmra.mrb[0].mxu0 %v1497
  %v2156 = vpop.f32.mrb[0].mxu0
  %v2157 = vadd.f32 %v2060, %v2156
  %v2158 = vpop.f32.mrb[0].mxu0
  %v2159 = vpop.f32.mrb[0].mxu0
  %v2160 = vadd.f32 %v2063, %v2159
  %v2161 = vpop.f32.mrb[0].mxu0
  %2162 = vmatprep.mubr.bf16.mxu0 0
  %2163 = vmatmul.mubr.bf16.gmra.mrb[0].mxu0 %v1500
  %v2164 = vpop.f32.mrb[0].mxu0
  %v2165 = vadd.f32 %v2068, %v2164
  %v2166 = vpop.f32.mrb[0].mxu0
  %v2167 = vpop.f32.mrb[0].mxu0
  %v2168 = vadd.f32 %v2071, %v2167
  %v2169 = vpop.f32.mrb[0].mxu0
  %2170 = vmatprep.mubr.bf16.mxu0 0
  %2171 = vmatmul.mubr.bf16.gmra.mrb[0].mxu0 %v1503
  %v2172 = vpop.f32.mrb[0].mxu0
  %v2173 = vadd.f32 %v2076, %v2172
  %v2174 = vpop.f32.mrb[0].mxu0
  %v2175 = vpop.f32.mrb[0].mxu0
  %v2176 = vadd.f32 %v2079, %v2175
  %v2177 = vpop.f32.mrb[0].mxu0
  %2178 = vmatprep.mubr.bf16.mxu0 0
  %2179 = vmatmul.mubr.bf16.gmra.mrb[0].mxu0 %v1506
  %v2180 = vpop.f32.mrb[0].mxu0
  %v2181 = vadd.f32 %v2084, %v2180
  %v2182 = vpop.f32.mrb[0].mxu0
  %v2183 = vpop.f32.mrb[0].mxu0
  %v2184 = vadd.f32 %v2087, %v2183
  %v2185 = vpop.f32.mrb[0].mxu0
  %2186 = vdwg.mxu0
  %v2187 = vld [vmem:[%s2] sm:$0x1]
  %v2189 = vlaneseq
  %v2190 = vshrl.u32 %v2189, 7
  %v2191 = vsub.s32 0, %v2190
  %v2192 = vrot.slane %v2187, %v2191
  %v2194 = vmul.f32 %v2125, %v2192
  %v2195 = vmul.f32 %v2128, %v2192
  %v2196 = vmul.f32 %v2133, %v2192
  %v2197 = vmul.f32 %v2136, %v2192
  %v2198 = vmul.f32 %v2141, %v2192
  %v2199 = vmul.f32 %v2144, %v2192
  %v2200 = vmul.f32 %v2149, %v2192
  %v2201 = vmul.f32 %v2152, %v2192
  %v2202 = vmul.f32 %v2157, %v2192
  %v2203 = vmul.f32 %v2160, %v2192
  %v2204 = vmul.f32 %v2165, %v2192
  %v2205 = vmul.f32 %v2168, %v2192
  %v2206 = vmul.f32 %v2173, %v2192
  %v2207 = vmul.f32 %v2176, %v2192
  %v2208 = vmul.f32 %v2181, %v2192
  %v2209 = vmul.f32 %v2184, %v2192
  %v2210 = vld [vmem:[%s3] sm:$0x1]
  %v2212 = vlaneseq
  %v2213 = vshrl.u32 %v2212, 7
  %v2214 = vsub.s32 0, %v2213
  %v2215 = vrot.slane %v2210, %v2214
  %v2217 = vadd.f32 %v2194, %v2215
  %v2218 = vadd.f32 %v2195, %v2215
  %v2219 = vadd.f32 %v2196, %v2215
  %v2220 = vadd.f32 %v2197, %v2215
  %v2221 = vadd.f32 %v2198, %v2215
  %v2222 = vadd.f32 %v2199, %v2215
  %v2223 = vadd.f32 %v2200, %v2215
  %v2224 = vadd.f32 %v2201, %v2215
  %v2225 = vadd.f32 %v2202, %v2215
  %v2226 = vadd.f32 %v2203, %v2215
  %v2227 = vadd.f32 %v2204, %v2215
  %v2228 = vadd.f32 %v2205, %v2215
  %v2229 = vadd.f32 %v2206, %v2215
  %v2230 = vadd.f32 %v2207, %v2215
  %v2231 = vadd.f32 %v2208, %v2215
  %v2232 = vadd.f32 %v2209, %v2215
  %v2233 = vmax.f32 %v2217, %v2221
  %v2234 = vmax.f32 %v2218, %v2222
  %v2235 = vmax.f32 %v2219, %v2223
  %v2236 = vmax.f32 %v2220, %v2224
  %v2237 = vmax.f32 %v2233, %v2225
  %v2238 = vmax.f32 %v2234, %v2226
  %v2239 = vmax.f32 %v2235, %v2227
  %v2240 = vmax.f32 %v2236, %v2228
  %v2241 = vmax.f32 %v2237, %v2229
  %v2242 = vmax.f32 %v2238, %v2230
  %v2243 = vmax.f32 %v2239, %v2231
  %v2244 = vmax.f32 %v2240, %v2232
  %v2245 = vmax.f32 %v2241, 0.0
  %v2246 = vmax.f32 %v2242, 0.0
  %v2247 = vmax.f32 %v2243, 0.0
  %v2248 = vmax.f32 %v2244, 0.0
  %v2249 = vpack.c.bf16 %v2246, %v2245
  %v2250 = vpack.c.bf16 %v2248, %v2247
  %v2251 = vld [vmem:[%s4] sm:$0xf]
  %v2252 = vld [vmem:[%s4 + $0x4] sm:$0xf]
  %v2253 = vld [vmem:[%s4 + $0x8] sm:$0xf]
  %v2254 = vld [vmem:[%s4 + $0xc] sm:$0xf]
  %v2255 = vld [vmem:[%s4 + $0x10] sm:$0xf]
  %v2256 = vld [vmem:[%s4 + $0x14] sm:$0xf]
  %v2257 = vld [vmem:[%s4 + $0x18] sm:$0x1]
  %s2258 = scalar_lea.vmem %s4, 28
  %v2259 = vld [vmem:[%s2258] sm:$0xf]
  %v2260 = vld [vmem:[%s2258 + $0x4] sm:$0xf]
  %v2261 = vld [vmem:[%s2258 + $0x8] sm:$0xf]
  %v2262 = vld [vmem:[%s2258 + $0xc] sm:$0xf]
  %v2263 = vld [vmem:[%s2258 + $0x10] sm:$0xf]
  %v2264 = vld [vmem:[%s2258 + $0x14] sm:$0xf]
  %v2265 = vld [vmem:[%s2258 + $0x18] sm:$0x1]
  %v2267 = vrot.slane %v2249, 1
  %v2275 = vunpack.c.l.b16 %v2259
  %v2276 = vunpack.c.l.b16 %v2260
  %v2277 = vunpack.c.l.b16 %v2261
  %v2278 = vunpack.c.l.b16 %v2262
  %v2279 = vunpack.c.l.b16 %v2263
  %v2280 = vunpack.c.l.b16 %v2264
  %v2281 = vunpack.c.l.b16 %v2265
  %v2282 = vpack.c.b16 %v2276, %v2275
  %v2283 = vpack.c.b16 %v2278, %v2277
  %v2284 = vpack.c.b16 %v2280, %v2279
  %v2285 = vpack.c.b16 %v2281, %v2281
  %vm2289 = vcmask 408576
  %v2291 = vsel %vm2289, %v2267, 0
  %vm2293 = vcmask 1040384
  %v2295 = vsel %vm2293, %v2285, 0
  %2297 = vmatprep.subr.bf16.mxu0 0
  %2298 = vmatpush1.bf16.msra.mxu0 %v2282
  %2299 = vmatprep.subr.bf16.mxu0 0
  %2300 = vmatpush1.bf16.msra.mxu0 %v2283
  %2301 = vmatprep.subr.bf16.mxu0 0
  %2302 = vmatpush1.bf16.msra.mxu0 %v2284
  %2303 = vmatprep.subr.bf16.mxu0 0
  %2304 = vmatpush1.bf16.msra.mxu0 %v2295
  %2305 = vmatprep.subr.bf16.mxu0 0
  %2306 = vmatpush1.bf16.msra.mxu0 0
  %2307 = vmatprep.subr.bf16.mxu0 0
  %2308 = vmatpush1.bf16.msra.mxu0 0
  %2309 = vmatprep.subr.bf16.mxu0 0
  %2310 = vmatpush1.bf16.msra.mxu0 0
  %2311 = vmatprep.subr.bf16.mxu0 0
  %2312 = vmatpush1.bf16.msra.mxu0 0
  %2313 = vmatprep.subr.bf16.mxu0 0
  %2314 = vmatpush1.bf16.msra.mxu0 0
  %2315 = vmatprep.subr.bf16.mxu0 0
  %2316 = vmatpush1.bf16.msra.mxu0 0
  %2317 = vmatprep.subr.bf16.mxu0 0
  %2318 = vmatpush1.bf16.msra.mxu0 0
  %2319 = vmatprep.subr.bf16.mxu0 0
  %2320 = vmatpush1.bf16.msra.mxu0 0
  %2321 = vmatprep.subr.bf16.mxu0 0
  %2322 = vmatpush1.bf16.msra.mxu0 0
  %2323 = vmatprep.subr.bf16.mxu0 0
  %2324 = vmatpush1.bf16.msra.mxu0 0
  %2325 = vmatprep.subr.bf16.mxu0 0
  %2326 = vmatpush1.bf16.msra.mxu0 0
  %2327 = vmatprep.subr.bf16.mxu0 0
  %2328 = vmatpush1.bf16.msra.mxu0 0
  %2329 = vmatprep.mubr.bf16.mxu0 0
  %2330 = vmatmul.mubr.bf16.gmra.mrb[0].mxu0 %v2291
  %v2331 = vpop.f32.mrb[0].mxu0
  %v2332 = vadd.f32 0.0, %v2331
  %v2333 = vpop.f32.mrb[0].mxu0
  %v2334 = vpop.f32.mrb[0].mxu0
  %v2335 = vpop.f32.mrb[0].mxu0
  %2336 = vdwg.mxu0
  %v2344 = vunpack.c.l.b16 %v2251
  %v2345 = vunpack.c.l.b16 %v2252
  %v2346 = vunpack.c.l.b16 %v2253
  %v2347 = vunpack.c.l.b16 %v2254
  %v2348 = vunpack.c.l.b16 %v2255
  %v2349 = vunpack.c.l.b16 %v2256
  %v2350 = vunpack.c.l.b16 %v2257
  %v2351 = vpack.c.b16 %v2345, %v2344
  %v2352 = vpack.c.b16 %v2347, %v2346
  %v2353 = vpack.c.b16 %v2349, %v2348
  %v2354 = vpack.c.b16 %v2350, %v2350
  %v2359 = vsel %vm2289, %v2249, 0
  %v2362 = vsel %vm2293, %v2354, 0
  %2364 = vmatprep.subr.bf16.mxu0 0
  %2365 = vmatpush1.bf16.msra.mxu0 %v2351
  %2366 = vmatprep.subr.bf16.mxu0 0
  %2367 = vmatpush1.bf16.msra.mxu0 %v2352
  %2368 = vmatprep.subr.bf16.mxu0 0
  %2369 = vmatpush1.bf16.msra.mxu0 %v2353
  %2370 = vmatprep.subr.bf16.mxu0 0
  %2371 = vmatpush1.bf16.msra.mxu0 %v2362
  %2372 = vmatprep.subr.bf16.mxu0 0
  %2373 = vmatpush1.bf16.msra.mxu0 0
  %2374 = vmatprep.subr.bf16.mxu0 0
  %2375 = vmatpush1.bf16.msra.mxu0 0
  %2376 = vmatprep.subr.bf16.mxu0 0
  %2377 = vmatpush1.bf16.msra.mxu0 0
  %2378 = vmatprep.subr.bf16.mxu0 0
  %2379 = vmatpush1.bf16.msra.mxu0 0
  %2380 = vmatprep.subr.bf16.mxu0 0
  %2381 = vmatpush1.bf16.msra.mxu0 0
  %2382 = vmatprep.subr.bf16.mxu0 0
  %2383 = vmatpush1.bf16.msra.mxu0 0
  %2384 = vmatprep.subr.bf16.mxu0 0
  %2385 = vmatpush1.bf16.msra.mxu0 0
  %2386 = vmatprep.subr.bf16.mxu0 0
  %2387 = vmatpush1.bf16.msra.mxu0 0
  %2388 = vmatprep.subr.bf16.mxu0 0
  %2389 = vmatpush1.bf16.msra.mxu0 0
  %2390 = vmatprep.subr.bf16.mxu0 0
  %2391 = vmatpush1.bf16.msra.mxu0 0
  %2392 = vmatprep.subr.bf16.mxu0 0
  %2393 = vmatpush1.bf16.msra.mxu0 0
  %2394 = vmatprep.subr.bf16.mxu0 0
  %2395 = vmatpush1.bf16.msra.mxu0 0
  %2396 = vmatprep.mubr.bf16.mxu0 0
  %2397 = vmatmul.mubr.bf16.gmra.mrb[0].mxu0 %v2359
  %v2398 = vpop.f32.mrb[0].mxu0
  %v2399 = vadd.f32 %v2332, %v2398
  %v2400 = vpop.f32.mrb[0].mxu0
  %v2401 = vpop.f32.mrb[0].mxu0
  %v2402 = vpop.f32.mrb[0].mxu0
  %2403 = vdwg.mxu0
  %s2404 = scalar_lea.vmem %s4, 56
  %v2405 = vld [vmem:[%s2404] sm:$0xf]
  %v2406 = vld [vmem:[%s2404 + $0x4] sm:$0xf]
  %v2407 = vld [vmem:[%s2404 + $0x8] sm:$0xf]
  %v2408 = vld [vmem:[%s2404 + $0xc] sm:$0xf]
  %v2409 = vld [vmem:[%s2404 + $0x10] sm:$0xf]
  %v2410 = vld [vmem:[%s2404 + $0x14] sm:$0xf]
  %v2411 = vld [vmem:[%s2404 + $0x18] sm:$0x1]
  %v2412 = vrot.slane %v2249, 2
  %v2420 = vunpack.c.l.b16 %v2405
  %v2421 = vunpack.c.l.b16 %v2406
  %v2422 = vunpack.c.l.b16 %v2407
  %v2423 = vunpack.c.l.b16 %v2408
  %v2424 = vunpack.c.l.b16 %v2409
  %v2425 = vunpack.c.l.b16 %v2410
  %v2426 = vunpack.c.l.b16 %v2411
  %v2427 = vpack.c.b16 %v2421, %v2420
  %v2428 = vpack.c.b16 %v2423, %v2422
  %v2429 = vpack.c.b16 %v2425, %v2424
  %v2430 = vpack.c.b16 %v2426, %v2426
  %v2435 = vsel %vm2289, %v2412, 0
  %v2438 = vsel %vm2293, %v2430, 0
  %2440 = vmatprep.subr.bf16.mxu0 0
  %2441 = vmatpush1.bf16.msra.mxu0 %v2427
  %2442 = vmatprep.subr.bf16.mxu0 0
  %2443 = vmatpush1.bf16.msra.mxu0 %v2428
  %2444 = vmatprep.subr.bf16.mxu0 0
  %2445 = vmatpush1.bf16.msra.mxu0 %v2429
  %2446 = vmatprep.subr.bf16.mxu0 0
  %2447 = vmatpush1.bf16.msra.mxu0 %v2438
  %2448 = vmatprep.subr.bf16.mxu0 0
  %2449 = vmatpush1.bf16.msra.mxu0 0
  %2450 = vmatprep.subr.bf16.mxu0 0
  %2451 = vmatpush1.bf16.msra.mxu0 0
  %2452 = vmatprep.subr.bf16.mxu0 0
  %2453 = vmatpush1.bf16.msra.mxu0 0
  %2454 = vmatprep.subr.bf16.mxu0 0
  %2455 = vmatpush1.bf16.msra.mxu0 0
  %2456 = vmatprep.subr.bf16.mxu0 0
  %2457 = vmatpush1.bf16.msra.mxu0 0
  %2458 = vmatprep.subr.bf16.mxu0 0
  %2459 = vmatpush1.bf16.msra.mxu0 0
  %2460 = vmatprep.subr.bf16.mxu0 0
  %2461 = vmatpush1.bf16.msra.mxu0 0
  %2462 = vmatprep.subr.bf16.mxu0 0
  %2463 = vmatpush1.bf16.msra.mxu0 0
  %2464 = vmatprep.subr.bf16.mxu0 0
  %2465 = vmatpush1.bf16.msra.mxu0 0
  %2466 = vmatprep.subr.bf16.mxu0 0
  %2467 = vmatpush1.bf16.msra.mxu0 0
  %2468 = vmatprep.subr.bf16.mxu0 0
  %2469 = vmatpush1.bf16.msra.mxu0 0
  %2470 = vmatprep.subr.bf16.mxu0 0
  %2471 = vmatpush1.bf16.msra.mxu0 0
  %2472 = vmatprep.mubr.bf16.mxu0 0
  %2473 = vmatmul.mubr.bf16.gmra.mrb[0].mxu0 %v2435
  %v2474 = vpop.f32.mrb[0].mxu0
  %v2475 = vadd.f32 0.0, %v2474
  %v2476 = vpop.f32.mrb[0].mxu0
  %v2477 = vpop.f32.mrb[0].mxu0
  %v2478 = vpop.f32.mrb[0].mxu0
  %2479 = vdwg.mxu0
  %v2480 = vadd.f32 %v2399, %v2475
  %s2481 = scalar_lea.vmem %s4, 84
  %v2482 = vld [vmem:[%s2481] sm:$0xf]
  %v2483 = vld [vmem:[%s2481 + $0x4] sm:$0xf]
  %v2484 = vld [vmem:[%s2481 + $0x8] sm:$0xf]
  %v2485 = vld [vmem:[%s2481 + $0xc] sm:$0xf]
  %v2486 = vld [vmem:[%s2481 + $0x10] sm:$0xf]
  %v2487 = vld [vmem:[%s2481 + $0x14] sm:$0xf]
  %v2488 = vld [vmem:[%s2481 + $0x18] sm:$0x1]
  %v2489 = vrot.slane %v2249, 3
  %v2497 = vunpack.c.l.b16 %v2482
  %v2498 = vunpack.c.l.b16 %v2483
  %v2499 = vunpack.c.l.b16 %v2484
  %v2500 = vunpack.c.l.b16 %v2485
  %v2501 = vunpack.c.l.b16 %v2486
  %v2502 = vunpack.c.l.b16 %v2487
  %v2503 = vunpack.c.l.b16 %v2488
  %v2504 = vpack.c.b16 %v2498, %v2497
  %v2505 = vpack.c.b16 %v2500, %v2499
  %v2506 = vpack.c.b16 %v2502, %v2501
  %v2507 = vpack.c.b16 %v2503, %v2503
  %v2512 = vsel %vm2289, %v2489, 0
  %v2515 = vsel %vm2293, %v2507, 0
  %2517 = vmatprep.subr.bf16.mxu0 0
  %2518 = vmatpush1.bf16.msra.mxu0 %v2504
  %2519 = vmatprep.subr.bf16.mxu0 0
  %2520 = vmatpush1.bf16.msra.mxu0 %v2505
  %2521 = vmatprep.subr.bf16.mxu0 0
  %2522 = vmatpush1.bf16.msra.mxu0 %v2506
  %2523 = vmatprep.subr.bf16.mxu0 0
  %2524 = vmatpush1.bf16.msra.mxu0 %v2515
  %2525 = vmatprep.subr.bf16.mxu0 0
  %2526 = vmatpush1.bf16.msra.mxu0 0
  %2527 = vmatprep.subr.bf16.mxu0 0
  %2528 = vmatpush1.bf16.msra.mxu0 0
  %2529 = vmatprep.subr.bf16.mxu0 0
  %2530 = vmatpush1.bf16.msra.mxu0 0
  %2531 = vmatprep.subr.bf16.mxu0 0
  %2532 = vmatpush1.bf16.msra.mxu0 0
  %2533 = vmatprep.subr.bf16.mxu0 0
  %2534 = vmatpush1.bf16.msra.mxu0 0
  %2535 = vmatprep.subr.bf16.mxu0 0
  %2536 = vmatpush1.bf16.msra.mxu0 0
  %2537 = vmatprep.subr.bf16.mxu0 0
  %2538 = vmatpush1.bf16.msra.mxu0 0
  %2539 = vmatprep.subr.bf16.mxu0 0
  %2540 = vmatpush1.bf16.msra.mxu0 0
  %2541 = vmatprep.subr.bf16.mxu0 0
  %2542 = vmatpush1.bf16.msra.mxu0 0
  %2543 = vmatprep.subr.bf16.mxu0 0
  %2544 = vmatpush1.bf16.msra.mxu0 0
  %2545 = vmatprep.subr.bf16.mxu0 0
  %2546 = vmatpush1.bf16.msra.mxu0 0
  %2547 = vmatprep.subr.bf16.mxu0 0
  %2548 = vmatpush1.bf16.msra.mxu0 0
  %2549 = vmatprep.mubr.bf16.mxu0 0
  %2550 = vmatmul.mubr.bf16.gmra.mrb[0].mxu0 %v2512
  %v2551 = vpop.f32.mrb[0].mxu0
  %v2552 = vadd.f32 0.0, %v2551
  %v2553 = vpop.f32.mrb[0].mxu0
  %v2554 = vpop.f32.mrb[0].mxu0
  %v2555 = vpop.f32.mrb[0].mxu0
  %2556 = vdwg.mxu0
  %v2557 = vadd.f32 %v2480, %v2552
  %s2558 = scalar_lea.vmem %s4, 112
  %v2559 = vld [vmem:[%s2558] sm:$0xf]
  %v2560 = vld [vmem:[%s2558 + $0x4] sm:$0xf]
  %v2561 = vld [vmem:[%s2558 + $0x8] sm:$0xf]
  %v2562 = vld [vmem:[%s2558 + $0xc] sm:$0xf]
  %v2563 = vld [vmem:[%s2558 + $0x10] sm:$0xf]
  %v2564 = vld [vmem:[%s2558 + $0x14] sm:$0xf]
  %v2565 = vld [vmem:[%s2558 + $0x18] sm:$0x1]
  %v2566 = vrot.slane %v2249, 4
  %v2574 = vunpack.c.l.b16 %v2559
  %v2575 = vunpack.c.l.b16 %v2560
  %v2576 = vunpack.c.l.b16 %v2561
  %v2577 = vunpack.c.l.b16 %v2562
  %v2578 = vunpack.c.l.b16 %v2563
  %v2579 = vunpack.c.l.b16 %v2564
  %v2580 = vunpack.c.l.b16 %v2565
  %v2581 = vpack.c.b16 %v2575, %v2574
  %v2582 = vpack.c.b16 %v2577, %v2576
  %v2583 = vpack.c.b16 %v2579, %v2578
  %v2584 = vpack.c.b16 %v2580, %v2580
  %v2589 = vsel %vm2289, %v2566, 0
  %v2592 = vsel %vm2293, %v2584, 0
  %2594 = vmatprep.subr.bf16.mxu0 0
  %2595 = vmatpush1.bf16.msra.mxu0 %v2581
  %2596 = vmatprep.subr.bf16.mxu0 0
  %2597 = vmatpush1.bf16.msra.mxu0 %v2582
  %2598 = vmatprep.subr.bf16.mxu0 0
  %2599 = vmatpush1.bf16.msra.mxu0 %v2583
  %2600 = vmatprep.subr.bf16.mxu0 0
  %2601 = vmatpush1.bf16.msra.mxu0 %v2592
  %2602 = vmatprep.subr.bf16.mxu0 0
  %2603 = vmatpush1.bf16.msra.mxu0 0
  %2604 = vmatprep.subr.bf16.mxu0 0
  %2605 = vmatpush1.bf16.msra.mxu0 0
  %2606 = vmatprep.subr.bf16.mxu0 0
  %2607 = vmatpush1.bf16.msra.mxu0 0
  %2608 = vmatprep.subr.bf16.mxu0 0
  %2609 = vmatpush1.bf16.msra.mxu0 0
  %2610 = vmatprep.subr.bf16.mxu0 0
  %2611 = vmatpush1.bf16.msra.mxu0 0
  %2612 = vmatprep.subr.bf16.mxu0 0
  %2613 = vmatpush1.bf16.msra.mxu0 0
  %2614 = vmatprep.subr.bf16.mxu0 0
  %2615 = vmatpush1.bf16.msra.mxu0 0
  %2616 = vmatprep.subr.bf16.mxu0 0
  %2617 = vmatpush1.bf16.msra.mxu0 0
  %2618 = vmatprep.subr.bf16.mxu0 0
  %2619 = vmatpush1.bf16.msra.mxu0 0
  %2620 = vmatprep.subr.bf16.mxu0 0
  %2621 = vmatpush1.bf16.msra.mxu0 0
  %2622 = vmatprep.subr.bf16.mxu0 0
  %2623 = vmatpush1.bf16.msra.mxu0 0
  %2624 = vmatprep.subr.bf16.mxu0 0
  %2625 = vmatpush1.bf16.msra.mxu0 0
  %2626 = vmatprep.mubr.bf16.mxu0 0
  %2627 = vmatmul.mubr.bf16.gmra.mrb[0].mxu0 %v2589
  %v2628 = vpop.f32.mrb[0].mxu0
  %v2629 = vadd.f32 0.0, %v2628
  %v2630 = vpop.f32.mrb[0].mxu0
  %v2631 = vpop.f32.mrb[0].mxu0
  %v2632 = vpop.f32.mrb[0].mxu0
  %2633 = vdwg.mxu0
  %v2634 = vadd.f32 %v2557, %v2629
  %s2635 = scalar_lea.vmem %s4, 140
  %v2636 = vld [vmem:[%s2635] sm:$0xf]
  %v2637 = vld [vmem:[%s2635 + $0x4] sm:$0xf]
  %v2638 = vld [vmem:[%s2635 + $0x8] sm:$0xf]
  %v2639 = vld [vmem:[%s2635 + $0xc] sm:$0xf]
  %v2640 = vld [vmem:[%s2635 + $0x10] sm:$0xf]
  %v2641 = vld [vmem:[%s2635 + $0x14] sm:$0xf]
  %v2642 = vld [vmem:[%s2635 + $0x18] sm:$0x1]
  %v2643 = vrot.slane %v2249, 5
  %v2651 = vunpack.c.l.b16 %v2636
  %v2652 = vunpack.c.l.b16 %v2637
  %v2653 = vunpack.c.l.b16 %v2638
  %v2654 = vunpack.c.l.b16 %v2639
  %v2655 = vunpack.c.l.b16 %v2640
  %v2656 = vunpack.c.l.b16 %v2641
  %v2657 = vunpack.c.l.b16 %v2642
  %v2658 = vpack.c.b16 %v2652, %v2651
  %v2659 = vpack.c.b16 %v2654, %v2653
  %v2660 = vpack.c.b16 %v2656, %v2655
  %v2661 = vpack.c.b16 %v2657, %v2657
  %v2666 = vsel %vm2289, %v2643, 0
  %v2669 = vsel %vm2293, %v2661, 0
  %2671 = vmatprep.subr.bf16.mxu0 0
  %2672 = vmatpush1.bf16.msra.mxu0 %v2658
  %2673 = vmatprep.subr.bf16.mxu0 0
  %2674 = vmatpush1.bf16.msra.mxu0 %v2659
  %2675 = vmatprep.subr.bf16.mxu0 0
  %2676 = vmatpush1.bf16.msra.mxu0 %v2660
  %2677 = vmatprep.subr.bf16.mxu0 0
  %2678 = vmatpush1.bf16.msra.mxu0 %v2669
  %2679 = vmatprep.subr.bf16.mxu0 0
  %2680 = vmatpush1.bf16.msra.mxu0 0
  %2681 = vmatprep.subr.bf16.mxu0 0
  %2682 = vmatpush1.bf16.msra.mxu0 0
  %2683 = vmatprep.subr.bf16.mxu0 0
  %2684 = vmatpush1.bf16.msra.mxu0 0
  %2685 = vmatprep.subr.bf16.mxu0 0
  %2686 = vmatpush1.bf16.msra.mxu0 0
  %2687 = vmatprep.subr.bf16.mxu0 0
  %2688 = vmatpush1.bf16.msra.mxu0 0
  %2689 = vmatprep.subr.bf16.mxu0 0
  %2690 = vmatpush1.bf16.msra.mxu0 0
  %2691 = vmatprep.subr.bf16.mxu0 0
  %2692 = vmatpush1.bf16.msra.mxu0 0
  %2693 = vmatprep.subr.bf16.mxu0 0
  %2694 = vmatpush1.bf16.msra.mxu0 0
  %2695 = vmatprep.subr.bf16.mxu0 0
  %2696 = vmatpush1.bf16.msra.mxu0 0
  %2697 = vmatprep.subr.bf16.mxu0 0
  %2698 = vmatpush1.bf16.msra.mxu0 0
  %2699 = vmatprep.subr.bf16.mxu0 0
  %2700 = vmatpush1.bf16.msra.mxu0 0
  %2701 = vmatprep.subr.bf16.mxu0 0
  %2702 = vmatpush1.bf16.msra.mxu0 0
  %2703 = vmatprep.mubr.bf16.mxu0 0
  %2704 = vmatmul.mubr.bf16.gmra.mrb[0].mxu0 %v2666
  %v2705 = vpop.f32.mrb[0].mxu0
  %v2706 = vadd.f32 0.0, %v2705
  %v2707 = vpop.f32.mrb[0].mxu0
  %v2708 = vpop.f32.mrb[0].mxu0
  %v2709 = vpop.f32.mrb[0].mxu0
  %2710 = vdwg.mxu0
  %v2711 = vadd.f32 %v2634, %v2706
  %s2712 = scalar_lea.vmem %s4, 168
  %v2713 = vld [vmem:[%s2712] sm:$0xf]
  %v2714 = vld [vmem:[%s2712 + $0x4] sm:$0xf]
  %v2715 = vld [vmem:[%s2712 + $0x8] sm:$0xf]
  %v2716 = vld [vmem:[%s2712 + $0xc] sm:$0xf]
  %v2717 = vld [vmem:[%s2712 + $0x10] sm:$0xf]
  %v2718 = vld [vmem:[%s2712 + $0x14] sm:$0xf]
  %v2719 = vld [vmem:[%s2712 + $0x18] sm:$0x1]
  %v2720 = vrot.slane %v2249, 6
  %v2728 = vunpack.c.l.b16 %v2713
  %v2729 = vunpack.c.l.b16 %v2714
  %v2730 = vunpack.c.l.b16 %v2715
  %v2731 = vunpack.c.l.b16 %v2716
  %v2732 = vunpack.c.l.b16 %v2717
  %v2733 = vunpack.c.l.b16 %v2718
  %v2734 = vunpack.c.l.b16 %v2719
  %v2735 = vpack.c.b16 %v2729, %v2728
  %v2736 = vpack.c.b16 %v2731, %v2730
  %v2737 = vpack.c.b16 %v2733, %v2732
  %v2738 = vpack.c.b16 %v2734, %v2734
  %v2743 = vsel %vm2289, %v2720, 0
  %v2746 = vsel %vm2293, %v2738, 0
  %2748 = vmatprep.subr.bf16.mxu0 0
  %2749 = vmatpush1.bf16.msra.mxu0 %v2735
  %2750 = vmatprep.subr.bf16.mxu0 0
  %2751 = vmatpush1.bf16.msra.mxu0 %v2736
  %2752 = vmatprep.subr.bf16.mxu0 0
  %2753 = vmatpush1.bf16.msra.mxu0 %v2737
  %2754 = vmatprep.subr.bf16.mxu0 0
  %2755 = vmatpush1.bf16.msra.mxu0 %v2746
  %2756 = vmatprep.subr.bf16.mxu0 0
  %2757 = vmatpush1.bf16.msra.mxu0 0
  %2758 = vmatprep.subr.bf16.mxu0 0
  %2759 = vmatpush1.bf16.msra.mxu0 0
  %2760 = vmatprep.subr.bf16.mxu0 0
  %2761 = vmatpush1.bf16.msra.mxu0 0
  %2762 = vmatprep.subr.bf16.mxu0 0
  %2763 = vmatpush1.bf16.msra.mxu0 0
  %2764 = vmatprep.subr.bf16.mxu0 0
  %2765 = vmatpush1.bf16.msra.mxu0 0
  %2766 = vmatprep.subr.bf16.mxu0 0
  %2767 = vmatpush1.bf16.msra.mxu0 0
  %2768 = vmatprep.subr.bf16.mxu0 0
  %2769 = vmatpush1.bf16.msra.mxu0 0
  %2770 = vmatprep.subr.bf16.mxu0 0
  %2771 = vmatpush1.bf16.msra.mxu0 0
  %2772 = vmatprep.subr.bf16.mxu0 0
  %2773 = vmatpush1.bf16.msra.mxu0 0
  %2774 = vmatprep.subr.bf16.mxu0 0
  %2775 = vmatpush1.bf16.msra.mxu0 0
  %2776 = vmatprep.subr.bf16.mxu0 0
  %2777 = vmatpush1.bf16.msra.mxu0 0
  %2778 = vmatprep.subr.bf16.mxu0 0
  %2779 = vmatpush1.bf16.msra.mxu0 0
  %2780 = vmatprep.mubr.bf16.mxu0 0
  %2781 = vmatmul.mubr.bf16.gmra.mrb[0].mxu0 %v2743
  %v2782 = vpop.f32.mrb[0].mxu0
  %v2783 = vadd.f32 0.0, %v2782
  %v2784 = vpop.f32.mrb[0].mxu0
  %v2785 = vpop.f32.mrb[0].mxu0
  %v2786 = vpop.f32.mrb[0].mxu0
  %2787 = vdwg.mxu0
  %v2788 = vadd.f32 %v2711, %v2783
  %s2789 = scalar_lea.vmem %s4, 196
  %v2790 = vld [vmem:[%s2789] sm:$0xf]
  %v2791 = vld [vmem:[%s2789 + $0x4] sm:$0xf]
  %v2792 = vld [vmem:[%s2789 + $0x8] sm:$0xf]
  %v2793 = vld [vmem:[%s2789 + $0xc] sm:$0xf]
  %v2794 = vld [vmem:[%s2789 + $0x10] sm:$0xf]
  %v2795 = vld [vmem:[%s2789 + $0x14] sm:$0xf]
  %v2796 = vld [vmem:[%s2789 + $0x18] sm:$0x1]
  %v2797 = vrot.slane %v2249, 7
  %v2805 = vunpack.c.l.b16 %v2790
  %v2806 = vunpack.c.l.b16 %v2791
  %v2807 = vunpack.c.l.b16 %v2792
  %v2808 = vunpack.c.l.b16 %v2793
  %v2809 = vunpack.c.l.b16 %v2794
  %v2810 = vunpack.c.l.b16 %v2795
  %v2811 = vunpack.c.l.b16 %v2796
  %v2812 = vpack.c.b16 %v2806, %v2805
  %v2813 = vpack.c.b16 %v2808, %v2807
  %v2814 = vpack.c.b16 %v2810, %v2809
  %v2815 = vpack.c.b16 %v2811, %v2811
  %v2820 = vsel %vm2289, %v2797, 0
  %v2823 = vsel %vm2293, %v2815, 0
  %2825 = vmatprep.subr.bf16.mxu0 0
  %2826 = vmatpush1.bf16.msra.mxu0 %v2812
  %2827 = vmatprep.subr.bf16.mxu0 0
  %2828 = vmatpush1.bf16.msra.mxu0 %v2813
  %2829 = vmatprep.subr.bf16.mxu0 0
  %2830 = vmatpush1.bf16.msra.mxu0 %v2814
  %2831 = vmatprep.subr.bf16.mxu0 0
  %2832 = vmatpush1.bf16.msra.mxu0 %v2823
  %2833 = vmatprep.subr.bf16.mxu0 0
  %2834 = vmatpush1.bf16.msra.mxu0 0
  %2835 = vmatprep.subr.bf16.mxu0 0
  %2836 = vmatpush1.bf16.msra.mxu0 0
  %2837 = vmatprep.subr.bf16.mxu0 0
  %2838 = vmatpush1.bf16.msra.mxu0 0
  %2839 = vmatprep.subr.bf16.mxu0 0
  %2840 = vmatpush1.bf16.msra.mxu0 0
  %2841 = vmatprep.subr.bf16.mxu0 0
  %2842 = vmatpush1.bf16.msra.mxu0 0
  %2843 = vmatprep.subr.bf16.mxu0 0
  %2844 = vmatpush1.bf16.msra.mxu0 0
  %2845 = vmatprep.subr.bf16.mxu0 0
  %2846 = vmatpush1.bf16.msra.mxu0 0
  %2847 = vmatprep.subr.bf16.mxu0 0
  %2848 = vmatpush1.bf16.msra.mxu0 0
  %2849 = vmatprep.subr.bf16.mxu0 0
  %2850 = vmatpush1.bf16.msra.mxu0 0
  %2851 = vmatprep.subr.bf16.mxu0 0
  %2852 = vmatpush1.bf16.msra.mxu0 0
  %2853 = vmatprep.subr.bf16.mxu0 0
  %2854 = vmatpush1.bf16.msra.mxu0 0
  %2855 = vmatprep.subr.bf16.mxu0 0
  %2856 = vmatpush1.bf16.msra.mxu0 0
  %2857 = vmatprep.mubr.bf16.mxu0 0
  %2858 = vmatmul.mubr.bf16.gmra.mrb[0].mxu0 %v2820
  %v2859 = vpop.f32.mrb[0].mxu0
  %v2860 = vadd.f32 0.0, %v2859
  %v2861 = vpop.f32.mrb[0].mxu0
  %v2862 = vpop.f32.mrb[0].mxu0
  %v2863 = vpop.f32.mrb[0].mxu0
  %2864 = vdwg.mxu0
  %v2865 = vadd.f32 %v2788, %v2860
  %s2866 = scalar_lea.vmem %s4, 224
  %v2867 = vld [vmem:[%s2866] sm:$0xf]
  %v2868 = vld [vmem:[%s2866 + $0x4] sm:$0xf]
  %v2869 = vld [vmem:[%s2866 + $0x8] sm:$0xf]
  %v2870 = vld [vmem:[%s2866 + $0xc] sm:$0xf]
  %v2871 = vld [vmem:[%s2866 + $0x10] sm:$0xf]
  %v2872 = vld [vmem:[%s2866 + $0x14] sm:$0xf]
  %v2873 = vld [vmem:[%s2866 + $0x18] sm:$0x1]
  %v2881 = vunpack.c.l.b16 %v2867
  %v2882 = vunpack.c.l.b16 %v2868
  %v2883 = vunpack.c.l.b16 %v2869
  %v2884 = vunpack.c.l.b16 %v2870
  %v2885 = vunpack.c.l.b16 %v2871
  %v2886 = vunpack.c.l.b16 %v2872
  %v2887 = vunpack.c.l.b16 %v2873
  %v2888 = vpack.c.b16 %v2882, %v2881
  %v2889 = vpack.c.b16 %v2884, %v2883
  %v2890 = vpack.c.b16 %v2886, %v2885
  %v2891 = vpack.c.b16 %v2887, %v2887
  %v2896 = vsel %vm2289, %v2250, 0
  %v2899 = vsel %vm2293, %v2891, 0
  %2901 = vmatprep.subr.bf16.mxu0 0
  %2902 = vmatpush1.bf16.msra.mxu0 %v2888
  %2903 = vmatprep.subr.bf16.mxu0 0
  %2904 = vmatpush1.bf16.msra.mxu0 %v2889
  %2905 = vmatprep.subr.bf16.mxu0 0
  %2906 = vmatpush1.bf16.msra.mxu0 %v2890
  %2907 = vmatprep.subr.bf16.mxu0 0
  %2908 = vmatpush1.bf16.msra.mxu0 %v2899
  %2909 = vmatprep.subr.bf16.mxu0 0
  %2910 = vmatpush1.bf16.msra.mxu0 0
  %2911 = vmatprep.subr.bf16.mxu0 0
  %2912 = vmatpush1.bf16.msra.mxu0 0
  %2913 = vmatprep.subr.bf16.mxu0 0
  %2914 = vmatpush1.bf16.msra.mxu0 0
  %2915 = vmatprep.subr.bf16.mxu0 0
  %2916 = vmatpush1.bf16.msra.mxu0 0
  %2917 = vmatprep.subr.bf16.mxu0 0
  %2918 = vmatpush1.bf16.msra.mxu0 0
  %2919 = vmatprep.subr.bf16.mxu0 0
  %2920 = vmatpush1.bf16.msra.mxu0 0
  %2921 = vmatprep.subr.bf16.mxu0 0
  %2922 = vmatpush1.bf16.msra.mxu0 0
  %2923 = vmatprep.subr.bf16.mxu0 0
  %2924 = vmatpush1.bf16.msra.mxu0 0
  %2925 = vmatprep.subr.bf16.mxu0 0
  %2926 = vmatpush1.bf16.msra.mxu0 0
  %2927 = vmatprep.subr.bf16.mxu0 0
  %2928 = vmatpush1.bf16.msra.mxu0 0
  %2929 = vmatprep.subr.bf16.mxu0 0
  %2930 = vmatpush1.bf16.msra.mxu0 0
  %2931 = vmatprep.subr.bf16.mxu0 0
  %2932 = vmatpush1.bf16.msra.mxu0 0
  %2933 = vmatprep.mubr.bf16.mxu0 0
  %2934 = vmatmul.mubr.bf16.gmra.mrb[0].mxu0 %v2896
  %v2935 = vpop.f32.mrb[0].mxu0
  %v2936 = vadd.f32 0.0, %v2935
  %v2937 = vpop.f32.mrb[0].mxu0
  %v2938 = vpop.f32.mrb[0].mxu0
  %v2939 = vpop.f32.mrb[0].mxu0
  %2940 = vdwg.mxu0
  %v2941 = vadd.f32 %v2865, %v2936
  %s2942 = scalar_lea.vmem %s4, 252
  %v2943 = vld [vmem:[%s2942] sm:$0xf]
  %v2944 = vld [vmem:[%s2942 + $0x4] sm:$0xf]
  %v2945 = vld [vmem:[%s2942 + $0x8] sm:$0xf]
  %v2946 = vld [vmem:[%s2942 + $0xc] sm:$0xf]
  %v2947 = vld [vmem:[%s2942 + $0x10] sm:$0xf]
  %v2948 = vld [vmem:[%s2942 + $0x14] sm:$0xf]
  %v2949 = vld [vmem:[%s2942 + $0x18] sm:$0x1]
  %v2951 = vrot.slane %v2250, 1
  %v2959 = vunpack.c.l.b16 %v2943
  %v2960 = vunpack.c.l.b16 %v2944
  %v2961 = vunpack.c.l.b16 %v2945
  %v2962 = vunpack.c.l.b16 %v2946
  %v2963 = vunpack.c.l.b16 %v2947
  %v2964 = vunpack.c.l.b16 %v2948
  %v2965 = vunpack.c.l.b16 %v2949
  %v2966 = vpack.c.b16 %v2960, %v2959
  %v2967 = vpack.c.b16 %v2962, %v2961
  %v2968 = vpack.c.b16 %v2964, %v2963
  %v2969 = vpack.c.b16 %v2965, %v2965
  %v2974 = vsel %vm2289, %v2951, 0
  %v2977 = vsel %vm2293, %v2969, 0
  %2979 = vmatprep.subr.bf16.mxu0 0
  %2980 = vmatpush1.bf16.msra.mxu0 %v2966
  %2981 = vmatprep.subr.bf16.mxu0 0
  %2982 = vmatpush1.bf16.msra.mxu0 %v2967
  %2983 = vmatprep.subr.bf16.mxu0 0
  %2984 = vmatpush1.bf16.msra.mxu0 %v2968
  %2985 = vmatprep.subr.bf16.mxu0 0
  %2986 = vmatpush1.bf16.msra.mxu0 %v2977
  %2987 = vmatprep.subr.bf16.mxu0 0
  %2988 = vmatpush1.bf16.msra.mxu0 0
  %2989 = vmatprep.subr.bf16.mxu0 0
  %2990 = vmatpush1.bf16.msra.mxu0 0
  %2991 = vmatprep.subr.bf16.mxu0 0
  %2992 = vmatpush1.bf16.msra.mxu0 0
  %2993 = vmatprep.subr.bf16.mxu0 0
  %2994 = vmatpush1.bf16.msra.mxu0 0
  %2995 = vmatprep.subr.bf16.mxu0 0
  %2996 = vmatpush1.bf16.msra.mxu0 0
  %2997 = vmatprep.subr.bf16.mxu0 0
  %2998 = vmatpush1.bf16.msra.mxu0 0
  %2999 = vmatprep.subr.bf16.mxu0 0
  %3000 = vmatpush1.bf16.msra.mxu0 0
  %3001 = vmatprep.subr.bf16.mxu0 0
  %3002 = vmatpush1.bf16.msra.mxu0 0
  %3003 = vmatprep.subr.bf16.mxu0 0
  %3004 = vmatpush1.bf16.msra.mxu0 0
  %3005 = vmatprep.subr.bf16.mxu0 0
  %3006 = vmatpush1.bf16.msra.mxu0 0
  %3007 = vmatprep.subr.bf16.mxu0 0
  %3008 = vmatpush1.bf16.msra.mxu0 0
  %3009 = vmatprep.subr.bf16.mxu0 0
  %3010 = vmatpush1.bf16.msra.mxu0 0
  %3011 = vmatprep.mubr.bf16.mxu0 0
  %3012 = vmatmul.mubr.bf16.gmra.mrb[0].mxu0 %v2974
  %v3013 = vpop.f32.mrb[0].mxu0
  %v3014 = vadd.f32 0.0, %v3013
  %v3015 = vpop.f32.mrb[0].mxu0
  %v3016 = vpop.f32.mrb[0].mxu0
  %v3017 = vpop.f32.mrb[0].mxu0
  %3018 = vdwg.mxu0
  %v3019 = vadd.f32 %v2941, %v3014
  %s3020 = scalar_lea.vmem %s4, 280
  %v3021 = vld [vmem:[%s3020] sm:$0xf]
  %v3022 = vld [vmem:[%s3020 + $0x4] sm:$0xf]
  %v3023 = vld [vmem:[%s3020 + $0x8] sm:$0xf]
  %v3024 = vld [vmem:[%s3020 + $0xc] sm:$0xf]
  %v3025 = vld [vmem:[%s3020 + $0x10] sm:$0xf]
  %v3026 = vld [vmem:[%s3020 + $0x14] sm:$0xf]
  %v3027 = vld [vmem:[%s3020 + $0x18] sm:$0x1]
  %v3028 = vrot.slane %v2250, 2
  %v3036 = vunpack.c.l.b16 %v3021
  %v3037 = vunpack.c.l.b16 %v3022
  %v3038 = vunpack.c.l.b16 %v3023
  %v3039 = vunpack.c.l.b16 %v3024
  %v3040 = vunpack.c.l.b16 %v3025
  %v3041 = vunpack.c.l.b16 %v3026
  %v3042 = vunpack.c.l.b16 %v3027
  %v3043 = vpack.c.b16 %v3037, %v3036
  %v3044 = vpack.c.b16 %v3039, %v3038
  %v3045 = vpack.c.b16 %v3041, %v3040
  %v3046 = vpack.c.b16 %v3042, %v3042
  %v3051 = vsel %vm2289, %v3028, 0
  %v3054 = vsel %vm2293, %v3046, 0
  %3056 = vmatprep.subr.bf16.mxu0 0
  %3057 = vmatpush1.bf16.msra.mxu0 %v3043
  %3058 = vmatprep.subr.bf16.mxu0 0
  %3059 = vmatpush1.bf16.msra.mxu0 %v3044
  %3060 = vmatprep.subr.bf16.mxu0 0
  %3061 = vmatpush1.bf16.msra.mxu0 %v3045
  %3062 = vmatprep.subr.bf16.mxu0 0
  %3063 = vmatpush1.bf16.msra.mxu0 %v3054
  %3064 = vmatprep.subr.bf16.mxu0 0
  %3065 = vmatpush1.bf16.msra.mxu0 0
  %3066 = vmatprep.subr.bf16.mxu0 0
  %3067 = vmatpush1.bf16.msra.mxu0 0
  %3068 = vmatprep.subr.bf16.mxu0 0
  %3069 = vmatpush1.bf16.msra.mxu0 0
  %3070 = vmatprep.subr.bf16.mxu0 0
  %3071 = vmatpush1.bf16.msra.mxu0 0
  %3072 = vmatprep.subr.bf16.mxu0 0
  %3073 = vmatpush1.bf16.msra.mxu0 0
  %3074 = vmatprep.subr.bf16.mxu0 0
  %3075 = vmatpush1.bf16.msra.mxu0 0
  %3076 = vmatprep.subr.bf16.mxu0 0
  %3077 = vmatpush1.bf16.msra.mxu0 0
  %3078 = vmatprep.subr.bf16.mxu0 0
  %3079 = vmatpush1.bf16.msra.mxu0 0
  %3080 = vmatprep.subr.bf16.mxu0 0
  %3081 = vmatpush1.bf16.msra.mxu0 0
  %3082 = vmatprep.subr.bf16.mxu0 0
  %3083 = vmatpush1.bf16.msra.mxu0 0
  %3084 = vmatprep.subr.bf16.mxu0 0
  %3085 = vmatpush1.bf16.msra.mxu0 0
  %3086 = vmatprep.subr.bf16.mxu0 0
  %3087 = vmatpush1.bf16.msra.mxu0 0
  %3088 = vmatprep.mubr.bf16.mxu0 0
  %3089 = vmatmul.mubr.bf16.gmra.mrb[0].mxu0 %v3051
  %v3090 = vpop.f32.mrb[0].mxu0
  %v3091 = vadd.f32 0.0, %v3090
  %v3092 = vpop.f32.mrb[0].mxu0
  %v3093 = vpop.f32.mrb[0].mxu0
  %v3094 = vpop.f32.mrb[0].mxu0
  %3095 = vdwg.mxu0
  %v3096 = vadd.f32 %v3019, %v3091
  %s3097 = scalar_lea.vmem %s4, 308
  %v3098 = vld [vmem:[%s3097] sm:$0xf]
  %v3099 = vld [vmem:[%s3097 + $0x4] sm:$0xf]
  %v3100 = vld [vmem:[%s3097 + $0x8] sm:$0xf]
  %v3101 = vld [vmem:[%s3097 + $0xc] sm:$0xf]
  %v3102 = vld [vmem:[%s3097 + $0x10] sm:$0xf]
  %v3103 = vld [vmem:[%s3097 + $0x14] sm:$0xf]
  %v3104 = vld [vmem:[%s3097 + $0x18] sm:$0x1]
  %v3105 = vrot.slane %v2250, 3
  %v3113 = vunpack.c.l.b16 %v3098
  %v3114 = vunpack.c.l.b16 %v3099
  %v3115 = vunpack.c.l.b16 %v3100
  %v3116 = vunpack.c.l.b16 %v3101
  %v3117 = vunpack.c.l.b16 %v3102
  %v3118 = vunpack.c.l.b16 %v3103
  %v3119 = vunpack.c.l.b16 %v3104
  %v3120 = vpack.c.b16 %v3114, %v3113
  %v3121 = vpack.c.b16 %v3116, %v3115
  %v3122 = vpack.c.b16 %v3118, %v3117
  %v3123 = vpack.c.b16 %v3119, %v3119
  %v3128 = vsel %vm2289, %v3105, 0
  %v3131 = vsel %vm2293, %v3123, 0
  %3133 = vmatprep.subr.bf16.mxu0 0
  %3134 = vmatpush1.bf16.msra.mxu0 %v3120
  %3135 = vmatprep.subr.bf16.mxu0 0
  %3136 = vmatpush1.bf16.msra.mxu0 %v3121
  %3137 = vmatprep.subr.bf16.mxu0 0
  %3138 = vmatpush1.bf16.msra.mxu0 %v3122
  %3139 = vmatprep.subr.bf16.mxu0 0
  %3140 = vmatpush1.bf16.msra.mxu0 %v3131
  %3141 = vmatprep.subr.bf16.mxu0 0
  %3142 = vmatpush1.bf16.msra.mxu0 0
  %3143 = vmatprep.subr.bf16.mxu0 0
  %3144 = vmatpush1.bf16.msra.mxu0 0
  %3145 = vmatprep.subr.bf16.mxu0 0
  %3146 = vmatpush1.bf16.msra.mxu0 0
  %3147 = vmatprep.subr.bf16.mxu0 0
  %3148 = vmatpush1.bf16.msra.mxu0 0
  %3149 = vmatprep.subr.bf16.mxu0 0
  %3150 = vmatpush1.bf16.msra.mxu0 0
  %3151 = vmatprep.subr.bf16.mxu0 0
  %3152 = vmatpush1.bf16.msra.mxu0 0
  %3153 = vmatprep.subr.bf16.mxu0 0
  %3154 = vmatpush1.bf16.msra.mxu0 0
  %3155 = vmatprep.subr.bf16.mxu0 0
  %3156 = vmatpush1.bf16.msra.mxu0 0
  %3157 = vmatprep.subr.bf16.mxu0 0
  %3158 = vmatpush1.bf16.msra.mxu0 0
  %3159 = vmatprep.subr.bf16.mxu0 0
  %3160 = vmatpush1.bf16.msra.mxu0 0
  %3161 = vmatprep.subr.bf16.mxu0 0
  %3162 = vmatpush1.bf16.msra.mxu0 0
  %3163 = vmatprep.subr.bf16.mxu0 0
  %3164 = vmatpush1.bf16.msra.mxu0 0
  %3165 = vmatprep.mubr.bf16.mxu0 0
  %3166 = vmatmul.mubr.bf16.gmra.mrb[0].mxu0 %v3128
  %v3167 = vpop.f32.mrb[0].mxu0
  %v3168 = vadd.f32 0.0, %v3167
  %v3169 = vpop.f32.mrb[0].mxu0
  %v3170 = vpop.f32.mrb[0].mxu0
  %v3171 = vpop.f32.mrb[0].mxu0
  %3172 = vdwg.mxu0
  %v3173 = vadd.f32 %v3096, %v3168
  %s3174 = scalar_lea.vmem %s4, 336
  %v3175 = vld [vmem:[%s3174] sm:$0xf]
  %v3176 = vld [vmem:[%s3174 + $0x4] sm:$0xf]
  %v3177 = vld [vmem:[%s3174 + $0x8] sm:$0xf]
  %v3178 = vld [vmem:[%s3174 + $0xc] sm:$0xf]
  %v3179 = vld [vmem:[%s3174 + $0x10] sm:$0xf]
  %v3180 = vld [vmem:[%s3174 + $0x14] sm:$0xf]
  %v3181 = vld [vmem:[%s3174 + $0x18] sm:$0x1]
  %v3182 = vrot.slane %v2250, 4
  %v3190 = vunpack.c.l.b16 %v3175
  %v3191 = vunpack.c.l.b16 %v3176
  %v3192 = vunpack.c.l.b16 %v3177
  %v3193 = vunpack.c.l.b16 %v3178
  %v3194 = vunpack.c.l.b16 %v3179
  %v3195 = vunpack.c.l.b16 %v3180
  %v3196 = vunpack.c.l.b16 %v3181
  %v3197 = vpack.c.b16 %v3191, %v3190
  %v3198 = vpack.c.b16 %v3193, %v3192
  %v3199 = vpack.c.b16 %v3195, %v3194
  %v3200 = vpack.c.b16 %v3196, %v3196
  %v3205 = vsel %vm2289, %v3182, 0
  %v3208 = vsel %vm2293, %v3200, 0
  %3210 = vmatprep.subr.bf16.mxu0 0
  %3211 = vmatpush1.bf16.msra.mxu0 %v3197
  %3212 = vmatprep.subr.bf16.mxu0 0
  %3213 = vmatpush1.bf16.msra.mxu0 %v3198
  %3214 = vmatprep.subr.bf16.mxu0 0
  %3215 = vmatpush1.bf16.msra.mxu0 %v3199
  %3216 = vmatprep.subr.bf16.mxu0 0
  %3217 = vmatpush1.bf16.msra.mxu0 %v3208
  %3218 = vmatprep.subr.bf16.mxu0 0
  %3219 = vmatpush1.bf16.msra.mxu0 0
  %3220 = vmatprep.subr.bf16.mxu0 0
  %3221 = vmatpush1.bf16.msra.mxu0 0
  %3222 = vmatprep.subr.bf16.mxu0 0
  %3223 = vmatpush1.bf16.msra.mxu0 0
  %3224 = vmatprep.subr.bf16.mxu0 0
  %3225 = vmatpush1.bf16.msra.mxu0 0
  %3226 = vmatprep.subr.bf16.mxu0 0
  %3227 = vmatpush1.bf16.msra.mxu0 0
  %3228 = vmatprep.subr.bf16.mxu0 0
  %3229 = vmatpush1.bf16.msra.mxu0 0
  %3230 = vmatprep.subr.bf16.mxu0 0
  %3231 = vmatpush1.bf16.msra.mxu0 0
  %3232 = vmatprep.subr.bf16.mxu0 0
  %3233 = vmatpush1.bf16.msra.mxu0 0
  %3234 = vmatprep.subr.bf16.mxu0 0
  %3235 = vmatpush1.bf16.msra.mxu0 0
  %3236 = vmatprep.subr.bf16.mxu0 0
  %3237 = vmatpush1.bf16.msra.mxu0 0
  %3238 = vmatprep.subr.bf16.mxu0 0
  %3239 = vmatpush1.bf16.msra.mxu0 0
  %3240 = vmatprep.subr.bf16.mxu0 0
  %3241 = vmatpush1.bf16.msra.mxu0 0
  %3242 = vmatprep.mubr.bf16.mxu0 0
  %3243 = vmatmul.mubr.bf16.gmra.mrb[0].mxu0 %v3205
  %v3244 = vpop.f32.mrb[0].mxu0
  %v3245 = vadd.f32 0.0, %v3244
  %v3246 = vpop.f32.mrb[0].mxu0
  %v3247 = vpop.f32.mrb[0].mxu0
  %v3248 = vpop.f32.mrb[0].mxu0
  %3249 = vdwg.mxu0
  %v3250 = vadd.f32 %v3173, %v3245
  %s3251 = scalar_lea.vmem %s4, 364
  %v3252 = vld [vmem:[%s3251] sm:$0xf]
  %v3253 = vld [vmem:[%s3251 + $0x4] sm:$0xf]
  %v3254 = vld [vmem:[%s3251 + $0x8] sm:$0xf]
  %v3255 = vld [vmem:[%s3251 + $0xc] sm:$0xf]
  %v3256 = vld [vmem:[%s3251 + $0x10] sm:$0xf]
  %v3257 = vld [vmem:[%s3251 + $0x14] sm:$0xf]
  %v3258 = vld [vmem:[%s3251 + $0x18] sm:$0x1]
  %v3259 = vrot.slane %v2250, 5
  %v3267 = vunpack.c.l.b16 %v3252
  %v3268 = vunpack.c.l.b16 %v3253
  %v3269 = vunpack.c.l.b16 %v3254
  %v3270 = vunpack.c.l.b16 %v3255
  %v3271 = vunpack.c.l.b16 %v3256
  %v3272 = vunpack.c.l.b16 %v3257
  %v3273 = vunpack.c.l.b16 %v3258
  %v3274 = vpack.c.b16 %v3268, %v3267
  %v3275 = vpack.c.b16 %v3270, %v3269
  %v3276 = vpack.c.b16 %v3272, %v3271
  %v3277 = vpack.c.b16 %v3273, %v3273
  %v3282 = vsel %vm2289, %v3259, 0
  %v3285 = vsel %vm2293, %v3277, 0
  %3287 = vmatprep.subr.bf16.mxu0 0
  %3288 = vmatpush1.bf16.msra.mxu0 %v3274
  %3289 = vmatprep.subr.bf16.mxu0 0
  %3290 = vmatpush1.bf16.msra.mxu0 %v3275
  %3291 = vmatprep.subr.bf16.mxu0 0
  %3292 = vmatpush1.bf16.msra.mxu0 %v3276
  %3293 = vmatprep.subr.bf16.mxu0 0
  %3294 = vmatpush1.bf16.msra.mxu0 %v3285
  %3295 = vmatprep.subr.bf16.mxu0 0
  %3296 = vmatpush1.bf16.msra.mxu0 0
  %3297 = vmatprep.subr.bf16.mxu0 0
  %3298 = vmatpush1.bf16.msra.mxu0 0
  %3299 = vmatprep.subr.bf16.mxu0 0
  %3300 = vmatpush1.bf16.msra.mxu0 0
  %3301 = vmatprep.subr.bf16.mxu0 0
  %3302 = vmatpush1.bf16.msra.mxu0 0
  %3303 = vmatprep.subr.bf16.mxu0 0
  %3304 = vmatpush1.bf16.msra.mxu0 0
  %3305 = vmatprep.subr.bf16.mxu0 0
  %3306 = vmatpush1.bf16.msra.mxu0 0
  %3307 = vmatprep.subr.bf16.mxu0 0
  %3308 = vmatpush1.bf16.msra.mxu0 0
  %3309 = vmatprep.subr.bf16.mxu0 0
  %3310 = vmatpush1.bf16.msra.mxu0 0
  %3311 = vmatprep.subr.bf16.mxu0 0
  %3312 = vmatpush1.bf16.msra.mxu0 0
  %3313 = vmatprep.subr.bf16.mxu0 0
  %3314 = vmatpush1.bf16.msra.mxu0 0
  %3315 = vmatprep.subr.bf16.mxu0 0
  %3316 = vmatpush1.bf16.msra.mxu0 0
  %3317 = vmatprep.subr.bf16.mxu0 0
  %3318 = vmatpush1.bf16.msra.mxu0 0
  %3319 = vmatprep.mubr.bf16.mxu0 0
  %3320 = vmatmul.mubr.bf16.gmra.mrb[0].mxu0 %v3282
  %v3321 = vpop.f32.mrb[0].mxu0
  %v3322 = vadd.f32 0.0, %v3321
  %v3323 = vpop.f32.mrb[0].mxu0
  %v3324 = vpop.f32.mrb[0].mxu0
  %v3325 = vpop.f32.mrb[0].mxu0
  %3326 = vdwg.mxu0
  %v3327 = vadd.f32 %v3250, %v3322
  %s3328 = scalar_lea.vmem %s4, 392
  %v3329 = vld [vmem:[%s3328] sm:$0xf]
  %v3330 = vld [vmem:[%s3328 + $0x4] sm:$0xf]
  %v3331 = vld [vmem:[%s3328 + $0x8] sm:$0xf]
  %v3332 = vld [vmem:[%s3328 + $0xc] sm:$0xf]
  %v3333 = vld [vmem:[%s3328 + $0x10] sm:$0xf]
  %v3334 = vld [vmem:[%s3328 + $0x14] sm:$0xf]
  %v3335 = vld [vmem:[%s3328 + $0x18] sm:$0x1]
  %v3336 = vrot.slane %v2250, 6
  %v3344 = vunpack.c.l.b16 %v3329
  %v3345 = vunpack.c.l.b16 %v3330
  %v3346 = vunpack.c.l.b16 %v3331
  %v3347 = vunpack.c.l.b16 %v3332
  %v3348 = vunpack.c.l.b16 %v3333
  %v3349 = vunpack.c.l.b16 %v3334
  %v3350 = vunpack.c.l.b16 %v3335
  %v3351 = vpack.c.b16 %v3345, %v3344
  %v3352 = vpack.c.b16 %v3347, %v3346
  %v3353 = vpack.c.b16 %v3349, %v3348
  %v3354 = vpack.c.b16 %v3350, %v3350
  %v3359 = vsel %vm2289, %v3336, 0
  %v3362 = vsel %vm2293, %v3354, 0
  %3364 = vmatprep.subr.bf16.mxu0 0
  %3365 = vmatpush1.bf16.msra.mxu0 %v3351
  %3366 = vmatprep.subr.bf16.mxu0 0
  %3367 = vmatpush1.bf16.msra.mxu0 %v3352
  %3368 = vmatprep.subr.bf16.mxu0 0
  %3369 = vmatpush1.bf16.msra.mxu0 %v3353
  %3370 = vmatprep.subr.bf16.mxu0 0
  %3371 = vmatpush1.bf16.msra.mxu0 %v3362
  %3372 = vmatprep.subr.bf16.mxu0 0
  %3373 = vmatpush1.bf16.msra.mxu0 0
  %3374 = vmatprep.subr.bf16.mxu0 0
  %3375 = vmatpush1.bf16.msra.mxu0 0
  %3376 = vmatprep.subr.bf16.mxu0 0
  %3377 = vmatpush1.bf16.msra.mxu0 0
  %3378 = vmatprep.subr.bf16.mxu0 0
  %3379 = vmatpush1.bf16.msra.mxu0 0
  %3380 = vmatprep.subr.bf16.mxu0 0
  %3381 = vmatpush1.bf16.msra.mxu0 0
  %3382 = vmatprep.subr.bf16.mxu0 0
  %3383 = vmatpush1.bf16.msra.mxu0 0
  %3384 = vmatprep.subr.bf16.mxu0 0
  %3385 = vmatpush1.bf16.msra.mxu0 0
  %3386 = vmatprep.subr.bf16.mxu0 0
  %3387 = vmatpush1.bf16.msra.mxu0 0
  %3388 = vmatprep.subr.bf16.mxu0 0
  %3389 = vmatpush1.bf16.msra.mxu0 0
  %3390 = vmatprep.subr.bf16.mxu0 0
  %3391 = vmatpush1.bf16.msra.mxu0 0
  %3392 = vmatprep.subr.bf16.mxu0 0
  %3393 = vmatpush1.bf16.msra.mxu0 0
  %3394 = vmatprep.subr.bf16.mxu0 0
  %3395 = vmatpush1.bf16.msra.mxu0 0
  %3396 = vmatprep.mubr.bf16.mxu0 0
  %3397 = vmatmul.mubr.bf16.gmra.mrb[0].mxu0 %v3359
  %v3398 = vpop.f32.mrb[0].mxu0
  %v3399 = vadd.f32 0.0, %v3398
  %v3400 = vpop.f32.mrb[0].mxu0
  %v3401 = vpop.f32.mrb[0].mxu0
  %v3402 = vpop.f32.mrb[0].mxu0
  %3403 = vdwg.mxu0
  %v3404 = vadd.f32 %v3327, %v3399
  %s3405 = scalar_lea.vmem %s4, 420
  %v3406 = vld [vmem:[%s3405] sm:$0xf]
  %v3407 = vld [vmem:[%s3405 + $0x4] sm:$0xf]
  %v3408 = vld [vmem:[%s3405 + $0x8] sm:$0xf]
  %v3409 = vld [vmem:[%s3405 + $0xc] sm:$0xf]
  %v3410 = vld [vmem:[%s3405 + $0x10] sm:$0xf]
  %v3411 = vld [vmem:[%s3405 + $0x14] sm:$0xf]
  %v3412 = vld [vmem:[%s3405 + $0x18] sm:$0x1]
  %v3413 = vrot.slane %v2250, 7
  %v3421 = vunpack.c.l.b16 %v3406
  %v3422 = vunpack.c.l.b16 %v3407
  %v3423 = vunpack.c.l.b16 %v3408
  %v3424 = vunpack.c.l.b16 %v3409
  %v3425 = vunpack.c.l.b16 %v3410
  %v3426 = vunpack.c.l.b16 %v3411
  %v3427 = vunpack.c.l.b16 %v3412
  %v3428 = vpack.c.b16 %v3422, %v3421
  %v3429 = vpack.c.b16 %v3424, %v3423
  %v3430 = vpack.c.b16 %v3426, %v3425
  %v3431 = vpack.c.b16 %v3427, %v3427
  %v3436 = vsel %vm2289, %v3413, 0
  %v3439 = vsel %vm2293, %v3431, 0
  %3441 = vmatprep.subr.bf16.mxu0 0
  %3442 = vmatpush1.bf16.msra.mxu0 %v3428
  %3443 = vmatprep.subr.bf16.mxu0 0
  %3444 = vmatpush1.bf16.msra.mxu0 %v3429
  %3445 = vmatprep.subr.bf16.mxu0 0
  %3446 = vmatpush1.bf16.msra.mxu0 %v3430
  %3447 = vmatprep.subr.bf16.mxu0 0
  %3448 = vmatpush1.bf16.msra.mxu0 %v3439
  %3449 = vmatprep.subr.bf16.mxu0 0
  %3450 = vmatpush1.bf16.msra.mxu0 0
  %3451 = vmatprep.subr.bf16.mxu0 0
  %3452 = vmatpush1.bf16.msra.mxu0 0
  %3453 = vmatprep.subr.bf16.mxu0 0
  %3454 = vmatpush1.bf16.msra.mxu0 0
  %3455 = vmatprep.subr.bf16.mxu0 0
  %3456 = vmatpush1.bf16.msra.mxu0 0
  %3457 = vmatprep.subr.bf16.mxu0 0
  %3458 = vmatpush1.bf16.msra.mxu0 0
  %3459 = vmatprep.subr.bf16.mxu0 0
  %3460 = vmatpush1.bf16.msra.mxu0 0
  %3461 = vmatprep.subr.bf16.mxu0 0
  %3462 = vmatpush1.bf16.msra.mxu0 0
  %3463 = vmatprep.subr.bf16.mxu0 0
  %3464 = vmatpush1.bf16.msra.mxu0 0
  %3465 = vmatprep.subr.bf16.mxu0 0
  %3466 = vmatpush1.bf16.msra.mxu0 0
  %3467 = vmatprep.subr.bf16.mxu0 0
  %3468 = vmatpush1.bf16.msra.mxu0 0
  %3469 = vmatprep.subr.bf16.mxu0 0
  %3470 = vmatpush1.bf16.msra.mxu0 0
  %3471 = vmatprep.subr.bf16.mxu0 0
  %3472 = vmatpush1.bf16.msra.mxu0 0
  %3473 = vmatprep.mubr.bf16.mxu0 0
  %3474 = vmatmul.mubr.bf16.gmra.mrb[0].mxu0 %v3436
  %v3475 = vpop.f32.mrb[0].mxu0
  %v3476 = vadd.f32 0.0, %v3475
  %v3477 = vpop.f32.mrb[0].mxu0
  %v3478 = vpop.f32.mrb[0].mxu0
  %v3479 = vpop.f32.mrb[0].mxu0
  %3480 = vdwg.mxu0
  %v3481 = vadd.f32 %v3404, %v3476
  %v3482 = vld [vmem:[%s5] sm:$0x1]
  %v3484 = vlaneseq
  %v3485 = vshrl.u32 %v3484, 7
  %v3486 = vsub.s32 0, %v3485
  %v3487 = vrot.slane %v3482, %v3486
  %v3489 = vmul.f32 %v3481, %v3487
  %v3490 = vld [vmem:[%s6] sm:$0x1]
  %v3492 = vlaneseq
  %v3493 = vshrl.u32 %v3492, 7
  %v3494 = vsub.s32 0, %v3493
  %v3495 = vrot.slane %v3490, %v3494
  %v3497 = vadd.f32 %v3489, %v3495
  %v3498 = vmax.f32 %v3497, 0.0
  %v3499 = vpack.c.bf16 %v3498, %v3498
  %v3500 = vld [vmem:[%s7] sm:$0xf]
  %v3501 = vld [vmem:[%s7 + $0x4] sm:$0xf]
  %v3502 = vld [vmem:[%s7 + $0x8] sm:$0xf]
  %v3503 = vld [vmem:[%s7 + $0xc] sm:$0xf]
  %v3504 = vld [vmem:[%s7 + $0x10] sm:$0xf]
  %v3505 = vld [vmem:[%s7 + $0x14] sm:$0xf]
  %v3506 = vld [vmem:[%s7 + $0x18] sm:$0xf]
  %v3507 = vld [vmem:[%s7 + $0x1c] sm:$0xf]
  %v3508 = vld [vmem:[%s7 + $0x20] sm:$0xf]
  %v3509 = vld [vmem:[%s7 + $0x24] sm:$0xf]
  %v3510 = vld [vmem:[%s7 + $0x28] sm:$0xf]
  %v3511 = vld [vmem:[%s7 + $0x2c] sm:$0xf]
  %v3512 = vld [vmem:[%s7 + $0x30] sm:$0x3]
  %v3526 = vunpack.c.l.b16 %v3500
  %v3527 = vunpack.c.l.b16 %v3501
  %v3528 = vunpack.c.l.b16 %v3502
  %v3529 = vunpack.c.l.b16 %v3503
  %v3530 = vunpack.c.l.b16 %v3504
  %v3531 = vunpack.c.l.b16 %v3505
  %v3532 = vunpack.c.l.b16 %v3506
  %v3533 = vunpack.c.l.b16 %v3507
  %v3534 = vunpack.c.l.b16 %v3508
  %v3535 = vunpack.c.l.b16 %v3509
  %v3536 = vunpack.c.l.b16 %v3510
  %v3537 = vunpack.c.l.b16 %v3511
  %v3538 = vunpack.c.l.b16 %v3512
  %v3539 = vpack.c.b16 %v3527, %v3526
  %v3540 = vpack.c.b16 %v3529, %v3528
  %v3541 = vpack.c.b16 %v3531, %v3530
  %v3542 = vpack.c.b16 %v3533, %v3532
  %v3543 = vpack.c.b16 %v3535, %v3534
  %v3544 = vpack.c.b16 %v3537, %v3536
  %v3545 = vpack.c.b16 %v3538, %v3538
  %vm3552 = vcmask 818176
  %v3554 = vsel %vm3552, %v3499, 0
  %vm3556 = vcmask 1041408
  %v3558 = vsel %vm3556, %v3545, 0
  %3560 = vmatprep.subr.bf16.mxu0 0
  %3561 = vmatpush1.bf16.msra.mxu0 %v3539
  %3562 = vmatprep.subr.bf16.mxu0 0
  %3563 = vmatpush1.bf16.msra.mxu0 %v3540
  %3564 = vmatprep.subr.bf16.mxu0 0
  %3565 = vmatpush1.bf16.msra.mxu0 %v3541
  %3566 = vmatprep.subr.bf16.mxu0 0
  %3567 = vmatpush1.bf16.msra.mxu0 %v3542
  %3568 = vmatprep.subr.bf16.mxu0 0
  %3569 = vmatpush1.bf16.msra.mxu0 %v3543
  %3570 = vmatprep.subr.bf16.mxu0 0
  %3571 = vmatpush1.bf16.msra.mxu0 %v3544
  %3572 = vmatprep.subr.bf16.mxu0 0
  %3573 = vmatpush1.bf16.msra.mxu0 %v3558
  %3574 = vmatprep.subr.bf16.mxu0 0
  %3575 = vmatpush1.bf16.msra.mxu0 0
  %3576 = vmatprep.subr.bf16.mxu0 0
  %3577 = vmatpush1.bf16.msra.mxu0 0
  %3578 = vmatprep.subr.bf16.mxu0 0
  %3579 = vmatpush1.bf16.msra.mxu0 0
  %3580 = vmatprep.subr.bf16.mxu0 0
  %3581 = vmatpush1.bf16.msra.mxu0 0
  %3582 = vmatprep.subr.bf16.mxu0 0
  %3583 = vmatpush1.bf16.msra.mxu0 0
  %3584 = vmatprep.subr.bf16.mxu0 0
  %3585 = vmatpush1.bf16.msra.mxu0 0
  %3586 = vmatprep.subr.bf16.mxu0 0
  %3587 = vmatpush1.bf16.msra.mxu0 0
  %3588 = vmatprep.subr.bf16.mxu0 0
  %3589 = vmatpush1.bf16.msra.mxu0 0
  %3590 = vmatprep.subr.bf16.mxu0 0
  %3591 = vmatpush1.bf16.msra.mxu0 0
  %3592 = vmatprep.mubr.bf16.mxu0 0
  %3593 = vmatmul.mubr.bf16.gmra.mrb[0].mxu0 %v3554
  %v3594 = vpop.f32.mrb[0].mxu0
  %v3595 = vadd.f32 0.0, %v3594
  %v3596 = vpop.f32.mrb[0].mxu0
  %v3597 = vpop.f32.mrb[0].mxu0
  %v3598 = vpop.f32.mrb[0].mxu0
  %3599 = vdwg.mxu0
  %v3600 = vld [vmem:[%s8] sm:$0x1]
  %v3602 = vlaneseq
  %v3603 = vshrl.u32 %v3602, 7
  %v3604 = vsub.s32 0, %v3603
  %v3605 = vrot.slane %v3600, %v3604
  %v3607 = vmul.f32 %v3595, %v3605
  %v3608 = vld [vmem:[%s9] sm:$0x1]
  %v3610 = vlaneseq
  %v3611 = vshrl.u32 %v3610, 7
  %v3612 = vsub.s32 0, %v3611
  %v3613 = vrot.slane %v3608, %v3612
  %v3615 = vadd.f32 %v3607, %v3613
  %v3616 = vmax.f32 %v3615, 0.0
  %v3617 = vpack.c.bf16 %v3616, %v3616
  %v3618 = vld [vmem:[%s10] sm:$0xf]
  %v3619 = vld [vmem:[%s10 + $0x4] sm:$0xf]
  %v3620 = vld [vmem:[%s10 + $0x8] sm:$0xf]
  %v3621 = vld [vmem:[%s10 + $0xc] sm:$0xf]
  %v3622 = vld [vmem:[%s10 + $0x10] sm:$0xf]
  %v3623 = vld [vmem:[%s10 + $0x14] sm:$0xf]
  %v3624 = vld [vmem:[%s10 + $0x18] sm:$0xf]
  %v3625 = vld [vmem:[%s10 + $0x1c] sm:$0xf]
  %v3626 = vld [vmem:[%s10 + $0x20] sm:$0xf]
  %v3627 = vld [vmem:[%s10 + $0x24] sm:$0xf]
  %v3628 = vld [vmem:[%s10 + $0x28] sm:$0xf]
  %v3629 = vld [vmem:[%s10 + $0x2c] sm:$0xf]
  %v3630 = vld [vmem:[%s10 + $0x30] sm:$0x3]
  %v3644 = vunpack.c.l.b16 %v3618
  %v3645 = vunpack.c.l.b16 %v3619
  %v3646 = vunpack.c.l.b16 %v3620
  %v3647 = vunpack.c.l.b16 %v3621
  %v3648 = vunpack.c.l.b16 %v3622
  %v3649 = vunpack.c.l.b16 %v3623
  %v3650 = vunpack.c.l.b16 %v3624
  %v3651 = vunpack.c.l.b16 %v3625
  %v3652 = vunpack.c.l.b16 %v3626
  %v3653 = vunpack.c.l.b16 %v3627
  %v3654 = vunpack.c.l.b16 %v3628
  %v3655 = vunpack.c.l.b16 %v3629
  %v3656 = vunpack.c.l.b16 %v3630
  %v3657 = vpack.c.b16 %v3645, %v3644
  %v3658 = vpack.c.b16 %v3647, %v3646
  %v3659 = vpack.c.b16 %v3649, %v3648
  %v3660 = vpack.c.b16 %v3651, %v3650
  %v3661 = vpack.c.b16 %v3653, %v3652
  %v3662 = vpack.c.b16 %v3655, %v3654
  %v3663 = vpack.c.b16 %v3656, %v3656
  %v3671 = vsel %vm3552, %v3617, 0
  %v3674 = vsel %vm3556, %v3663, 0
  %3676 = vmatprep.subr.bf16.mxu0 0
  %3677 = vmatpush1.bf16.msra.mxu0 %v3657
  %3678 = vmatprep.subr.bf16.mxu0 0
  %3679 = vmatpush1.bf16.msra.mxu0 %v3658
  %3680 = vmatprep.subr.bf16.mxu0 0
  %3681 = vmatpush1.bf16.msra.mxu0 %v3659
  %3682 = vmatprep.subr.bf16.mxu0 0
  %3683 = vmatpush1.bf16.msra.mxu0 %v3660
  %3684 = vmatprep.subr.bf16.mxu0 0
  %3685 = vmatpush1.bf16.msra.mxu0 %v3661
  %3686 = vmatprep.subr.bf16.mxu0 0
  %3687 = vmatpush1.bf16.msra.mxu0 %v3662
  %3688 = vmatprep.subr.bf16.mxu0 0
  %3689 = vmatpush1.bf16.msra.mxu0 %v3674
  %3690 = vmatprep.subr.bf16.mxu0 0
  %3691 = vmatpush1.bf16.msra.mxu0 0
  %3692 = vmatprep.subr.bf16.mxu0 0
  %3693 = vmatpush1.bf16.msra.mxu0 0
  %3694 = vmatprep.subr.bf16.mxu0 0
  %3695 = vmatpush1.bf16.msra.mxu0 0
  %3696 = vmatprep.subr.bf16.mxu0 0
  %3697 = vmatpush1.bf16.msra.mxu0 0
  %3698 = vmatprep.subr.bf16.mxu0 0
  %3699 = vmatpush1.bf16.msra.mxu0 0
  %3700 = vmatprep.subr.bf16.mxu0 0
  %3701 = vmatpush1.bf16.msra.mxu0 0
  %3702 = vmatprep.subr.bf16.mxu0 0
  %3703 = vmatpush1.bf16.msra.mxu0 0
  %3704 = vmatprep.subr.bf16.mxu0 0
  %3705 = vmatpush1.bf16.msra.mxu0 0
  %3706 = vmatprep.subr.bf16.mxu0 0
  %3707 = vmatpush1.bf16.msra.mxu0 0
  %3708 = vmatprep.mubr.bf16.mxu0 0
  %3709 = vmatmul.mubr.bf16.gmra.mrb[0].mxu0 %v3671
  %v3710 = vpop.f32.mrb[0].mxu0
  %v3711 = vadd.f32 0.0, %v3710
  %v3712 = vpop.f32.mrb[0].mxu0
  %v3713 = vpop.f32.mrb[0].mxu0
  %v3714 = vpop.f32.mrb[0].mxu0
  %3715 = vdwg.mxu0
  %v3716 = vld [vmem:[%s11] sm:$0x1]
  %v3718 = vlaneseq
  %v3719 = vshrl.u32 %v3718, 7
  %v3720 = vsub.s32 0, %v3719
  %v3721 = vrot.slane %v3716, %v3720
  %v3723 = vmul.f32 %v3711, %v3721
  %v3724 = vld [vmem:[%s12] sm:$0x1]
  %v3726 = vlaneseq
  %v3727 = vshrl.u32 %v3726, 7
  %v3728 = vsub.s32 0, %v3727
  %v3729 = vrot.slane %v3724, %v3728
  %v3731 = vadd.f32 %v3723, %v3729
  %v3732 = vmax.f32 %v3731, 0.0
  %v3733 = vpack.c.bf16 %v3732, %v3732
  %v3734 = vld [vmem:[%s13] sm:$0xf]
  %v3735 = vld [vmem:[%s13 + $0x4] sm:$0xf]
  %v3736 = vld [vmem:[%s13 + $0x8] sm:$0xf]
  %v3737 = vld [vmem:[%s13 + $0xc] sm:$0xf]
  %v3738 = vld [vmem:[%s13 + $0x10] sm:$0xf]
  %v3739 = vld [vmem:[%s13 + $0x14] sm:$0xf]
  %v3740 = vld [vmem:[%s13 + $0x18] sm:$0xf]
  %v3741 = vld [vmem:[%s13 + $0x1c] sm:$0xf]
  %v3742 = vld [vmem:[%s13 + $0x20] sm:$0xf]
  %v3743 = vld [vmem:[%s13 + $0x24] sm:$0xf]
  %v3744 = vld [vmem:[%s13 + $0x28] sm:$0xf]
  %v3745 = vld [vmem:[%s13 + $0x2c] sm:$0xf]
  %v3746 = vld [vmem:[%s13 + $0x30] sm:$0x3]
  %v3747 = vld [vmem:[%s14] sm:$0x1]
  %v3749 = vlaneseq
  %v3750 = vshrl.u32 %v3749, 7
  %v3751 = vsub.s32 0, %v3750
  %v3752 = vrot.slane %v3747, %v3751
  %v3767 = vunpack.c.l.b16 %v3734
  %v3768 = vunpack.c.l.b16 %v3735
  %v3769 = vunpack.c.l.b16 %v3736
  %v3770 = vunpack.c.l.b16 %v3737
  %v3771 = vunpack.c.l.b16 %v3738
  %v3772 = vunpack.c.l.b16 %v3739
  %v3773 = vunpack.c.l.b16 %v3740
  %v3774 = vunpack.c.l.b16 %v3741
  %v3775 = vunpack.c.l.b16 %v3742
  %v3776 = vunpack.c.l.b16 %v3743
  %v3777 = vunpack.c.l.b16 %v3744
  %v3778 = vunpack.c.l.b16 %v3745
  %v3779 = vunpack.c.l.b16 %v3746
  %v3780 = vpack.c.b16 %v3768, %v3767
  %v3781 = vpack.c.b16 %v3770, %v3769
  %v3782 = vpack.c.b16 %v3772, %v3771
  %v3783 = vpack.c.b16 %v3774, %v3773
  %v3784 = vpack.c.b16 %v3776, %v3775
  %v3785 = vpack.c.b16 %v3778, %v3777
  %v3786 = vpack.c.b16 %v3779, %v3779
  %v3794 = vsel %vm3552, %v3733, 0
  %v3797 = vsel %vm3556, %v3786, 0
  %3799 = vmatprep.subr.bf16.mxu0 0
  %3800 = vmatpush1.bf16.msra.mxu0 %v3780
  %3801 = vmatprep.subr.bf16.mxu0 0
  %3802 = vmatpush1.bf16.msra.mxu0 %v3781
  %3803 = vmatprep.subr.bf16.mxu0 0
  %3804 = vmatpush1.bf16.msra.mxu0 %v3782
  %3805 = vmatprep.subr.bf16.mxu0 0
  %3806 = vmatpush1.bf16.msra.mxu0 %v3783
  %3807 = vmatprep.subr.bf16.mxu0 0
  %3808 = vmatpush1.bf16.msra.mxu0 %v3784
  %3809 = vmatprep.subr.bf16.mxu0 0
  %3810 = vmatpush1.bf16.msra.mxu0 %v3785
  %3811 = vmatprep.subr.bf16.mxu0 0
  %3812 = vmatpush1.bf16.msra.mxu0 %v3797
  %3813 = vmatprep.subr.bf16.mxu0 0
  %3814 = vmatpush1.bf16.msra.mxu0 0
  %3815 = vmatprep.subr.bf16.mxu0 0
  %3816 = vmatpush1.bf16.msra.mxu0 0
  %3817 = vmatprep.subr.bf16.mxu0 0
  %3818 = vmatpush1.bf16.msra.mxu0 0
  %3819 = vmatprep.subr.bf16.mxu0 0
  %3820 = vmatpush1.bf16.msra.mxu0 0
  %3821 = vmatprep.subr.bf16.mxu0 0
  %3822 = vmatpush1.bf16.msra.mxu0 0
  %3823 = vmatprep.subr.bf16.mxu0 0
  %3824 = vmatpush1.bf16.msra.mxu0 0
  %3825 = vmatprep.subr.bf16.mxu0 0
  %3826 = vmatpush1.bf16.msra.mxu0 0
  %3827 = vmatprep.subr.bf16.mxu0 0
  %3828 = vmatpush1.bf16.msra.mxu0 0
  %3829 = vmatprep.subr.bf16.mxu0 0
  %3830 = vmatpush1.bf16.msra.mxu0 0
  %3831 = vmatprep.mubr.bf16.mxu0 0
  %3832 = vmatmul.mubr.bf16.gmra.mrb[0].mxu0 %v3794
  %v3833 = vpop.f32.mrb[0].mxu0
  %v3834 = vadd.f32 %v3752, %v3833
  %v3835 = vpop.f32.mrb[0].mxu0
  %v3836 = vpop.f32.mrb[0].mxu0
  %v3837 = vpop.f32.mrb[0].mxu0
  %3838 = vdwg.mxu0
  %3839 = vst [vmem:[%s15] sm:$0x3] %v3834
  // Predicated region
  $region62: #{cnn_model2_forward.3} parent=0 // pred_check
    _
  $region63: #{cnn_model2_forward.3} parent=0 // pred_check_branch
    %3841 = sbr.rel (0) target = $region65
  $region64: #{cnn_model2_forward.3} parent=0 // pred_region
    _
  $region65: #{cnn_model2_forward.3} parent=0 // pred_fallthru
    _
  // Predicated region
  $region66: #{cnn_model2_forward.3} parent=0 // pred_check
    _
  $region67: #{cnn_model2_forward.3} parent=0 // pred_check_branch
    %3843 = sbr.rel (0) target = $region69
  $region68: #{cnn_model2_forward.3} parent=0 // pred_region
    _
  $region69: #{cnn_model2_forward.3} parent=0 // pred_fallthru
    _

</llo_original>
